<compile_context>
chip_gen: v7x
topology: tpu7x:2x2x1
jax: 0.10.0
libtpu: 0.0.40
codegen_flags: <defaults>
</compile_context>

<pallas_src>
import jax
import jax.numpy as jnp
from jax import lax
from jax.experimental import pallas as pl
from jax.experimental.pallas import tpu as pltpu

LANE = 128  # lane width / channel padding target


def rcab_kernel(x_ref, w1_ref, b1_ref, w2_ref, b2_ref,
                wd_ref, bd_ref, wu_ref, bu_ref, o_ref,
                pad_ref, col_ref):
    _, H, W, Cp = x_ref.shape
    _, Wp, _ = pad_ref.shape
    L = (Wp - W) // 2          # interior column offset (8 -> sublane aligned)
    HW = H * W

    # ---- zero the halo: full top/bottom rows + aligned 8-wide gutters ----
    # (all stores lane-dense and sublane-aligned; redone every grid step so the
    #  body is self-contained under "parallel" batch sharding)
    pad_ref[0:1, :, :] = jnp.zeros((1, Wp, Cp), jnp.float32)
    pad_ref[H + 1:H + 2, :, :] = jnp.zeros((1, Wp, Cp), jnp.float32)
    pad_ref[1:H + 1, 0:L, :] = jnp.zeros((H, L, Cp), jnp.float32)
    pad_ref[1:H + 1, L + W:Wp, :] = jnp.zeros((H, Wp - L - W, Cp), jnp.float32)

    x = x_ref[0]                                   # (H, W, Cp) f32

    def conv3x3(w_ref, b_ref):
        # Build the im2col column directly into the bf16 VMEM scratch with 9
        # lane-aligned stores (bf16 cast fused into the store), then a single
        # K-dense MXU matmul (HW, 9Cp) @ (9Cp, Cp) with f32 accumulation.
        for dy in range(3):
            for dx in range(3):
                t = 3 * dy + dx
                c0 = L - 1 + dx
                tap = pad_ref[dy:dy + H, c0:c0 + W, :].reshape(HW, Cp)
                col_ref[:, t * Cp:(t + 1) * Cp] = tap.astype(jnp.bfloat16)
        return jnp.dot(col_ref[...], w_ref[...],
                       preferred_element_type=jnp.float32) + b_ref[...]

    # ---- conv1 (3x3, pad=1) + ReLU, fused into the pad-interior store ----
    pad_ref[1:H + 1, L:L + W, :] = x               # aligned interior store
    pad_ref[1:H + 1, L:L + W, :] = jnp.maximum(
        conv3x3(w1_ref, b1_ref), 0.0).reshape(H, W, Cp)

    # ---- conv2 (3x3, pad=1) ----
    h2 = conv3x3(w2_ref, b2_ref)                   # (HW, Cp) f32

    # ---- squeeze-excitation (tiny; kept in f32; M=1 MXU matmuls accepted) ----
    pooled = jnp.mean(h2, axis=0, keepdims=True)                       # (1, Cp)
    z = jnp.maximum(jnp.dot(pooled, wd_ref[...],
                            preferred_element_type=jnp.float32)
                    + bd_ref[...], 0.0)                                # (1, Crp)
    g = jax.nn.sigmoid(jnp.dot(z, wu_ref[...],
                               preferred_element_type=jnp.float32)
                       + bu_ref[...])                                  # (1, Cp)

    # ---- channel scale + residual (lane-dense store) ----
    o_ref[0] = ((h2 * g).reshape(H, W, Cp) + x).astype(o_ref.dtype)


def rcab_forward(x_nchw, params):
    w1, b1, w2, b2, wd, bd, wu, bu = params
    B, C, H, W = x_nchw.shape
    Cr = wd.shape[1]

    # Lane-dense channel padding (the single biggest lever at small C).
    Cp = ((C + LANE - 1) // LANE) * LANE
    Crp = ((Cr + LANE - 1) // LANE) * LANE
    K9 = 9 * Cp
    L = 8                       # alignment pad (left/right) inside the scratch
    Wp = W + 2 * L

    assert W % 8 == 0, "W must be a multiple of 8 (sublane alignment / free reshapes)"

    f32 = jnp.float32

    # NCHW (PyTorch) -> NHWC, zero-pad channels to Cp.
    x = jnp.transpose(x_nchw, (0, 2, 3, 1)).astype(f32)
    x = jnp.pad(x, ((0, 0), (0, 0), (0, 0), (0, Cp - C)))               # (B,H,W,Cp)

    def pad_conv_w(w):
        # (3,3,C,C) HWIO -> zero-pad to (3,3,Cp,Cp) -> (9*Cp, Cp) bf16.
        # Tap order (dy, dx, i) matches the im2col scratch layout.
        wp = jnp.zeros((3, 3, Cp, Cp), f32).at[:, :, :C, :C].set(w.astype(f32))
        return wp.reshape(K9, Cp).astype(jnp.bfloat16)

    def pad_row(b, n):
        return jnp.pad(b.astype(f32), ((0, 0), (0, n - b.shape[1])))

    def pad_mat(w, m, n):
        return jnp.pad(w.astype(f32), ((0, m - w.shape[0]), (0, n - w.shape[1])))

    w1m = pad_conv_w(w1)
    w2m = pad_conv_w(w2)
    b1p = pad_row(b1, Cp)
    b2p = pad_row(b2, Cp)
    wdp = pad_mat(wd, Cp, Crp)
    bdp = pad_row(bd, Crp)
    wup = pad_mat(wu, Crp, Cp)
    bup = pad_row(bu, Cp)

    flops = int(2 * (2 * B * H * W * K9 * Cp) + 2 * (2 * B * Cp * Crp))
    bytes_accessed = int(4 * 2 * B * H * W * Cp            # x in + out (f32)
                         + 2 * 2 * K9 * Cp                 # conv weights (bf16)
                         + 4 * (2 * Cp + Cp * Crp + Crp * Cp + Crp + Cp))
    cost = pl.CostEstimate(flops=flops, transcendentals=int(B * Cp),
                           bytes_accessed=bytes_accessed)

    out = pl.pallas_call(
        rcab_kernel,
        out_shape=jax.ShapeDtypeStruct((B, H, W, Cp), jnp.float32),
        grid_spec=pltpu.PrefetchScalarGridSpec(
            num_scalar_prefetch=0,
            grid=(B,),
            in_specs=[
                pl.BlockSpec((1, H, W, Cp), lambda b: (b, 0, 0, 0)),   # x
                pl.BlockSpec((K9, Cp), lambda b: (0, 0)),              # w1 (bf16)
                pl.BlockSpec((1, Cp), lambda b: (0, 0)),               # b1
                pl.BlockSpec((K9, Cp), lambda b: (0, 0)),              # w2 (bf16)
                pl.BlockSpec((1, Cp), lambda b: (0, 0)),               # b2
                pl.BlockSpec((Cp, Crp), lambda b: (0, 0)),             # wd (SE down)
                pl.BlockSpec((1, Crp), lambda b: (0, 0)),              # bd
                pl.BlockSpec((Crp, Cp), lambda b: (0, 0)),             # wu (SE up)
                pl.BlockSpec((1, Cp), lambda b: (0, 0)),               # bu
            ],
            out_specs=pl.BlockSpec((1, H, W, Cp), lambda b: (b, 0, 0, 0)),
            scratch_shapes=[
                pltpu.VMEM((H + 2, Wp, Cp), jnp.float32),   # padded image / h1
                pltpu.VMEM((H * W, K9), jnp.bfloat16),      # im2col column
            ],
        ),
        compiler_params=pltpu.CompilerParams(
            dimension_semantics=("parallel",),
            vmem_limit_bytes=64 * 1024 * 1024),
        cost_estimate=cost,
    )(x, w1m, b1p, w2m, b2p, wdp, bdp, wup, bup)

    # Slice off channel padding, NHWC -> NCHW.
    return jnp.transpose(out[..., :C], (0, 3, 1, 2))


def init_params(key, C, r):
    """Deterministic synthetic parameters.

    Conv weights are (kh, kw, C_in, C_out) (HWIO); nn.Conv2d is
    cross-correlation, so this is PyTorch's W[o, i, dy, dx] reordered to
    (dy, dx, i, o) with no kernel flip.
    """
    ks = jax.random.split(key, 8)
    Cr = C // r

    def u(k, shape, fan_in):
        bound = 1.0 / jnp.sqrt(jnp.float32(fan_in))
        return jax.random.uniform(k, shape, jnp.float32, -bound, bound)

    w1 = u(ks[0], (3, 3, C, C), 9 * C)
    b1 = u(ks[1], (1, C), 9 * C)
    w2 = u(ks[2], (3, 3, C, C), 9 * C)
    b2 = u(ks[3], (1, C), 9 * C)
    wd = u(ks[4], (C, Cr), C)
    bd = u(ks[5], (1, Cr), C)
    wu = u(ks[6], (Cr, C), Cr)
    bu = u(ks[7], (1, C), Cr)
    return (w1, b1, w2, b2, wd, bd, wu, bu)


def rcab_reference(x_nchw, params):
    """Pure-JAX f32 reference (correctness check only)."""
    w1, b1, w2, b2, wd, bd, wu, bu = params
    x = jnp.transpose(x_nchw, (0, 2, 3, 1)).astype(jnp.float32)
    dn = ('NHWC', 'HWIO', 'NHWC')
    h = lax.conv_general_dilated(x, w1, (1, 1), 'SAME', dimension_numbers=dn)
    h = jnp.maximum(h + b1.reshape(1, 1, 1, -1), 0.0)
    h = lax.conv_general_dilated(h, w2, (1, 1), 'SAME', dimension_numbers=dn)
    h = h + b2.reshape(1, 1, 1, -1)
    s = jnp.mean(h, axis=(1, 2), keepdims=True)                        # (B,1,1,C)
    z = jnp.maximum(jnp.einsum('bijc,cd->bijd', s, wd) + bd.reshape(1, 1, 1, -1), 0.0)
    g = jax.nn.sigmoid(jnp.einsum('bijd,dc->bijc', z, wu) + bu.reshape(1, 1, 1, -1))
    out = h * g + x
    return jnp.transpose(out, (0, 3, 1, 2))


if __name__ == "__main__":
    B, C, H, W, r = 2, 4, 16, 16, 2

    key = jax.random.PRNGKey(0)
    kx, kp = jax.random.split(key)
    x = jax.random.normal(kx, (B, C, H, W), jnp.float32)   # PyTorch-style NCHW
    params = init_params(kp, C, r)

    out = jax.block_until_ready(rcab_forward(x, params))
    ref = jax.block_until_ready(rcab_reference(x, params))

    assert out.shape == (B, C, H, W)
    # Looser tolerance than before: conv matmul operands are bf16 on the MXU
    # (accumulation stays f32), per the performance review.
    assert jnp.allclose(out, ref, atol=2e-2, rtol=2e-2), \
        f"max abs err {jnp.max(jnp.abs(out - ref))}"

    print("KERNEL_OK")
</pallas_src>

<mosaic_0001>
module attributes {stable_mosaic.version = 11 : i64} {
  func.func @rcab_kernel(%arg0: i32, %arg1: memref<1x16x16x128xf32, #tpu.memory_space<vmem>>, %arg2: memref<1152x128xbf16, #tpu.memory_space<vmem>>, %arg3: memref<1x128xf32, #tpu.memory_space<vmem>>, %arg4: memref<1152x128xbf16, #tpu.memory_space<vmem>>, %arg5: memref<1x128xf32, #tpu.memory_space<vmem>>, %arg6: memref<128x128xf32, #tpu.memory_space<vmem>>, %arg7: memref<1x128xf32, #tpu.memory_space<vmem>>, %arg8: memref<128x128xf32, #tpu.memory_space<vmem>>, %arg9: memref<1x128xf32, #tpu.memory_space<vmem>>, %arg10: memref<1x16x16x128xf32, #tpu.memory_space<vmem>>, %arg11: memref<18x32x128xf32, #tpu.memory_space<vmem>>, %arg12: memref<256x1152xbf16, #tpu.memory_space<vmem>>) attributes {dimension_semantics = [#tpu.dimension_semantics<parallel>], iteration_bounds = array<i64: 2>, scalar_prefetch = 0 : i64, scratch_operands = 2 : i64, tpu.core_type = #tpu.core_type<tc>, window_params = [{transform_indices = @transform_0, window_bounds = array<i64: 1, 16, 16, 128>}, {pipeline_mode = #tpu.pipeline_mode<synchronous>, transform_indices = @transform_1, window_bounds = array<i64: 1152, 128>}, {pipeline_mode = #tpu.pipeline_mode<synchronous>, transform_indices = @transform_2, window_bounds = array<i64: 1, 128>}, {pipeline_mode = #tpu.pipeline_mode<synchronous>, transform_indices = @transform_3, window_bounds = array<i64: 1152, 128>}, {pipeline_mode = #tpu.pipeline_mode<synchronous>, transform_indices = @transform_4, window_bounds = array<i64: 1, 128>}, {pipeline_mode = #tpu.pipeline_mode<synchronous>, transform_indices = @transform_5, window_bounds = array<i64: 128, 128>}, {pipeline_mode = #tpu.pipeline_mode<synchronous>, transform_indices = @transform_6, window_bounds = array<i64: 1, 128>}, {pipeline_mode = #tpu.pipeline_mode<synchronous>, transform_indices = @transform_7, window_bounds = array<i64: 128, 128>}, {pipeline_mode = #tpu.pipeline_mode<synchronous>, transform_indices = @transform_8, window_bounds = array<i64: 1, 128>}, {transform_indices = @transform_9, window_bounds = array<i64: 1, 16, 16, 128>}]} {
    %cst = arith.constant 0.000000e+00 : f32
    %0 = vector.broadcast %cst : f32 to vector<1x32x128xf32>
    %c0 = arith.constant 0 : index
    %c0_0 = arith.constant 0 : index
    %c0_1 = arith.constant 0 : index
    %1 = vector.load %arg11[%c0, %c0_0, %c0_1] : memref<18x32x128xf32, #tpu.memory_space<vmem>>, vector<1x32x128xf32>
    tpu.vector_store %arg11[%c0, %c0_0, %c0_1], %0 {strides = array<i32>} : memref<18x32x128xf32, #tpu.memory_space<vmem>>, vector<1x32x128xf32>,
    %cst_2 = arith.constant 0.000000e+00 : f32
    %2 = vector.broadcast %cst_2 : f32 to vector<1x32x128xf32>
    %c17 = arith.constant 17 : index
    %c0_3 = arith.constant 0 : index
    %c0_4 = arith.constant 0 : index
    %3 = vector.load %arg11[%c17, %c0_3, %c0_4] : memref<18x32x128xf32, #tpu.memory_space<vmem>>, vector<1x32x128xf32>
    tpu.vector_store %arg11[%c17, %c0_3, %c0_4], %2 {strides = array<i32>} : memref<18x32x128xf32, #tpu.memory_space<vmem>>, vector<1x32x128xf32>,
    %cst_5 = arith.constant 0.000000e+00 : f32
    %4 = vector.broadcast %cst_5 : f32 to vector<16x8x128xf32>
    %c1 = arith.constant 1 : index
    %c0_6 = arith.constant 0 : index
    %c0_7 = arith.constant 0 : index
    %5 = vector.load %arg11[%c1, %c0_6, %c0_7] : memref<18x32x128xf32, #tpu.memory_space<vmem>>, vector<16x8x128xf32>
    tpu.vector_store %arg11[%c1, %c0_6, %c0_7], %4 {strides = array<i32>} : memref<18x32x128xf32, #tpu.memory_space<vmem>>, vector<16x8x128xf32>,
    %cst_8 = arith.constant 0.000000e+00 : f32
    %6 = vector.broadcast %cst_8 : f32 to vector<16x8x128xf32>
    %c1_9 = arith.constant 1 : index
    %c24 = arith.constant 24 : index
    %c0_10 = arith.constant 0 : index
    %7 = vector.load %arg11[%c1_9, %c24, %c0_10] : memref<18x32x128xf32, #tpu.memory_space<vmem>>, vector<16x8x128xf32>
    tpu.vector_store %arg11[%c1_9, %c24, %c0_10], %6 {strides = array<i32>} : memref<18x32x128xf32, #tpu.memory_space<vmem>>, vector<16x8x128xf32>,
    %c0_11 = arith.constant 0 : index
    %c0_12 = arith.constant 0 : index
    %c0_13 = arith.constant 0 : index
    %c0_14 = arith.constant 0 : index
    %8 = vector.load %arg1[%c0_11, %c0_12, %c0_13, %c0_14] : memref<1x16x16x128xf32, #tpu.memory_space<vmem>>, vector<1x16x16x128xf32>
    %9 = vector.shape_cast %8 : vector<1x16x16x128xf32> to vector<16x16x128xf32>
    %c1_15 = arith.constant 1 : index
    %c8 = arith.constant 8 : index
    %c0_16 = arith.constant 0 : index
    %10 = vector.load %arg11[%c1_15, %c8, %c0_16] : memref<18x32x128xf32, #tpu.memory_space<vmem>>, vector<16x16x128xf32>
    tpu.vector_store %arg11[%c1_15, %c8, %c0_16], %9 {strides = array<i32>} : memref<18x32x128xf32, #tpu.memory_space<vmem>>, vector<16x16x128xf32>,
    %c0_17 = arith.constant 0 : index
    %c7 = arith.constant 7 : index
    %c0_18 = arith.constant 0 : index
    %11 = vector.load %arg11[%c0_17, %c7, %c0_18] : memref<18x32x128xf32, #tpu.memory_space<vmem>>, vector<16x16x128xf32>
    %12 = vector.shape_cast %11 : vector<16x16x128xf32> to vector<256x128xf32>
    %13 = arith.truncf %12 : vector<256x128xf32> to vector<256x128xbf16>
    %c0_19 = arith.constant 0 : index
    %c0_20 = arith.constant 0 : index
    %14 = vector.load %arg12[%c0_19, %c0_20] : memref<256x1152xbf16, #tpu.memory_space<vmem>>, vector<256x128xbf16>
    tpu.vector_store %arg12[%c0_19, %c0_20], %13 {strides = array<i32>} : memref<256x1152xbf16, #tpu.memory_space<vmem>>, vector<256x128xbf16>,
    %c0_21 = arith.constant 0 : index
    %c8_22 = arith.constant 8 : index
    %c0_23 = arith.constant 0 : index
    %15 = vector.load %arg11[%c0_21, %c8_22, %c0_23] : memref<18x32x128xf32, #tpu.memory_space<vmem>>, vector<16x16x128xf32>
    %16 = vector.shape_cast %15 : vector<16x16x128xf32> to vector<256x128xf32>
    %17 = arith.truncf %16 : vector<256x128xf32> to vector<256x128xbf16>
    %c0_24 = arith.constant 0 : index
    %c128 = arith.constant 128 : index
    %18 = vector.load %arg12[%c0_24, %c128] : memref<256x1152xbf16, #tpu.memory_space<vmem>>, vector<256x128xbf16>
    tpu.vector_store %arg12[%c0_24, %c128], %17 {strides = array<i32>} : memref<256x1152xbf16, #tpu.memory_space<vmem>>, vector<256x128xbf16>,
    %c0_25 = arith.constant 0 : index
    %c9 = arith.constant 9 : index
    %c0_26 = arith.constant 0 : index
    %19 = vector.load %arg11[%c0_25, %c9, %c0_26] : memref<18x32x128xf32, #tpu.memory_space<vmem>>, vector<16x16x128xf32>
    %20 = vector.shape_cast %19 : vector<16x16x128xf32> to vector<256x128xf32>
    %21 = arith.truncf %20 : vector<256x128xf32> to vector<256x128xbf16>
    %c0_27 = arith.constant 0 : index
    %c256 = arith.constant 256 : index
    %22 = vector.load %arg12[%c0_27, %c256] : memref<256x1152xbf16, #tpu.memory_space<vmem>>, vector<256x128xbf16>
    tpu.vector_store %arg12[%c0_27, %c256], %21 {strides = array<i32>} : memref<256x1152xbf16, #tpu.memory_space<vmem>>, vector<256x128xbf16>,
    %c1_28 = arith.constant 1 : index
    %c7_29 = arith.constant 7 : index
    %c0_30 = arith.constant 0 : index
    %23 = vector.load %arg11[%c1_28, %c7_29, %c0_30] : memref<18x32x128xf32, #tpu.memory_space<vmem>>, vector<16x16x128xf32>
    %24 = vector.shape_cast %23 : vector<16x16x128xf32> to vector<256x128xf32>
    %25 = arith.truncf %24 : vector<256x128xf32> to vector<256x128xbf16>
    %c0_31 = arith.constant 0 : index
    %c384 = arith.constant 384 : index
    %26 = vector.load %arg12[%c0_31, %c384] : memref<256x1152xbf16, #tpu.memory_space<vmem>>, vector<256x128xbf16>
    tpu.vector_store %arg12[%c0_31, %c384], %25 {strides = array<i32>} : memref<256x1152xbf16, #tpu.memory_space<vmem>>, vector<256x128xbf16>,
    %c1_32 = arith.constant 1 : index
    %c8_33 = arith.constant 8 : index
    %c0_34 = arith.constant 0 : index
    %27 = vector.load %arg11[%c1_32, %c8_33, %c0_34] : memref<18x32x128xf32, #tpu.memory_space<vmem>>, vector<16x16x128xf32>
    %28 = vector.shape_cast %27 : vector<16x16x128xf32> to vector<256x128xf32>
    %29 = arith.truncf %28 : vector<256x128xf32> to vector<256x128xbf16>
    %c0_35 = arith.constant 0 : index
    %c512 = arith.constant 512 : index
    %30 = vector.load %arg12[%c0_35, %c512] : memref<256x1152xbf16, #tpu.memory_space<vmem>>, vector<256x128xbf16>
    tpu.vector_store %arg12[%c0_35, %c512], %29 {strides = array<i32>} : memref<256x1152xbf16, #tpu.memory_space<vmem>>, vector<256x128xbf16>,
    %c1_36 = arith.constant 1 : index
    %c9_37 = arith.constant 9 : index
    %c0_38 = arith.constant 0 : index
    %31 = vector.load %arg11[%c1_36, %c9_37, %c0_38] : memref<18x32x128xf32, #tpu.memory_space<vmem>>, vector<16x16x128xf32>
    %32 = vector.shape_cast %31 : vector<16x16x128xf32> to vector<256x128xf32>
    %33 = arith.truncf %32 : vector<256x128xf32> to vector<256x128xbf16>
    %c0_39 = arith.constant 0 : index
    %c640 = arith.constant 640 : index
    %34 = vector.load %arg12[%c0_39, %c640] : memref<256x1152xbf16, #tpu.memory_space<vmem>>, vector<256x128xbf16>
    tpu.vector_store %arg12[%c0_39, %c640], %33 {strides = array<i32>} : memref<256x1152xbf16, #tpu.memory_space<vmem>>, vector<256x128xbf16>,
    %c2 = arith.constant 2 : index
    %c7_40 = arith.constant 7 : index
    %c0_41 = arith.constant 0 : index
    %35 = vector.load %arg11[%c2, %c7_40, %c0_41] : memref<18x32x128xf32, #tpu.memory_space<vmem>>, vector<16x16x128xf32>
    %36 = vector.shape_cast %35 : vector<16x16x128xf32> to vector<256x128xf32>
    %37 = arith.truncf %36 : vector<256x128xf32> to vector<256x128xbf16>
    %c0_42 = arith.constant 0 : index
    %c768 = arith.constant 768 : index
    %38 = vector.load %arg12[%c0_42, %c768] : memref<256x1152xbf16, #tpu.memory_space<vmem>>, vector<256x128xbf16>
    tpu.vector_store %arg12[%c0_42, %c768], %37 {strides = array<i32>} : memref<256x1152xbf16, #tpu.memory_space<vmem>>, vector<256x128xbf16>,
    %c2_43 = arith.constant 2 : index
    %c8_44 = arith.constant 8 : index
    %c0_45 = arith.constant 0 : index
    %39 = vector.load %arg11[%c2_43, %c8_44, %c0_45] : memref<18x32x128xf32, #tpu.memory_space<vmem>>, vector<16x16x128xf32>
    %40 = vector.shape_cast %39 : vector<16x16x128xf32> to vector<256x128xf32>
    %41 = arith.truncf %40 : vector<256x128xf32> to vector<256x128xbf16>
    %c0_46 = arith.constant 0 : index
    %c896 = arith.constant 896 : index
    %42 = vector.load %arg12[%c0_46, %c896] : memref<256x1152xbf16, #tpu.memory_space<vmem>>, vector<256x128xbf16>
    tpu.vector_store %arg12[%c0_46, %c896], %41 {strides = array<i32>} : memref<256x1152xbf16, #tpu.memory_space<vmem>>, vector<256x128xbf16>,
    %c2_47 = arith.constant 2 : index
    %c9_48 = arith.constant 9 : index
    %c0_49 = arith.constant 0 : index
    %43 = vector.load %arg11[%c2_47, %c9_48, %c0_49] : memref<18x32x128xf32, #tpu.memory_space<vmem>>, vector<16x16x128xf32>
    %44 = vector.shape_cast %43 : vector<16x16x128xf32> to vector<256x128xf32>
    %45 = arith.truncf %44 : vector<256x128xf32> to vector<256x128xbf16>
    %c0_50 = arith.constant 0 : index
    %c1024 = arith.constant 1024 : index
    %46 = vector.load %arg12[%c0_50, %c1024] : memref<256x1152xbf16, #tpu.memory_space<vmem>>, vector<256x128xbf16>
    tpu.vector_store %arg12[%c0_50, %c1024], %45 {strides = array<i32>} : memref<256x1152xbf16, #tpu.memory_space<vmem>>, vector<256x128xbf16>,
    %c0_51 = arith.constant 0 : index
    %c0_52 = arith.constant 0 : index
    %47 = vector.load %arg12[%c0_51, %c0_52] : memref<256x1152xbf16, #tpu.memory_space<vmem>>, vector<256x1152xbf16>
    %c0_53 = arith.constant 0 : index
    %c0_54 = arith.constant 0 : index
    %48 = vector.load %arg2[%c0_53, %c0_54] : memref<1152x128xbf16, #tpu.memory_space<vmem>>, vector<1152x128xbf16>
    %cst_55 = arith.constant dense<0.000000e+00> : vector<256x128xf32>
    %49 = tpu.matmul %47, %48, %cst_55 {dimension_numbers = #tpu.dot_dimension_numbers<[1], [0], [0], [1], [0, 0, 1, 1], [], []>} : vector<256x1152xbf16>, vector<1152x128xbf16>, vector<256x128xf32> -> vector<256x128xf32>
    %c0_56 = arith.constant 0 : index
    %c0_57 = arith.constant 0 : index
    %50 = vector.load %arg3[%c0_56, %c0_57] : memref<1x128xf32, #tpu.memory_space<vmem>>, vector<1x128xf32>
    %51 = vector.broadcast %50 : vector<1x128xf32> to vector<256x128xf32>
    %52 = arith.addf %49, %51 : vector<256x128xf32>
    %cst_58 = arith.constant 0.000000e+00 : f32
    %53 = vector.broadcast %cst_58 : f32 to vector<256x128xf32>
    %54 = arith.maximumf %52, %53 : vector<256x128xf32>
    %55 = vector.shape_cast %54 : vector<256x128xf32> to vector<16x16x128xf32>
    %c1_59 = arith.constant 1 : index
    %c8_60 = arith.constant 8 : index
    %c0_61 = arith.constant 0 : index
    %56 = vector.load %arg11[%c1_59, %c8_60, %c0_61] : memref<18x32x128xf32, #tpu.memory_space<vmem>>, vector<16x16x128xf32>
    tpu.vector_store %arg11[%c1_59, %c8_60, %c0_61], %55 {strides = array<i32>} : memref<18x32x128xf32, #tpu.memory_space<vmem>>, vector<16x16x128xf32>,
    %c0_62 = arith.constant 0 : index
    %c7_63 = arith.constant 7 : index
    %c0_64 = arith.constant 0 : index
    %57 = vector.load %arg11[%c0_62, %c7_63, %c0_64] : memref<18x32x128xf32, #tpu.memory_space<vmem>>, vector<16x16x128xf32>
    %58 = vector.shape_cast %57 : vector<16x16x128xf32> to vector<256x128xf32>
    %59 = arith.truncf %58 : vector<256x128xf32> to vector<256x128xbf16>
    %c0_65 = arith.constant 0 : index
    %c0_66 = arith.constant 0 : index
    %60 = vector.load %arg12[%c0_65, %c0_66] : memref<256x1152xbf16, #tpu.memory_space<vmem>>, vector<256x128xbf16>
    tpu.vector_store %arg12[%c0_65, %c0_66], %59 {strides = array<i32>} : memref<256x1152xbf16, #tpu.memory_space<vmem>>, vector<256x128xbf16>,
    %c0_67 = arith.constant 0 : index
    %c8_68 = arith.constant 8 : index
    %c0_69 = arith.constant 0 : index
    %61 = vector.load %arg11[%c0_67, %c8_68, %c0_69] : memref<18x32x128xf32, #tpu.memory_space<vmem>>, vector<16x16x128xf32>
    %62 = vector.shape_cast %61 : vector<16x16x128xf32> to vector<256x128xf32>
    %63 = arith.truncf %62 : vector<256x128xf32> to vector<256x128xbf16>
    %c0_70 = arith.constant 0 : index
    %c128_71 = arith.constant 128 : index
    %64 = vector.load %arg12[%c0_70, %c128_71] : memref<256x1152xbf16, #tpu.memory_space<vmem>>, vector<256x128xbf16>
    tpu.vector_store %arg12[%c0_70, %c128_71], %63 {strides = array<i32>} : memref<256x1152xbf16, #tpu.memory_space<vmem>>, vector<256x128xbf16>,
    %c0_72 = arith.constant 0 : index
    %c9_73 = arith.constant 9 : index
    %c0_74 = arith.constant 0 : index
    %65 = vector.load %arg11[%c0_72, %c9_73, %c0_74] : memref<18x32x128xf32, #tpu.memory_space<vmem>>, vector<16x16x128xf32>
    %66 = vector.shape_cast %65 : vector<16x16x128xf32> to vector<256x128xf32>
    %67 = arith.truncf %66 : vector<256x128xf32> to vector<256x128xbf16>
    %c0_75 = arith.constant 0 : index
    %c256_76 = arith.constant 256 : index
    %68 = vector.load %arg12[%c0_75, %c256_76] : memref<256x1152xbf16, #tpu.memory_space<vmem>>, vector<256x128xbf16>
    tpu.vector_store %arg12[%c0_75, %c256_76], %67 {strides = array<i32>} : memref<256x1152xbf16, #tpu.memory_space<vmem>>, vector<256x128xbf16>,
    %c1_77 = arith.constant 1 : index
    %c7_78 = arith.constant 7 : index
    %c0_79 = arith.constant 0 : index
    %69 = vector.load %arg11[%c1_77, %c7_78, %c0_79] : memref<18x32x128xf32, #tpu.memory_space<vmem>>, vector<16x16x128xf32>
    %70 = vector.shape_cast %69 : vector<16x16x128xf32> to vector<256x128xf32>
    %71 = arith.truncf %70 : vector<256x128xf32> to vector<256x128xbf16>
    %c0_80 = arith.constant 0 : index
    %c384_81 = arith.constant 384 : index
    %72 = vector.load %arg12[%c0_80, %c384_81] : memref<256x1152xbf16, #tpu.memory_space<vmem>>, vector<256x128xbf16>
    tpu.vector_store %arg12[%c0_80, %c384_81], %71 {strides = array<i32>} : memref<256x1152xbf16, #tpu.memory_space<vmem>>, vector<256x128xbf16>,
    %c1_82 = arith.constant 1 : index
    %c8_83 = arith.constant 8 : index
    %c0_84 = arith.constant 0 : index
    %73 = vector.load %arg11[%c1_82, %c8_83, %c0_84] : memref<18x32x128xf32, #tpu.memory_space<vmem>>, vector<16x16x128xf32>
    %74 = vector.shape_cast %73 : vector<16x16x128xf32> to vector<256x128xf32>
    %75 = arith.truncf %74 : vector<256x128xf32> to vector<256x128xbf16>
    %c0_85 = arith.constant 0 : index
    %c512_86 = arith.constant 512 : index
    %76 = vector.load %arg12[%c0_85, %c512_86] : memref<256x1152xbf16, #tpu.memory_space<vmem>>, vector<256x128xbf16>
    tpu.vector_store %arg12[%c0_85, %c512_86], %75 {strides = array<i32>} : memref<256x1152xbf16, #tpu.memory_space<vmem>>, vector<256x128xbf16>,
    %c1_87 = arith.constant 1 : index
    %c9_88 = arith.constant 9 : index
    %c0_89 = arith.constant 0 : index
    %77 = vector.load %arg11[%c1_87, %c9_88, %c0_89] : memref<18x32x128xf32, #tpu.memory_space<vmem>>, vector<16x16x128xf32>
    %78 = vector.shape_cast %77 : vector<16x16x128xf32> to vector<256x128xf32>
    %79 = arith.truncf %78 : vector<256x128xf32> to vector<256x128xbf16>
    %c0_90 = arith.constant 0 : index
    %c640_91 = arith.constant 640 : index
    %80 = vector.load %arg12[%c0_90, %c640_91] : memref<256x1152xbf16, #tpu.memory_space<vmem>>, vector<256x128xbf16>
    tpu.vector_store %arg12[%c0_90, %c640_91], %79 {strides = array<i32>} : memref<256x1152xbf16, #tpu.memory_space<vmem>>, vector<256x128xbf16>,
    %c2_92 = arith.constant 2 : index
    %c7_93 = arith.constant 7 : index
    %c0_94 = arith.constant 0 : index
    %81 = vector.load %arg11[%c2_92, %c7_93, %c0_94] : memref<18x32x128xf32, #tpu.memory_space<vmem>>, vector<16x16x128xf32>
    %82 = vector.shape_cast %81 : vector<16x16x128xf32> to vector<256x128xf32>
    %83 = arith.truncf %82 : vector<256x128xf32> to vector<256x128xbf16>
    %c0_95 = arith.constant 0 : index
    %c768_96 = arith.constant 768 : index
    %84 = vector.load %arg12[%c0_95, %c768_96] : memref<256x1152xbf16, #tpu.memory_space<vmem>>, vector<256x128xbf16>
    tpu.vector_store %arg12[%c0_95, %c768_96], %83 {strides = array<i32>} : memref<256x1152xbf16, #tpu.memory_space<vmem>>, vector<256x128xbf16>,
    %c2_97 = arith.constant 2 : index
    %c8_98 = arith.constant 8 : index
    %c0_99 = arith.constant 0 : index
    %85 = vector.load %arg11[%c2_97, %c8_98, %c0_99] : memref<18x32x128xf32, #tpu.memory_space<vmem>>, vector<16x16x128xf32>
    %86 = vector.shape_cast %85 : vector<16x16x128xf32> to vector<256x128xf32>
    %87 = arith.truncf %86 : vector<256x128xf32> to vector<256x128xbf16>
    %c0_100 = arith.constant 0 : index
    %c896_101 = arith.constant 896 : index
    %88 = vector.load %arg12[%c0_100, %c896_101] : memref<256x1152xbf16, #tpu.memory_space<vmem>>, vector<256x128xbf16>
    tpu.vector_store %arg12[%c0_100, %c896_101], %87 {strides = array<i32>} : memref<256x1152xbf16, #tpu.memory_space<vmem>>, vector<256x128xbf16>,
    %c2_102 = arith.constant 2 : index
    %c9_103 = arith.constant 9 : index
    %c0_104 = arith.constant 0 : index
    %89 = vector.load %arg11[%c2_102, %c9_103, %c0_104] : memref<18x32x128xf32, #tpu.memory_space<vmem>>, vector<16x16x128xf32>
    %90 = vector.shape_cast %89 : vector<16x16x128xf32> to vector<256x128xf32>
    %91 = arith.truncf %90 : vector<256x128xf32> to vector<256x128xbf16>
    %c0_105 = arith.constant 0 : index
    %c1024_106 = arith.constant 1024 : index
    %92 = vector.load %arg12[%c0_105, %c1024_106] : memref<256x1152xbf16, #tpu.memory_space<vmem>>, vector<256x128xbf16>
    tpu.vector_store %arg12[%c0_105, %c1024_106], %91 {strides = array<i32>} : memref<256x1152xbf16, #tpu.memory_space<vmem>>, vector<256x128xbf16>,
    %c0_107 = arith.constant 0 : index
    %c0_108 = arith.constant 0 : index
    %93 = vector.load %arg12[%c0_107, %c0_108] : memref<256x1152xbf16, #tpu.memory_space<vmem>>, vector<256x1152xbf16>
    %c0_109 = arith.constant 0 : index
    %c0_110 = arith.constant 0 : index
    %94 = vector.load %arg4[%c0_109, %c0_110] : memref<1152x128xbf16, #tpu.memory_space<vmem>>, vector<1152x128xbf16>
    %cst_111 = arith.constant dense<0.000000e+00> : vector<256x128xf32>
    %95 = tpu.matmul %93, %94, %cst_111 {dimension_numbers = #tpu.dot_dimension_numbers<[1], [0], [0], [1], [0, 0, 1, 1], [], []>} : vector<256x1152xbf16>, vector<1152x128xbf16>, vector<256x128xf32> -> vector<256x128xf32>
    %c0_112 = arith.constant 0 : index
    %c0_113 = arith.constant 0 : index
    %96 = vector.load %arg5[%c0_112, %c0_113] : memref<1x128xf32, #tpu.memory_space<vmem>>, vector<1x128xf32>
    %97 = vector.broadcast %96 : vector<1x128xf32> to vector<256x128xf32>
    %98 = arith.addf %95, %97 : vector<256x128xf32>
    %cst_114 = arith.constant dense<0.000000e+00> : vector<128xf32>
    %99 = vector.multi_reduction <add>, %98, %cst_114 [0] : vector<256x128xf32> to vector<128xf32>
    %100 = vector.shape_cast %99 : vector<128xf32> to vector<1x128xf32>
    %cst_115 = arith.constant 2.560000e+02 : f32
    %101 = vector.broadcast %cst_115 : f32 to vector<1x128xf32>
    %102 = arith.divf %100, %101 : vector<1x128xf32>
    %c0_116 = arith.constant 0 : index
    %c0_117 = arith.constant 0 : index
    %103 = vector.load %arg6[%c0_116, %c0_117] : memref<128x128xf32, #tpu.memory_space<vmem>>, vector<128x128xf32>
    %cst_118 = arith.constant dense<0.000000e+00> : vector<1x128xf32>
    %104 = tpu.matmul %102, %103, %cst_118 {dimension_numbers = #tpu.dot_dimension_numbers<[1], [0], [0], [1], [0, 0, 1, 1], [], []>} : vector<1x128xf32>, vector<128x128xf32>, vector<1x128xf32> -> vector<1x128xf32>
    %c0_119 = arith.constant 0 : index
    %c0_120 = arith.constant 0 : index
    %105 = vector.load %arg7[%c0_119, %c0_120] : memref<1x128xf32, #tpu.memory_space<vmem>>, vector<1x128xf32>
    %106 = arith.addf %104, %105 : vector<1x128xf32>
    %cst_121 = arith.constant 0.000000e+00 : f32
    %107 = vector.broadcast %cst_121 : f32 to vector<1x128xf32>
    %108 = arith.maximumf %106, %107 : vector<1x128xf32>
    %c0_122 = arith.constant 0 : index
    %c0_123 = arith.constant 0 : index
    %109 = vector.load %arg8[%c0_122, %c0_123] : memref<128x128xf32, #tpu.memory_space<vmem>>, vector<128x128xf32>
    %cst_124 = arith.constant dense<0.000000e+00> : vector<1x128xf32>
    %110 = tpu.matmul %108, %109, %cst_124 {dimension_numbers = #tpu.dot_dimension_numbers<[1], [0], [0], [1], [0, 0, 1, 1], [], []>} : vector<1x128xf32>, vector<128x128xf32>, vector<1x128xf32> -> vector<1x128xf32>
    %c0_125 = arith.constant 0 : index
    %c0_126 = arith.constant 0 : index
    %111 = vector.load %arg9[%c0_125, %c0_126] : memref<1x128xf32, #tpu.memory_space<vmem>>, vector<1x128xf32>
    %112 = arith.addf %110, %111 : vector<1x128xf32>
    %113 = arith.negf %112 : vector<1x128xf32>
    %114 = math.exp %113 : vector<1x128xf32>
    %cst_127 = arith.constant 1.000000e+00 : f32
    %115 = vector.broadcast %cst_127 : f32 to vector<1x128xf32>
    %116 = arith.addf %115, %114 : vector<1x128xf32>
    %117 = arith.divf %115, %116 : vector<1x128xf32>
    %118 = vector.broadcast %117 : vector<1x128xf32> to vector<256x128xf32>
    %119 = arith.mulf %98, %118 : vector<256x128xf32>
    %120 = vector.shape_cast %119 : vector<256x128xf32> to vector<16x16x128xf32>
    %121 = arith.addf %120, %9 : vector<16x16x128xf32>
    %c0_128 = arith.constant 0 : index
    %c0_129 = arith.constant 0 : index
    %c0_130 = arith.constant 0 : index
    %c0_131 = arith.constant 0 : index
    %122 = vector.load %arg10[%c0_128, %c0_129, %c0_130, %c0_131] : memref<1x16x16x128xf32, #tpu.memory_space<vmem>>, vector<1x16x16x128xf32>
    %123 = vector.shape_cast %122 : vector<1x16x16x128xf32> to vector<16x16x128xf32>
    %124 = vector.shape_cast %121 : vector<16x16x128xf32> to vector<1x16x16x128xf32>
    tpu.vector_store %arg10[%c0_128, %c0_129, %c0_130, %c0_131], %124 {strides = array<i32>} : memref<1x16x16x128xf32, #tpu.memory_space<vmem>>, vector<1x16x16x128xf32>,
    return
  }
  func.func @transform_0(%arg0: i32) -> (i32, i32, i32, i32) {
    %c0_i32 = arith.constant 0 : i32
    %c0_i32_0 = arith.constant 0 : i32
    %c0_i32_1 = arith.constant 0 : i32
    %c0_i32_2 = arith.constant 0 : i32
    return %arg0, %c0_i32, %c0_i32_0, %c0_i32_1 : i32, i32, i32, i32
  }
  func.func @transform_1(%arg0: i32) -> (i32, i32) {
    %c0_i32 = arith.constant 0 : i32
    %c0_i32_0 = arith.constant 0 : i32
    %c0_i32_1 = arith.constant 0 : i32
    return %c0_i32, %c0_i32_0 : i32, i32
  }
  func.func @transform_2(%arg0: i32) -> (i32, i32) {
    %c0_i32 = arith.constant 0 : i32
    %c0_i32_0 = arith.constant 0 : i32
    %c0_i32_1 = arith.constant 0 : i32
    return %c0_i32, %c0_i32_0 : i32, i32
  }
  func.func @transform_3(%arg0: i32) -> (i32, i32) {
    %c0_i32 = arith.constant 0 : i32
    %c0_i32_0 = arith.constant 0 : i32
    %c0_i32_1 = arith.constant 0 : i32
    return %c0_i32, %c0_i32_0 : i32, i32
  }
  func.func @transform_4(%arg0: i32) -> (i32, i32) {
    %c0_i32 = arith.constant 0 : i32
    %c0_i32_0 = arith.constant 0 : i32
    %c0_i32_1 = arith.constant 0 : i32
    return %c0_i32, %c0_i32_0 : i32, i32
  }
  func.func @transform_5(%arg0: i32) -> (i32, i32) {
    %c0_i32 = arith.constant 0 : i32
    %c0_i32_0 = arith.constant 0 : i32
    %c0_i32_1 = arith.constant 0 : i32
    return %c0_i32, %c0_i32_0 : i32, i32
  }
  func.func @transform_6(%arg0: i32) -> (i32, i32) {
    %c0_i32 = arith.constant 0 : i32
    %c0_i32_0 = arith.constant 0 : i32
    %c0_i32_1 = arith.constant 0 : i32
    return %c0_i32, %c0_i32_0 : i32, i32
  }
  func.func @transform_7(%arg0: i32) -> (i32, i32) {
    %c0_i32 = arith.constant 0 : i32
    %c0_i32_0 = arith.constant 0 : i32
    %c0_i32_1 = arith.constant 0 : i32
    return %c0_i32, %c0_i32_0 : i32, i32
  }
  func.func @transform_8(%arg0: i32) -> (i32, i32) {
    %c0_i32 = arith.constant 0 : i32
    %c0_i32_0 = arith.constant 0 : i32
    %c0_i32_1 = arith.constant 0 : i32
    return %c0_i32, %c0_i32_0 : i32, i32
  }
  func.func @transform_9(%arg0: i32) -> (i32, i32, i32, i32) {
    %c0_i32 = arith.constant 0 : i32
    %c0_i32_0 = arith.constant 0 : i32
    %c0_i32_1 = arith.constant 0 : i32
    %c0_i32_2 = arith.constant 0 : i32
    return %arg0, %c0_i32, %c0_i32_0, %c0_i32_1 : i32, i32, i32, i32
  }
}

</mosaic_0001>

<llo_original>
// kernel: tpu_custom_call.1
$region0: #{tpu_custom_call.1}
  #allocation0 [shape = 'u32[]', space=smem, size = 0x4, offset = 0x4, fixed_abs, tag = 'smem constant byte address 0x4 - core index']
  #allocation1 [shape = 'u32[144,128]{1,0:T(1,128)}', space=vmem, size = 0x12000, scoped, tag = 'internal scratch']
  #allocation2 [shape = 'f32[18,32,128]{2,1,0:T(8,128)}', space=vmem, size = 0x48000, scoped, tag = 'scratch operand']
  #allocation3 [shape = 'bf16[256,1152]{1,0:T(16,128)(2,1)}', space=vmem, size = 0x90000, scoped, tag = 'scratch operand']
  %s0 = inlined_call_operand.hbm [shape: f32[2,16,16,128], index: 0, kind: input, shape index: {}]
  %s1 = inlined_call_operand.hbm [shape: bf16[1152,128], index: 1, kind: input, shape index: {}]
  %s2 = inlined_call_operand.hbm [shape: f32[1,128], index: 2, kind: input, shape index: {}]
  %s3 = inlined_call_operand.hbm [shape: bf16[1152,128], index: 3, kind: input, shape index: {}]
  %s4 = inlined_call_operand.hbm [shape: f32[1,128], index: 4, kind: input, shape index: {}]
  %s5 = inlined_call_operand.hbm [shape: f32[128,128], index: 5, kind: input, shape index: {}]
  %s6 = inlined_call_operand.hbm [shape: f32[1,128], index: 6, kind: input, shape index: {}]
  %s7 = inlined_call_operand.hbm [shape: f32[128,128], index: 7, kind: input, shape index: {}]
  %s8 = inlined_call_operand.hbm [shape: f32[1,128], index: 8, kind: input, shape index: {}]
  %s9 = inlined_call_operand.hbm [shape: f32[2,16,16,128], index: 9, kind: output, shape index: {}]
  %s10 = sld [smem:[#allocation0]]
  $region105: #{tpu_custom_call.1} parent=0
    _
  %s12 = ssub.s32 1, %s10
  %s13 = scalar_select 0, %s12, %s10
  $region1: #{tpu_custom_call.1} parent=0
    #allocation4 [shape = 'u8[262144]{0}', space=vmem, size = 0x40000, scoped, tag = 'input window, operand 0']
    #allocation5 [shape = 's32[2]{0}', space=sflag, size = 0x8, scoped, tag = 'scoped memory for tpu_custom_call.1']
    #allocation6 [shape = 's32[2]{0}', space=sflag, size = 0x8, scoped, tag = 'scoped memory for tpu_custom_call.1']
    #allocation7 [shape = 'u8[294912]{0}', space=vmem, size = 0x48000, scoped, tag = 'input window, operand 1, single buffered']
    #allocation8 [shape = 's32[1]{0}', space=sflag, size = 0x4, scoped, tag = 'scoped memory for tpu_custom_call.1']
    #allocation9 [shape = 'u8[512]{0}', space=vmem, size = 0x400, scoped, tag = 'input window, operand 2, single buffered']
    #allocation10 [shape = 'u8[294912]{0}', space=vmem, size = 0x48000, scoped, tag = 'input window, operand 3, single buffered']
    #allocation11 [shape = 's32[1]{0}', space=sflag, size = 0x4, scoped, tag = 'scoped memory for tpu_custom_call.1']
    #allocation12 [shape = 'u8[512]{0}', space=vmem, size = 0x400, scoped, tag = 'input window, operand 4, single buffered']
    #allocation13 [shape = 'u8[65536]{0}', space=vmem, size = 0x10000, scoped, tag = 'input window, operand 5, single buffered']
    #allocation14 [shape = 's32[1]{0}', space=sflag, size = 0x4, scoped, tag = 'scoped memory for tpu_custom_call.1']
    #allocation15 [shape = 'u8[512]{0}', space=vmem, size = 0x400, scoped, tag = 'input window, operand 6, single buffered']
    #allocation16 [shape = 'u8[65536]{0}', space=vmem, size = 0x10000, scoped, tag = 'input window, operand 7, single buffered']
    #allocation17 [shape = 's32[1]{0}', space=sflag, size = 0x4, scoped, tag = 'scoped memory for tpu_custom_call.1']
    #allocation18 [shape = 'u8[512]{0}', space=vmem, size = 0x400, scoped, tag = 'input window, operand 8, single buffered']
    #allocation19 [shape = 'u8[262144]{0}', space=vmem, size = 0x40000, scoped, tag = 'output window, operand 0']
    %14 = vsyncpa [#allocation5], 0
    %s15 = scalar_lea.sflag [#allocation5], 1
    %16 = vsyncpa %s15, 0
    %17 = vsyncpa [#allocation8], 0
    %18 = vsyncpa [#allocation11], 0
    %19 = vsyncpa [#allocation14], 0
    %20 = vsyncpa [#allocation17], 0
    %21 = vsyncpa [#allocation6], 0
    %s22 = scalar_lea.sflag [#allocation6], 1
    %23 = vsyncpa %s22, 0
    loop: start=0, step=1, limit=4
    $region2: #{tpu_custom_call.1} parent=1 // loop_pre_header
      _
    $region3: #{tpu_custom_call.1} parent=1 // loop_header
      %s25 = sphi 0, %s29
      %p26 = scmp.ge.s32.totalorder %s25, 4
      %s35 = sphi 0, %s37
      %s38 = sphi 0, %s35
      %s39 = sphi 0, %s38
      %s55 = sphi 0, %s39
      %s59 = sphi 0, %s59
      %s61 = sphi 0, %s59
      %s62 = sphi 0, %s61
      %s76 = sphi 0, %s62
      %s80 = sphi 0, %s80
      %s82 = sphi 0, %s80
      %s83 = sphi 0, %s82
      %s97 = sphi 0, %s83
      %s101 = sphi 0, %s101
      %s103 = sphi 0, %s101
      %s104 = sphi 0, %s103
      %s118 = sphi 0, %s104
      %s122 = sphi 0, %s122
      %s124 = sphi 0, %s122
      %s125 = sphi 0, %s124
      %s139 = sphi 0, %s125
      %s143 = sphi 0, %s143
      %s145 = sphi 0, %s143
      %s146 = sphi 0, %s145
      %s160 = sphi 0, %s146
      %s164 = sphi 0, %s164
      %s166 = sphi 0, %s164
      %s167 = sphi 0, %s166
      %s181 = sphi 0, %s167
      %s185 = sphi 0, %s185
      %s187 = sphi 0, %s185
      %s188 = sphi 0, %s187
      %s202 = sphi 0, %s188
      %s206 = sphi 0, %s206
      %s208 = sphi 0, %s206
      %s209 = sphi 0, %s208
      %s223 = sphi 0, %s209
      %s229 = sphi 0, %s231
      %s232 = sphi 0, %s229
      %s233 = sphi 0, %s232
      %s249 = sphi 0, %s233
    $region4: #{tpu_custom_call.1} parent=1 // loop_header_branch
      %28 = sbr.rel (%p26) target = $region8
    $region5: #{tpu_custom_call.1} parent=1 // loop_body
      %s30 = ssub.s32 %s25, 1
      %s31 = ssub.s32 %s25, 2
      %s32 = sadd.s32 %s25, 1
      %s33 = ssub.s32 %s25, %s32
      %p34 = scmp.eq.s32.totalorder %s33, 0
      %s36 = sadd.s32 %s35, 1
      %s37 = scalar_select %p34, %s35, %s36
      %p40 = pneg %p34
      %p41 = scmp.eq.s32.totalorder %s25, 1
      %p42 = por %p40, %p41
      %p43 = scmp.ne.s32.totalorder %s35, %s38
      %p44 = scmp.eq.s32.totalorder %s25, 0
      %p45 = por %p43, %p44
      %p46 = scmp.ne.s32.totalorder %s35, %s38
      %p47 = scmp.eq.s32.totalorder %s30, 1
      %p48 = por %p46, %p47
      %p49 = scmp.ne.s32.totalorder %s38, %s39
      %p50 = scmp.eq.s32.totalorder %s30, 0
      %p51 = por %p49, %p50
      %p52 = scmp.ne.s32.totalorder %s38, %s39
      %p53 = scmp.eq.s32.totalorder %s31, 1
      %p54 = por %p52, %p53
      %p56 = scmp.ne.s32.totalorder %s39, %s55
      %p57 = scmp.eq.s32.totalorder %s31, 0
      %p58 = por %p56, %p57
      %s60 = sadd.s32 %s59, 1
      %p63 = scmp.eq.s32.totalorder %s25, 1
      %p64 = scmp.ne.s32.totalorder %s59, %s61
      %p65 = scmp.eq.s32.totalorder %s25, 0
      %p66 = por %p64, %p65
      %p67 = scmp.ne.s32.totalorder %s59, %s61
      %p68 = scmp.eq.s32.totalorder %s30, 1
      %p69 = por %p67, %p68
      %p70 = scmp.ne.s32.totalorder %s61, %s62
      %p71 = scmp.eq.s32.totalorder %s30, 0
      %p72 = por %p70, %p71
      %p73 = scmp.ne.s32.totalorder %s61, %s62
      %p74 = scmp.eq.s32.totalorder %s31, 1
      %p75 = por %p73, %p74
      %p77 = scmp.ne.s32.totalorder %s62, %s76
      %p78 = scmp.eq.s32.totalorder %s31, 0
      %p79 = por %p77, %p78
      %s81 = sadd.s32 %s80, 1
      %p84 = scmp.eq.s32.totalorder %s25, 1
      %p85 = scmp.ne.s32.totalorder %s80, %s82
      %p86 = scmp.eq.s32.totalorder %s25, 0
      %p87 = por %p85, %p86
      %p88 = scmp.ne.s32.totalorder %s80, %s82
      %p89 = scmp.eq.s32.totalorder %s30, 1
      %p90 = por %p88, %p89
      %p91 = scmp.ne.s32.totalorder %s82, %s83
      %p92 = scmp.eq.s32.totalorder %s30, 0
      %p93 = por %p91, %p92
      %p94 = scmp.ne.s32.totalorder %s82, %s83
      %p95 = scmp.eq.s32.totalorder %s31, 1
      %p96 = por %p94, %p95
      %p98 = scmp.ne.s32.totalorder %s83, %s97
      %p99 = scmp.eq.s32.totalorder %s31, 0
      %p100 = por %p98, %p99
      %s102 = sadd.s32 %s101, 1
      %p105 = scmp.eq.s32.totalorder %s25, 1
      %p106 = scmp.ne.s32.totalorder %s101, %s103
      %p107 = scmp.eq.s32.totalorder %s25, 0
      %p108 = por %p106, %p107
      %p109 = scmp.ne.s32.totalorder %s101, %s103
      %p110 = scmp.eq.s32.totalorder %s30, 1
      %p111 = por %p109, %p110
      %p112 = scmp.ne.s32.totalorder %s103, %s104
      %p113 = scmp.eq.s32.totalorder %s30, 0
      %p114 = por %p112, %p113
      %p115 = scmp.ne.s32.totalorder %s103, %s104
      %p116 = scmp.eq.s32.totalorder %s31, 1
      %p117 = por %p115, %p116
      %p119 = scmp.ne.s32.totalorder %s104, %s118
      %p120 = scmp.eq.s32.totalorder %s31, 0
      %p121 = por %p119, %p120
      %s123 = sadd.s32 %s122, 1
      %p126 = scmp.eq.s32.totalorder %s25, 1
      %p127 = scmp.ne.s32.totalorder %s122, %s124
      %p128 = scmp.eq.s32.totalorder %s25, 0
      %p129 = por %p127, %p128
      %p130 = scmp.ne.s32.totalorder %s122, %s124
      %p131 = scmp.eq.s32.totalorder %s30, 1
      %p132 = por %p130, %p131
      %p133 = scmp.ne.s32.totalorder %s124, %s125
      %p134 = scmp.eq.s32.totalorder %s30, 0
      %p135 = por %p133, %p134
      %p136 = scmp.ne.s32.totalorder %s124, %s125
      %p137 = scmp.eq.s32.totalorder %s31, 1
      %p138 = por %p136, %p137
      %p140 = scmp.ne.s32.totalorder %s125, %s139
      %p141 = scmp.eq.s32.totalorder %s31, 0
      %p142 = por %p140, %p141
      %s144 = sadd.s32 %s143, 1
      %p147 = scmp.eq.s32.totalorder %s25, 1
      %p148 = scmp.ne.s32.totalorder %s143, %s145
      %p149 = scmp.eq.s32.totalorder %s25, 0
      %p150 = por %p148, %p149
      %p151 = scmp.ne.s32.totalorder %s143, %s145
      %p152 = scmp.eq.s32.totalorder %s30, 1
      %p153 = por %p151, %p152
      %p154 = scmp.ne.s32.totalorder %s145, %s146
      %p155 = scmp.eq.s32.totalorder %s30, 0
      %p156 = por %p154, %p155
      %p157 = scmp.ne.s32.totalorder %s145, %s146
      %p158 = scmp.eq.s32.totalorder %s31, 1
      %p159 = por %p157, %p158
      %p161 = scmp.ne.s32.totalorder %s146, %s160
      %p162 = scmp.eq.s32.totalorder %s31, 0
      %p163 = por %p161, %p162
      %s165 = sadd.s32 %s164, 1
      %p168 = scmp.eq.s32.totalorder %s25, 1
      %p169 = scmp.ne.s32.totalorder %s164, %s166
      %p170 = scmp.eq.s32.totalorder %s25, 0
      %p171 = por %p169, %p170
      %p172 = scmp.ne.s32.totalorder %s164, %s166
      %p173 = scmp.eq.s32.totalorder %s30, 1
      %p174 = por %p172, %p173
      %p175 = scmp.ne.s32.totalorder %s166, %s167
      %p176 = scmp.eq.s32.totalorder %s30, 0
      %p177 = por %p175, %p176
      %p178 = scmp.ne.s32.totalorder %s166, %s167
      %p179 = scmp.eq.s32.totalorder %s31, 1
      %p180 = por %p178, %p179
      %p182 = scmp.ne.s32.totalorder %s167, %s181
      %p183 = scmp.eq.s32.totalorder %s31, 0
      %p184 = por %p182, %p183
      %s186 = sadd.s32 %s185, 1
      %p189 = scmp.eq.s32.totalorder %s25, 1
      %p190 = scmp.ne.s32.totalorder %s185, %s187
      %p191 = scmp.eq.s32.totalorder %s25, 0
      %p192 = por %p190, %p191
      %p193 = scmp.ne.s32.totalorder %s185, %s187
      %p194 = scmp.eq.s32.totalorder %s30, 1
      %p195 = por %p193, %p194
      %p196 = scmp.ne.s32.totalorder %s187, %s188
      %p197 = scmp.eq.s32.totalorder %s30, 0
      %p198 = por %p196, %p197
      %p199 = scmp.ne.s32.totalorder %s187, %s188
      %p200 = scmp.eq.s32.totalorder %s31, 1
      %p201 = por %p199, %p200
      %p203 = scmp.ne.s32.totalorder %s188, %s202
      %p204 = scmp.eq.s32.totalorder %s31, 0
      %p205 = por %p203, %p204
      %s207 = sadd.s32 %s206, 1
      %p210 = scmp.eq.s32.totalorder %s25, 1
      %p211 = scmp.ne.s32.totalorder %s206, %s208
      %p212 = scmp.eq.s32.totalorder %s25, 0
      %p213 = por %p211, %p212
      %p214 = scmp.ne.s32.totalorder %s206, %s208
      %p215 = scmp.eq.s32.totalorder %s30, 1
      %p216 = por %p214, %p215
      %p217 = scmp.ne.s32.totalorder %s208, %s209
      %p218 = scmp.eq.s32.totalorder %s30, 0
      %p219 = por %p217, %p218
      %p220 = scmp.ne.s32.totalorder %s208, %s209
      %p221 = scmp.eq.s32.totalorder %s31, 1
      %p222 = por %p220, %p221
      %p224 = scmp.ne.s32.totalorder %s209, %s223
      %p225 = scmp.eq.s32.totalorder %s31, 0
      %p226 = por %p224, %p225
      %s227 = ssub.s32 %s25, %s32
      %p228 = scmp.eq.s32.totalorder %s227, 0
      %s230 = sadd.s32 %s229, 1
      %s231 = scalar_select %p228, %s229, %s230
      %p234 = pneg %p228
      %p235 = scmp.eq.s32.totalorder %s25, 1
      %p236 = por %p234, %p235
      %p237 = scmp.ne.s32.totalorder %s229, %s232
      %p238 = scmp.eq.s32.totalorder %s25, 0
      %p239 = por %p237, %p238
      %p240 = scmp.ne.s32.totalorder %s229, %s232
      %p241 = scmp.eq.s32.totalorder %s30, 1
      %p242 = por %p240, %p241
      %p243 = scmp.ne.s32.totalorder %s232, %s233
      %p244 = scmp.eq.s32.totalorder %s30, 0
      %p245 = por %p243, %p244
      %p246 = scmp.ne.s32.totalorder %s232, %s233
      %p247 = scmp.eq.s32.totalorder %s31, 1
      %p248 = por %p246, %p247
      %p250 = scmp.ne.s32.totalorder %s233, %s249
      %p251 = scmp.eq.s32.totalorder %s31, 0
      %p252 = por %p250, %p251
      %p253 = scmp.le.s32.totalorder 1, %s25
      %p254 = scmp.lt.s32.totalorder %s25, 3
      %p255 = pnand %p253, %p254
      %p256 = pneg %p255
      // Predicated region
      $region9: #{tpu_custom_call.1} parent=5 // pred_check
        _
      $region10: #{tpu_custom_call.1} parent=5 // pred_check_branch
        %258 = sbr.rel (%p255) target = $region12
      $region11: #{tpu_custom_call.1} parent=5 // pred_region
        %s259 = ssub.s32 %s25, 1
        // Predicated region
        $region13: #{tpu_custom_call.1} parent=11 // pred_check
          %p260 = pneg %p72
        $region14: #{tpu_custom_call.1} parent=11 // pred_check_branch
          %262 = sbr.rel (%p260) target = $region16
        $region15: #{tpu_custom_call.1} parent=11 // pred_region
          %s264 = ssub.s32 9216, 9216
          %265 = vsyncadd [#allocation8], %s264
          %s266 = sshll.u32 [#allocation7], 4
          %s267 = int_to_ptr.vmem [resolvable:$true] %s266
          %272 = dma.hbm_to_vmem [thread:$0]  %s1, 9216, %s267, [#allocation8], 64, 64, 4
        $region16: #{tpu_custom_call.1} parent=11 // pred_fallthru
          _
        // Predicated region
        $region17: #{tpu_custom_call.1} parent=11 // pred_check
          %p273 = pneg %p93
        $region18: #{tpu_custom_call.1} parent=11 // pred_check_branch
          %275 = sbr.rel (%p273) target = $region20
        $region19: #{tpu_custom_call.1} parent=11 // pred_region
          %s277 = ssub.s32 16, 16
          %278 = vsyncadd [#allocation8], %s277
          %s280 = sshll.u32 [#allocation9], 4
          %s281 = int_to_ptr.vmem [resolvable:$true] %s280
          %283 = dma.hbm_to_vmem [thread:$0]  %s2, 16, %s281, [#allocation8]
        $region20: #{tpu_custom_call.1} parent=11 // pred_fallthru
          _
        // Predicated region
        $region21: #{tpu_custom_call.1} parent=11 // pred_check
          %p284 = pneg %p114
        $region22: #{tpu_custom_call.1} parent=11 // pred_check_branch
          %286 = sbr.rel (%p284) target = $region24
        $region23: #{tpu_custom_call.1} parent=11 // pred_region
          %s288 = ssub.s32 9216, 9216
          %289 = vsyncadd [#allocation11], %s288
          %s290 = sshll.u32 [#allocation10], 4
          %s291 = int_to_ptr.vmem [resolvable:$true] %s290
          %296 = dma.hbm_to_vmem [thread:$0]  %s3, 9216, %s291, [#allocation11], 64, 64, 4
        $region24: #{tpu_custom_call.1} parent=11 // pred_fallthru
          _
        // Predicated region
        $region25: #{tpu_custom_call.1} parent=11 // pred_check
          %p297 = pneg %p135
        $region26: #{tpu_custom_call.1} parent=11 // pred_check_branch
          %299 = sbr.rel (%p297) target = $region28
        $region27: #{tpu_custom_call.1} parent=11 // pred_region
          %s301 = ssub.s32 16, 16
          %302 = vsyncadd [#allocation11], %s301
          %s304 = sshll.u32 [#allocation12], 4
          %s305 = int_to_ptr.vmem [resolvable:$true] %s304
          %307 = dma.hbm_to_vmem [thread:$0]  %s4, 16, %s305, [#allocation11]
        $region28: #{tpu_custom_call.1} parent=11 // pred_fallthru
          _
        // Predicated region
        $region29: #{tpu_custom_call.1} parent=11 // pred_check
          %p308 = pneg %p156
        $region30: #{tpu_custom_call.1} parent=11 // pred_check_branch
          %310 = sbr.rel (%p308) target = $region32
        $region31: #{tpu_custom_call.1} parent=11 // pred_region
          %s312 = ssub.s32 2048, 2048
          %313 = vsyncadd [#allocation14], %s312
          %s314 = sshll.u32 [#allocation13], 4
          %s315 = int_to_ptr.vmem [resolvable:$true] %s314
          %320 = dma.hbm_to_vmem [thread:$0]  %s5, 2048, %s315, [#allocation14], 128, 128, 8
        $region32: #{tpu_custom_call.1} parent=11 // pred_fallthru
          _
        // Predicated region
        $region33: #{tpu_custom_call.1} parent=11 // pred_check
          %p321 = pneg %p177
        $region34: #{tpu_custom_call.1} parent=11 // pred_check_branch
          %323 = sbr.rel (%p321) target = $region36
        $region35: #{tpu_custom_call.1} parent=11 // pred_region
          %s325 = ssub.s32 16, 16
          %326 = vsyncadd [#allocation14], %s325
          %s328 = sshll.u32 [#allocation15], 4
          %s329 = int_to_ptr.vmem [resolvable:$true] %s328
          %331 = dma.hbm_to_vmem [thread:$0]  %s6, 16, %s329, [#allocation14]
        $region36: #{tpu_custom_call.1} parent=11 // pred_fallthru
          _
        // Predicated region
        $region37: #{tpu_custom_call.1} parent=11 // pred_check
          %p332 = pneg %p198
        $region38: #{tpu_custom_call.1} parent=11 // pred_check_branch
          %334 = sbr.rel (%p332) target = $region40
        $region39: #{tpu_custom_call.1} parent=11 // pred_region
          %s336 = ssub.s32 2048, 2048
          %337 = vsyncadd [#allocation17], %s336
          %s338 = sshll.u32 [#allocation16], 4
          %s339 = int_to_ptr.vmem [resolvable:$true] %s338
          %344 = dma.hbm_to_vmem [thread:$0]  %s7, 2048, %s339, [#allocation17], 128, 128, 8
        $region40: #{tpu_custom_call.1} parent=11 // pred_fallthru
          _
        // Predicated region
        $region41: #{tpu_custom_call.1} parent=11 // pred_check
          %p345 = pneg %p219
        $region42: #{tpu_custom_call.1} parent=11 // pred_check_branch
          %347 = sbr.rel (%p345) target = $region44
        $region43: #{tpu_custom_call.1} parent=11 // pred_region
          %s349 = ssub.s32 16, 16
          %350 = vsyncadd [#allocation17], %s349
          %s352 = sshll.u32 [#allocation18], 4
          %s353 = int_to_ptr.vmem [resolvable:$true] %s352
          %355 = dma.hbm_to_vmem [thread:$0]  %s8, 16, %s353, [#allocation17]
        $region44: #{tpu_custom_call.1} parent=11 // pred_fallthru
          _
      $region12: #{tpu_custom_call.1} parent=5 // pred_fallthru
        _
      %p356 = scmp.lt.s32.totalorder %s25, 2
      // Predicated region
      $region45: #{tpu_custom_call.1} parent=5 // pred_check
        %p357 = pneg %p356
      $region46: #{tpu_custom_call.1} parent=5 // pred_check_branch
        %359 = sbr.rel (%p357) target = $region48
      $region47: #{tpu_custom_call.1} parent=5 // pred_region
        // Predicated region
        $region49: #{tpu_custom_call.1} parent=47 // pred_check
          %p360 = pneg %p45
        $region50: #{tpu_custom_call.1} parent=47 // pred_check_branch
          %362 = sbr.rel (%p360) target = $region52
        $region51: #{tpu_custom_call.1} parent=47 // pred_region
          %s363 = sand.u32 %s35, 1
          %s364 = scalar_lea.sflag [#allocation5], %s363
          %s365 = sand.u32 %s35, 1
          %s366 = smul.addr %s365, 256
          %s367 = scalar_lea.vmem [#allocation4], %s366
          %s369 = ssub.s32 4096, 4096
          %370 = vsyncadd %s364, %s369
          %s371 = smul.addr %s25, 32
          %s372 = smul.addr %s371, 128
          %s373 = scalar_lea.hbm %s0, %s372
          %s374 = sshll.u32 %s367, 4
          %s375 = int_to_ptr.vmem [resolvable:$true] %s374
          %380 = dma.hbm_to_vmem [thread:$0]  %s373, 4096, %s375, %s364, 128, 128, 8
        $region52: #{tpu_custom_call.1} parent=47 // pred_fallthru
          _
      $region48: #{tpu_custom_call.1} parent=5 // pred_fallthru
        _
      %p381 = scmp.le.s32.totalorder 1, %s25
      %p382 = scmp.lt.s32.totalorder %s25, 3
      %p383 = pnand %p381, %p382
      %p384 = pneg %p383
      // Predicated region
      $region53: #{tpu_custom_call.1} parent=5 // pred_check
        _
      $region54: #{tpu_custom_call.1} parent=5 // pred_check_branch
        %386 = sbr.rel (%p383) target = $region56
      $region55: #{tpu_custom_call.1} parent=5 // pred_region
        %s387 = ssub.s32 %s25, 1
        %s388 = sand.u32 %s38, 1
        %s389 = scalar_lea.sflag [#allocation5], %s388
        %s390 = sand.u32 %s38, 1
        %s391 = smul.addr %s390, 256
        %s392 = scalar_lea.vmem [#allocation4], %s391
        // Predicated region
        $region57: #{tpu_custom_call.1} parent=55 // pred_check
          %p393 = pneg %p51
        $region58: #{tpu_custom_call.1} parent=55 // pred_check_branch
          %395 = sbr.rel (%p393) target = $region60
        $region59: #{tpu_custom_call.1} parent=55 // pred_region
          %396 = dma.done %s389, 4096
        $region60: #{tpu_custom_call.1} parent=55 // pred_fallthru
          _
        // Predicated region
        $region61: #{tpu_custom_call.1} parent=55 // pred_check
          %p397 = pneg %p72
        $region62: #{tpu_custom_call.1} parent=55 // pred_check_branch
          %399 = sbr.rel (%p397) target = $region64
        $region63: #{tpu_custom_call.1} parent=55 // pred_region
          %400 = dma.done [#allocation8], 9216
        $region64: #{tpu_custom_call.1} parent=55 // pred_fallthru
          _
        // Predicated region
        $region65: #{tpu_custom_call.1} parent=55 // pred_check
          %p401 = pneg %p93
        $region66: #{tpu_custom_call.1} parent=55 // pred_check_branch
          %403 = sbr.rel (%p401) target = $region68
        $region67: #{tpu_custom_call.1} parent=55 // pred_region
          %404 = dma.done [#allocation8], 16
        $region68: #{tpu_custom_call.1} parent=55 // pred_fallthru
          _
        // Predicated region
        $region69: #{tpu_custom_call.1} parent=55 // pred_check
          %p405 = pneg %p114
        $region70: #{tpu_custom_call.1} parent=55 // pred_check_branch
          %407 = sbr.rel (%p405) target = $region72
        $region71: #{tpu_custom_call.1} parent=55 // pred_region
          %408 = dma.done [#allocation11], 9216
        $region72: #{tpu_custom_call.1} parent=55 // pred_fallthru
          _
        // Predicated region
        $region73: #{tpu_custom_call.1} parent=55 // pred_check
          %p409 = pneg %p135
        $region74: #{tpu_custom_call.1} parent=55 // pred_check_branch
          %411 = sbr.rel (%p409) target = $region76
        $region75: #{tpu_custom_call.1} parent=55 // pred_region
          %412 = dma.done [#allocation11], 16
        $region76: #{tpu_custom_call.1} parent=55 // pred_fallthru
          _
        // Predicated region
        $region77: #{tpu_custom_call.1} parent=55 // pred_check
          %p413 = pneg %p156
        $region78: #{tpu_custom_call.1} parent=55 // pred_check_branch
          %415 = sbr.rel (%p413) target = $region80
        $region79: #{tpu_custom_call.1} parent=55 // pred_region
          %416 = dma.done [#allocation14], 2048
        $region80: #{tpu_custom_call.1} parent=55 // pred_fallthru
          _
        // Predicated region
        $region81: #{tpu_custom_call.1} parent=55 // pred_check
          %p417 = pneg %p177
        $region82: #{tpu_custom_call.1} parent=55 // pred_check_branch
          %419 = sbr.rel (%p417) target = $region84
        $region83: #{tpu_custom_call.1} parent=55 // pred_region
          %420 = dma.done [#allocation14], 16
        $region84: #{tpu_custom_call.1} parent=55 // pred_fallthru
          _
        // Predicated region
        $region85: #{tpu_custom_call.1} parent=55 // pred_check
          %p421 = pneg %p198
        $region86: #{tpu_custom_call.1} parent=55 // pred_check_branch
          %423 = sbr.rel (%p421) target = $region88
        $region87: #{tpu_custom_call.1} parent=55 // pred_region
          %424 = dma.done [#allocation17], 2048
        $region88: #{tpu_custom_call.1} parent=55 // pred_fallthru
          _
        // Predicated region
        $region89: #{tpu_custom_call.1} parent=55 // pred_check
          %p425 = pneg %p219
        $region90: #{tpu_custom_call.1} parent=55 // pred_check_branch
          %427 = sbr.rel (%p425) target = $region92
        $region91: #{tpu_custom_call.1} parent=55 // pred_region
          %428 = dma.done [#allocation17], 16
        $region92: #{tpu_custom_call.1} parent=55 // pred_fallthru
          _
        %s429 = sand.u32 %s38, 1
        %s430 = scalar_lea.sflag [#allocation5], %s429
        %s431 = sand.u32 %s38, 1
        %s432 = smul.addr %s431, 256
        %s433 = scalar_lea.vmem [#allocation4], %s432
        %p434 = pneg %p51
        %p435 = pneg %p48
        %p436 = pneg %p72
        %p437 = pneg %p69
        %p438 = pneg %p93
        %p439 = pneg %p90
        %p440 = pneg %p114
        %p441 = pneg %p111
        %p442 = pneg %p135
        %p443 = pneg %p132
        %p444 = pneg %p156
        %p445 = pneg %p153
        %p446 = pneg %p177
        %p447 = pneg %p174
        %p448 = pneg %p198
        %p449 = pneg %p195
        %p450 = pneg %p219
        %p451 = pneg %p216
        %p452 = pneg %p245
        %p453 = pneg %p242
        %s454 = sand.u32 %s232, 1
        %s455 = scalar_lea.sflag [#allocation6], %s454
        %s456 = sand.u32 %s232, 1
        %s457 = smul.addr %s456, 256
        %s458 = scalar_lea.vmem [#allocation19], %s457
        %460 = vst [vmem:[#allocation2] sm:$0xff] 0.0
        %461 = vst [vmem:[#allocation2 + $0x8] sm:$0xff] 0.0
        %462 = vst [vmem:[#allocation2 + $0x10] sm:$0xff] 0.0
        %463 = vst [vmem:[#allocation2 + $0x18] sm:$0xff] 0.0
        %s464 = scalar_lea.vmem [#allocation2], 544
        %465 = vst [vmem:[%s464] sm:$0xff] 0.0
        %466 = vst [vmem:[%s464 + $0x8] sm:$0xff] 0.0
        %467 = vst [vmem:[%s464 + $0x10] sm:$0xff] 0.0
        %468 = vst [vmem:[%s464 + $0x18] sm:$0xff] 0.0
        %s469 = scalar_lea.vmem [#allocation2], 32
        %470 = vst [vmem:[%s469] sm:$0xff] 0.0
        %471 = vst [vmem:[%s469 + $0x20] sm:$0xff] 0.0
        %472 = vst [vmem:[%s469 + $0x40] sm:$0xff] 0.0
        %473 = vst [vmem:[%s469 + $0x60] sm:$0xff] 0.0
        %474 = vst [vmem:[%s469 + $0x80] sm:$0xff] 0.0
        %475 = vst [vmem:[%s469 + $0xa0] sm:$0xff] 0.0
        %476 = vst [vmem:[%s469 + $0xc0] sm:$0xff] 0.0
        %477 = vst [vmem:[%s469 + $0xe0] sm:$0xff] 0.0
        %478 = vst [vmem:[%s469 + $0x100] sm:$0xff] 0.0
        %479 = vst [vmem:[%s469 + $0x120] sm:$0xff] 0.0
        %480 = vst [vmem:[%s469 + $0x140] sm:$0xff] 0.0
        %481 = vst [vmem:[%s469 + $0x160] sm:$0xff] 0.0
        %482 = vst [vmem:[%s469 + $0x180] sm:$0xff] 0.0
        %483 = vst [vmem:[%s469 + $0x1a0] sm:$0xff] 0.0
        %484 = vst [vmem:[%s469 + $0x1c0] sm:$0xff] 0.0
        %485 = vst [vmem:[%s469 + $0x1e0] sm:$0xff] 0.0
        %486 = vst [vmem:[%s469 + $0x18] sm:$0xff] 0.0
        %487 = vst [vmem:[%s469 + $0x38] sm:$0xff] 0.0
        %488 = vst [vmem:[%s469 + $0x58] sm:$0xff] 0.0
        %489 = vst [vmem:[%s469 + $0x78] sm:$0xff] 0.0
        %490 = vst [vmem:[%s469 + $0x98] sm:$0xff] 0.0
        %491 = vst [vmem:[%s469 + $0xb8] sm:$0xff] 0.0
        %492 = vst [vmem:[%s469 + $0xd8] sm:$0xff] 0.0
        %493 = vst [vmem:[%s469 + $0xf8] sm:$0xff] 0.0
        %494 = vst [vmem:[%s469 + $0x118] sm:$0xff] 0.0
        %495 = vst [vmem:[%s469 + $0x138] sm:$0xff] 0.0
        %496 = vst [vmem:[%s469 + $0x158] sm:$0xff] 0.0
        %497 = vst [vmem:[%s469 + $0x178] sm:$0xff] 0.0
        %498 = vst [vmem:[%s469 + $0x198] sm:$0xff] 0.0
        %499 = vst [vmem:[%s469 + $0x1b8] sm:$0xff] 0.0
        %500 = vst [vmem:[%s469 + $0x1d8] sm:$0xff] 0.0
        %501 = vst [vmem:[%s469 + $0x1f8] sm:$0xff] 0.0
        %v502 = vld [vmem:[%s392] sm:$0xff]
        %v503 = vld [vmem:[%s392 + $0x8] sm:$0xff]
        %v504 = vld [vmem:[%s392 + $0x10] sm:$0xff]
        %v505 = vld [vmem:[%s392 + $0x18] sm:$0xff]
        %v506 = vld [vmem:[%s392 + $0x20] sm:$0xff]
        %v507 = vld [vmem:[%s392 + $0x28] sm:$0xff]
        %v508 = vld [vmem:[%s392 + $0x30] sm:$0xff]
        %v509 = vld [vmem:[%s392 + $0x38] sm:$0xff]
        %v510 = vld [vmem:[%s392 + $0x40] sm:$0xff]
        %v511 = vld [vmem:[%s392 + $0x48] sm:$0xff]
        %v512 = vld [vmem:[%s392 + $0x50] sm:$0xff]
        %v513 = vld [vmem:[%s392 + $0x58] sm:$0xff]
        %v514 = vld [vmem:[%s392 + $0x60] sm:$0xff]
        %v515 = vld [vmem:[%s392 + $0x68] sm:$0xff]
        %v516 = vld [vmem:[%s392 + $0x70] sm:$0xff]
        %v517 = vld [vmem:[%s392 + $0x78] sm:$0xff]
        %v518 = vld [vmem:[%s392 + $0x80] sm:$0xff]
        %v519 = vld [vmem:[%s392 + $0x88] sm:$0xff]
        %v520 = vld [vmem:[%s392 + $0x90] sm:$0xff]
        %v521 = vld [vmem:[%s392 + $0x98] sm:$0xff]
        %v522 = vld [vmem:[%s392 + $0xa0] sm:$0xff]
        %v523 = vld [vmem:[%s392 + $0xa8] sm:$0xff]
        %v524 = vld [vmem:[%s392 + $0xb0] sm:$0xff]
        %v525 = vld [vmem:[%s392 + $0xb8] sm:$0xff]
        %v526 = vld [vmem:[%s392 + $0xc0] sm:$0xff]
        %v527 = vld [vmem:[%s392 + $0xc8] sm:$0xff]
        %v528 = vld [vmem:[%s392 + $0xd0] sm:$0xff]
        %v529 = vld [vmem:[%s392 + $0xd8] sm:$0xff]
        %v530 = vld [vmem:[%s392 + $0xe0] sm:$0xff]
        %v531 = vld [vmem:[%s392 + $0xe8] sm:$0xff]
        %v532 = vld [vmem:[%s392 + $0xf0] sm:$0xff]
        %v533 = vld [vmem:[%s392 + $0xf8] sm:$0xff]
        %534 = vst [vmem:[%s469 + $0x8] sm:$0xff] %v502
        %535 = vst [vmem:[%s469 + $0x10] sm:$0xff] %v503
        %536 = vst [vmem:[%s469 + $0x28] sm:$0xff] %v504
        %537 = vst [vmem:[%s469 + $0x30] sm:$0xff] %v505
        %538 = vst [vmem:[%s469 + $0x48] sm:$0xff] %v506
        %539 = vst [vmem:[%s469 + $0x50] sm:$0xff] %v507
        %540 = vst [vmem:[%s469 + $0x68] sm:$0xff] %v508
        %541 = vst [vmem:[%s469 + $0x70] sm:$0xff] %v509
        %542 = vst [vmem:[%s469 + $0x88] sm:$0xff] %v510
        %543 = vst [vmem:[%s469 + $0x90] sm:$0xff] %v511
        %544 = vst [vmem:[%s469 + $0xa8] sm:$0xff] %v512
        %545 = vst [vmem:[%s469 + $0xb0] sm:$0xff] %v513
        %546 = vst [vmem:[%s469 + $0xc8] sm:$0xff] %v514
        %547 = vst [vmem:[%s469 + $0xd0] sm:$0xff] %v515
        %548 = vst [vmem:[%s469 + $0xe8] sm:$0xff] %v516
        %549 = vst [vmem:[%s469 + $0xf0] sm:$0xff] %v517
        %550 = vst [vmem:[%s469 + $0x108] sm:$0xff] %v518
        %551 = vst [vmem:[%s469 + $0x110] sm:$0xff] %v519
        %552 = vst [vmem:[%s469 + $0x128] sm:$0xff] %v520
        %553 = vst [vmem:[%s469 + $0x130] sm:$0xff] %v521
        %554 = vst [vmem:[%s469 + $0x148] sm:$0xff] %v522
        %555 = vst [vmem:[%s469 + $0x150] sm:$0xff] %v523
        %556 = vst [vmem:[%s469 + $0x168] sm:$0xff] %v524
        %557 = vst [vmem:[%s469 + $0x170] sm:$0xff] %v525
        %558 = vst [vmem:[%s469 + $0x188] sm:$0xff] %v526
        %559 = vst [vmem:[%s469 + $0x190] sm:$0xff] %v527
        %560 = vst [vmem:[%s469 + $0x1a8] sm:$0xff] %v528
        %561 = vst [vmem:[%s469 + $0x1b0] sm:$0xff] %v529
        %562 = vst [vmem:[%s469 + $0x1c8] sm:$0xff] %v530
        %563 = vst [vmem:[%s469 + $0x1d0] sm:$0xff] %v531
        %564 = vst [vmem:[%s469 + $0x1e8] sm:$0xff] %v532
        %565 = vst [vmem:[%s469 + $0x1f0] sm:$0xff] %v533
        %v566 = vld [vmem:[#allocation2 + $0x7] sm:$0xff]
        %v567 = vld [vmem:[#allocation2 + $0xf] sm:$0xff]
        %v568 = vld [vmem:[#allocation2 + $0x27] sm:$0xff]
        %v569 = vld [vmem:[#allocation2 + $0x2f] sm:$0xff]
        %v570 = vld [vmem:[#allocation2 + $0x47] sm:$0xff]
        %v571 = vld [vmem:[#allocation2 + $0x4f] sm:$0xff]
        %v572 = vld [vmem:[#allocation2 + $0x67] sm:$0xff]
        %v573 = vld [vmem:[#allocation2 + $0x6f] sm:$0xff]
        %v574 = vld [vmem:[#allocation2 + $0x87] sm:$0xff]
        %v575 = vld [vmem:[#allocation2 + $0x8f] sm:$0xff]
        %v576 = vld [vmem:[#allocation2 + $0xa7] sm:$0xff]
        %v577 = vld [vmem:[#allocation2 + $0xaf] sm:$0xff]
        %v578 = vld [vmem:[#allocation2 + $0xc7] sm:$0xff]
        %v579 = vld [vmem:[#allocation2 + $0xcf] sm:$0xff]
        %v580 = vld [vmem:[#allocation2 + $0xe7] sm:$0xff]
        %v581 = vld [vmem:[#allocation2 + $0xef] sm:$0xff]
        %v582 = vld [vmem:[#allocation2 + $0x107] sm:$0xff]
        %v583 = vld [vmem:[#allocation2 + $0x10f] sm:$0xff]
        %v584 = vld [vmem:[#allocation2 + $0x127] sm:$0xff]
        %v585 = vld [vmem:[#allocation2 + $0x12f] sm:$0xff]
        %v586 = vld [vmem:[#allocation2 + $0x147] sm:$0xff]
        %v587 = vld [vmem:[#allocation2 + $0x14f] sm:$0xff]
        %v588 = vld [vmem:[#allocation2 + $0x167] sm:$0xff]
        %v589 = vld [vmem:[#allocation2 + $0x16f] sm:$0xff]
        %v590 = vld [vmem:[#allocation2 + $0x187] sm:$0xff]
        %v591 = vld [vmem:[#allocation2 + $0x18f] sm:$0xff]
        %v592 = vld [vmem:[#allocation2 + $0x1a7] sm:$0xff]
        %v593 = vld [vmem:[#allocation2 + $0x1af] sm:$0xff]
        %v594 = vld [vmem:[#allocation2 + $0x1c7] sm:$0xff]
        %v595 = vld [vmem:[#allocation2 + $0x1cf] sm:$0xff]
        %v596 = vld [vmem:[#allocation2 + $0x1e7] sm:$0xff]
        %v597 = vld [vmem:[#allocation2 + $0x1ef] sm:$0xff]
        %v598 = vpack.c.bf16 %v567, %v566
        %v599 = vpack.c.bf16 %v569, %v568
        %v600 = vpack.c.bf16 %v571, %v570
        %v601 = vpack.c.bf16 %v573, %v572
        %v602 = vpack.c.bf16 %v575, %v574
        %v603 = vpack.c.bf16 %v577, %v576
        %v604 = vpack.c.bf16 %v579, %v578
        %v605 = vpack.c.bf16 %v581, %v580
        %v606 = vpack.c.bf16 %v583, %v582
        %v607 = vpack.c.bf16 %v585, %v584
        %v608 = vpack.c.bf16 %v587, %v586
        %v609 = vpack.c.bf16 %v589, %v588
        %v610 = vpack.c.bf16 %v591, %v590
        %v611 = vpack.c.bf16 %v593, %v592
        %v612 = vpack.c.bf16 %v595, %v594
        %v613 = vpack.c.bf16 %v597, %v596
        %614 = vst [vmem:[#allocation3] sm:$0xff] %v598
        %615 = vst [vmem:[#allocation3 + $0x48] sm:$0xff] %v599
        %616 = vst [vmem:[#allocation3 + $0x90] sm:$0xff] %v600
        %617 = vst [vmem:[#allocation3 + $0xd8] sm:$0xff] %v601
        %618 = vst [vmem:[#allocation3 + $0x120] sm:$0xff] %v602
        %619 = vst [vmem:[#allocation3 + $0x168] sm:$0xff] %v603
        %620 = vst [vmem:[#allocation3 + $0x1b0] sm:$0xff] %v604
        %621 = vst [vmem:[#allocation3 + $0x1f8] sm:$0xff] %v605
        %622 = vst [vmem:[#allocation3 + $0x240] sm:$0xff] %v606
        %623 = vst [vmem:[#allocation3 + $0x288] sm:$0xff] %v607
        %624 = vst [vmem:[#allocation3 + $0x2d0] sm:$0xff] %v608
        %625 = vst [vmem:[#allocation3 + $0x318] sm:$0xff] %v609
        %626 = vst [vmem:[#allocation3 + $0x360] sm:$0xff] %v610
        %627 = vst [vmem:[#allocation3 + $0x3a8] sm:$0xff] %v611
        %628 = vst [vmem:[#allocation3 + $0x3f0] sm:$0xff] %v612
        %629 = vst [vmem:[#allocation3 + $0x438] sm:$0xff] %v613
        %v630 = vld [vmem:[#allocation2 + $0x8] sm:$0xff]
        %v631 = vld [vmem:[#allocation2 + $0x10] sm:$0xff]
        %v632 = vld [vmem:[#allocation2 + $0x28] sm:$0xff]
        %v633 = vld [vmem:[#allocation2 + $0x30] sm:$0xff]
        %v634 = vld [vmem:[#allocation2 + $0x48] sm:$0xff]
        %v635 = vld [vmem:[#allocation2 + $0x50] sm:$0xff]
        %v636 = vld [vmem:[#allocation2 + $0x68] sm:$0xff]
        %v637 = vld [vmem:[#allocation2 + $0x70] sm:$0xff]
        %v638 = vld [vmem:[#allocation2 + $0x88] sm:$0xff]
        %v639 = vld [vmem:[#allocation2 + $0x90] sm:$0xff]
        %v640 = vld [vmem:[#allocation2 + $0xa8] sm:$0xff]
        %v641 = vld [vmem:[#allocation2 + $0xb0] sm:$0xff]
        %v642 = vld [vmem:[#allocation2 + $0xc8] sm:$0xff]
        %v643 = vld [vmem:[#allocation2 + $0xd0] sm:$0xff]
        %v644 = vld [vmem:[#allocation2 + $0xe8] sm:$0xff]
        %v645 = vld [vmem:[#allocation2 + $0xf0] sm:$0xff]
        %v646 = vld [vmem:[#allocation2 + $0x108] sm:$0xff]
        %v647 = vld [vmem:[#allocation2 + $0x110] sm:$0xff]
        %v648 = vld [vmem:[#allocation2 + $0x128] sm:$0xff]
        %v649 = vld [vmem:[#allocation2 + $0x130] sm:$0xff]
        %v650 = vld [vmem:[#allocation2 + $0x148] sm:$0xff]
        %v651 = vld [vmem:[#allocation2 + $0x150] sm:$0xff]
        %v652 = vld [vmem:[#allocation2 + $0x168] sm:$0xff]
        %v653 = vld [vmem:[#allocation2 + $0x170] sm:$0xff]
        %v654 = vld [vmem:[#allocation2 + $0x188] sm:$0xff]
        %v655 = vld [vmem:[#allocation2 + $0x190] sm:$0xff]
        %v656 = vld [vmem:[#allocation2 + $0x1a8] sm:$0xff]
        %v657 = vld [vmem:[#allocation2 + $0x1b0] sm:$0xff]
        %v658 = vld [vmem:[#allocation2 + $0x1c8] sm:$0xff]
        %v659 = vld [vmem:[#allocation2 + $0x1d0] sm:$0xff]
        %v660 = vld [vmem:[#allocation2 + $0x1e8] sm:$0xff]
        %v661 = vld [vmem:[#allocation2 + $0x1f0] sm:$0xff]
        %v662 = vpack.c.bf16 %v631, %v630
        %v663 = vpack.c.bf16 %v633, %v632
        %v664 = vpack.c.bf16 %v635, %v634
        %v665 = vpack.c.bf16 %v637, %v636
        %v666 = vpack.c.bf16 %v639, %v638
        %v667 = vpack.c.bf16 %v641, %v640
        %v668 = vpack.c.bf16 %v643, %v642
        %v669 = vpack.c.bf16 %v645, %v644
        %v670 = vpack.c.bf16 %v647, %v646
        %v671 = vpack.c.bf16 %v649, %v648
        %v672 = vpack.c.bf16 %v651, %v650
        %v673 = vpack.c.bf16 %v653, %v652
        %v674 = vpack.c.bf16 %v655, %v654
        %v675 = vpack.c.bf16 %v657, %v656
        %v676 = vpack.c.bf16 %v659, %v658
        %v677 = vpack.c.bf16 %v661, %v660
        %678 = vst [vmem:[#allocation3 + $0x8] sm:$0xff] %v662
        %679 = vst [vmem:[#allocation3 + $0x50] sm:$0xff] %v663
        %680 = vst [vmem:[#allocation3 + $0x98] sm:$0xff] %v664
        %681 = vst [vmem:[#allocation3 + $0xe0] sm:$0xff] %v665
        %682 = vst [vmem:[#allocation3 + $0x128] sm:$0xff] %v666
        %683 = vst [vmem:[#allocation3 + $0x170] sm:$0xff] %v667
        %684 = vst [vmem:[#allocation3 + $0x1b8] sm:$0xff] %v668
        %685 = vst [vmem:[#allocation3 + $0x200] sm:$0xff] %v669
        %686 = vst [vmem:[#allocation3 + $0x248] sm:$0xff] %v670
        %687 = vst [vmem:[#allocation3 + $0x290] sm:$0xff] %v671
        %688 = vst [vmem:[#allocation3 + $0x2d8] sm:$0xff] %v672
        %689 = vst [vmem:[#allocation3 + $0x320] sm:$0xff] %v673
        %690 = vst [vmem:[#allocation3 + $0x368] sm:$0xff] %v674
        %691 = vst [vmem:[#allocation3 + $0x3b0] sm:$0xff] %v675
        %692 = vst [vmem:[#allocation3 + $0x3f8] sm:$0xff] %v676
        %693 = vst [vmem:[#allocation3 + $0x440] sm:$0xff] %v677
        %v694 = vld [vmem:[#allocation2 + $0x9] sm:$0xff]
        %v695 = vld [vmem:[#allocation2 + $0x11] sm:$0xff]
        %v696 = vld [vmem:[#allocation2 + $0x29] sm:$0xff]
        %v697 = vld [vmem:[#allocation2 + $0x31] sm:$0xff]
        %v698 = vld [vmem:[#allocation2 + $0x49] sm:$0xff]
        %v699 = vld [vmem:[#allocation2 + $0x51] sm:$0xff]
        %v700 = vld [vmem:[#allocation2 + $0x69] sm:$0xff]
        %v701 = vld [vmem:[#allocation2 + $0x71] sm:$0xff]
        %v702 = vld [vmem:[#allocation2 + $0x89] sm:$0xff]
        %v703 = vld [vmem:[#allocation2 + $0x91] sm:$0xff]
        %v704 = vld [vmem:[#allocation2 + $0xa9] sm:$0xff]
        %v705 = vld [vmem:[#allocation2 + $0xb1] sm:$0xff]
        %v706 = vld [vmem:[#allocation2 + $0xc9] sm:$0xff]
        %v707 = vld [vmem:[#allocation2 + $0xd1] sm:$0xff]
        %v708 = vld [vmem:[#allocation2 + $0xe9] sm:$0xff]
        %v709 = vld [vmem:[#allocation2 + $0xf1] sm:$0xff]
        %v710 = vld [vmem:[#allocation2 + $0x109] sm:$0xff]
        %v711 = vld [vmem:[#allocation2 + $0x111] sm:$0xff]
        %v712 = vld [vmem:[#allocation2 + $0x129] sm:$0xff]
        %v713 = vld [vmem:[#allocation2 + $0x131] sm:$0xff]
        %v714 = vld [vmem:[#allocation2 + $0x149] sm:$0xff]
        %v715 = vld [vmem:[#allocation2 + $0x151] sm:$0xff]
        %v716 = vld [vmem:[#allocation2 + $0x169] sm:$0xff]
        %v717 = vld [vmem:[#allocation2 + $0x171] sm:$0xff]
        %v718 = vld [vmem:[#allocation2 + $0x189] sm:$0xff]
        %v719 = vld [vmem:[#allocation2 + $0x191] sm:$0xff]
        %v720 = vld [vmem:[#allocation2 + $0x1a9] sm:$0xff]
        %v721 = vld [vmem:[#allocation2 + $0x1b1] sm:$0xff]
        %v722 = vld [vmem:[#allocation2 + $0x1c9] sm:$0xff]
        %v723 = vld [vmem:[#allocation2 + $0x1d1] sm:$0xff]
        %v724 = vld [vmem:[#allocation2 + $0x1e9] sm:$0xff]
        %v725 = vld [vmem:[#allocation2 + $0x1f1] sm:$0xff]
        %v726 = vpack.c.bf16 %v695, %v694
        %v727 = vpack.c.bf16 %v697, %v696
        %v728 = vpack.c.bf16 %v699, %v698
        %v729 = vpack.c.bf16 %v701, %v700
        %v730 = vpack.c.bf16 %v703, %v702
        %v731 = vpack.c.bf16 %v705, %v704
        %v732 = vpack.c.bf16 %v707, %v706
        %v733 = vpack.c.bf16 %v709, %v708
        %v734 = vpack.c.bf16 %v711, %v710
        %v735 = vpack.c.bf16 %v713, %v712
        %v736 = vpack.c.bf16 %v715, %v714
        %v737 = vpack.c.bf16 %v717, %v716
        %v738 = vpack.c.bf16 %v719, %v718
        %v739 = vpack.c.bf16 %v721, %v720
        %v740 = vpack.c.bf16 %v723, %v722
        %v741 = vpack.c.bf16 %v725, %v724
        %742 = vst [vmem:[#allocation3 + $0x10] sm:$0xff] %v726
        %743 = vst [vmem:[#allocation3 + $0x58] sm:$0xff] %v727
        %744 = vst [vmem:[#allocation3 + $0xa0] sm:$0xff] %v728
        %745 = vst [vmem:[#allocation3 + $0xe8] sm:$0xff] %v729
        %746 = vst [vmem:[#allocation3 + $0x130] sm:$0xff] %v730
        %747 = vst [vmem:[#allocation3 + $0x178] sm:$0xff] %v731
        %748 = vst [vmem:[#allocation3 + $0x1c0] sm:$0xff] %v732
        %749 = vst [vmem:[#allocation3 + $0x208] sm:$0xff] %v733
        %750 = vst [vmem:[#allocation3 + $0x250] sm:$0xff] %v734
        %751 = vst [vmem:[#allocation3 + $0x298] sm:$0xff] %v735
        %752 = vst [vmem:[#allocation3 + $0x2e0] sm:$0xff] %v736
        %753 = vst [vmem:[#allocation3 + $0x328] sm:$0xff] %v737
        %754 = vst [vmem:[#allocation3 + $0x370] sm:$0xff] %v738
        %755 = vst [vmem:[#allocation3 + $0x3b8] sm:$0xff] %v739
        %756 = vst [vmem:[#allocation3 + $0x400] sm:$0xff] %v740
        %757 = vst [vmem:[#allocation3 + $0x448] sm:$0xff] %v741
        %v758 = vld [vmem:[%s469 + $0x7] sm:$0xff]
        %v759 = vld [vmem:[%s469 + $0xf] sm:$0xff]
        %v760 = vld [vmem:[%s469 + $0x27] sm:$0xff]
        %v761 = vld [vmem:[%s469 + $0x2f] sm:$0xff]
        %v762 = vld [vmem:[%s469 + $0x47] sm:$0xff]
        %v763 = vld [vmem:[%s469 + $0x4f] sm:$0xff]
        %v764 = vld [vmem:[%s469 + $0x67] sm:$0xff]
        %v765 = vld [vmem:[%s469 + $0x6f] sm:$0xff]
        %v766 = vld [vmem:[%s469 + $0x87] sm:$0xff]
        %v767 = vld [vmem:[%s469 + $0x8f] sm:$0xff]
        %v768 = vld [vmem:[%s469 + $0xa7] sm:$0xff]
        %v769 = vld [vmem:[%s469 + $0xaf] sm:$0xff]
        %v770 = vld [vmem:[%s469 + $0xc7] sm:$0xff]
        %v771 = vld [vmem:[%s469 + $0xcf] sm:$0xff]
        %v772 = vld [vmem:[%s469 + $0xe7] sm:$0xff]
        %v773 = vld [vmem:[%s469 + $0xef] sm:$0xff]
        %v774 = vld [vmem:[%s469 + $0x107] sm:$0xff]
        %v775 = vld [vmem:[%s469 + $0x10f] sm:$0xff]
        %v776 = vld [vmem:[%s469 + $0x127] sm:$0xff]
        %v777 = vld [vmem:[%s469 + $0x12f] sm:$0xff]
        %v778 = vld [vmem:[%s469 + $0x147] sm:$0xff]
        %v779 = vld [vmem:[%s469 + $0x14f] sm:$0xff]
        %v780 = vld [vmem:[%s469 + $0x167] sm:$0xff]
        %v781 = vld [vmem:[%s469 + $0x16f] sm:$0xff]
        %v782 = vld [vmem:[%s469 + $0x187] sm:$0xff]
        %v783 = vld [vmem:[%s469 + $0x18f] sm:$0xff]
        %v784 = vld [vmem:[%s469 + $0x1a7] sm:$0xff]
        %v785 = vld [vmem:[%s469 + $0x1af] sm:$0xff]
        %v786 = vld [vmem:[%s469 + $0x1c7] sm:$0xff]
        %v787 = vld [vmem:[%s469 + $0x1cf] sm:$0xff]
        %v788 = vld [vmem:[%s469 + $0x1e7] sm:$0xff]
        %v789 = vld [vmem:[%s469 + $0x1ef] sm:$0xff]
        %v790 = vpack.c.bf16 %v759, %v758
        %v791 = vpack.c.bf16 %v761, %v760
        %v792 = vpack.c.bf16 %v763, %v762
        %v793 = vpack.c.bf16 %v765, %v764
        %v794 = vpack.c.bf16 %v767, %v766
        %v795 = vpack.c.bf16 %v769, %v768
        %v796 = vpack.c.bf16 %v771, %v770
        %v797 = vpack.c.bf16 %v773, %v772
        %v798 = vpack.c.bf16 %v775, %v774
        %v799 = vpack.c.bf16 %v777, %v776
        %v800 = vpack.c.bf16 %v779, %v778
        %v801 = vpack.c.bf16 %v781, %v780
        %v802 = vpack.c.bf16 %v783, %v782
        %v803 = vpack.c.bf16 %v785, %v784
        %v804 = vpack.c.bf16 %v787, %v786
        %v805 = vpack.c.bf16 %v789, %v788
        %806 = vst [vmem:[#allocation3 + $0x18] sm:$0xff] %v790
        %807 = vst [vmem:[#allocation3 + $0x60] sm:$0xff] %v791
        %808 = vst [vmem:[#allocation3 + $0xa8] sm:$0xff] %v792
        %809 = vst [vmem:[#allocation3 + $0xf0] sm:$0xff] %v793
        %810 = vst [vmem:[#allocation3 + $0x138] sm:$0xff] %v794
        %811 = vst [vmem:[#allocation3 + $0x180] sm:$0xff] %v795
        %812 = vst [vmem:[#allocation3 + $0x1c8] sm:$0xff] %v796
        %813 = vst [vmem:[#allocation3 + $0x210] sm:$0xff] %v797
        %814 = vst [vmem:[#allocation3 + $0x258] sm:$0xff] %v798
        %815 = vst [vmem:[#allocation3 + $0x2a0] sm:$0xff] %v799
        %816 = vst [vmem:[#allocation3 + $0x2e8] sm:$0xff] %v800
        %817 = vst [vmem:[#allocation3 + $0x330] sm:$0xff] %v801
        %818 = vst [vmem:[#allocation3 + $0x378] sm:$0xff] %v802
        %819 = vst [vmem:[#allocation3 + $0x3c0] sm:$0xff] %v803
        %820 = vst [vmem:[#allocation3 + $0x408] sm:$0xff] %v804
        %821 = vst [vmem:[#allocation3 + $0x450] sm:$0xff] %v805
        %v822 = vld [vmem:[%s469 + $0x8] sm:$0xff]
        %v823 = vld [vmem:[%s469 + $0x10] sm:$0xff]
        %v824 = vld [vmem:[%s469 + $0x28] sm:$0xff]
        %v825 = vld [vmem:[%s469 + $0x30] sm:$0xff]
        %v826 = vld [vmem:[%s469 + $0x48] sm:$0xff]
        %v827 = vld [vmem:[%s469 + $0x50] sm:$0xff]
        %v828 = vld [vmem:[%s469 + $0x68] sm:$0xff]
        %v829 = vld [vmem:[%s469 + $0x70] sm:$0xff]
        %v830 = vld [vmem:[%s469 + $0x88] sm:$0xff]
        %v831 = vld [vmem:[%s469 + $0x90] sm:$0xff]
        %v832 = vld [vmem:[%s469 + $0xa8] sm:$0xff]
        %v833 = vld [vmem:[%s469 + $0xb0] sm:$0xff]
        %v834 = vld [vmem:[%s469 + $0xc8] sm:$0xff]
        %v835 = vld [vmem:[%s469 + $0xd0] sm:$0xff]
        %v836 = vld [vmem:[%s469 + $0xe8] sm:$0xff]
        %v837 = vld [vmem:[%s469 + $0xf0] sm:$0xff]
        %v838 = vld [vmem:[%s469 + $0x108] sm:$0xff]
        %v839 = vld [vmem:[%s469 + $0x110] sm:$0xff]
        %v840 = vld [vmem:[%s469 + $0x128] sm:$0xff]
        %v841 = vld [vmem:[%s469 + $0x130] sm:$0xff]
        %v842 = vld [vmem:[%s469 + $0x148] sm:$0xff]
        %v843 = vld [vmem:[%s469 + $0x150] sm:$0xff]
        %v844 = vld [vmem:[%s469 + $0x168] sm:$0xff]
        %v845 = vld [vmem:[%s469 + $0x170] sm:$0xff]
        %v846 = vld [vmem:[%s469 + $0x188] sm:$0xff]
        %v847 = vld [vmem:[%s469 + $0x190] sm:$0xff]
        %v848 = vld [vmem:[%s469 + $0x1a8] sm:$0xff]
        %v849 = vld [vmem:[%s469 + $0x1b0] sm:$0xff]
        %v850 = vld [vmem:[%s469 + $0x1c8] sm:$0xff]
        %v851 = vld [vmem:[%s469 + $0x1d0] sm:$0xff]
        %v852 = vld [vmem:[%s469 + $0x1e8] sm:$0xff]
        %v853 = vld [vmem:[%s469 + $0x1f0] sm:$0xff]
        %v854 = vpack.c.bf16 %v823, %v822
        %v855 = vpack.c.bf16 %v825, %v824
        %v856 = vpack.c.bf16 %v827, %v826
        %v857 = vpack.c.bf16 %v829, %v828
        %v858 = vpack.c.bf16 %v831, %v830
        %v859 = vpack.c.bf16 %v833, %v832
        %v860 = vpack.c.bf16 %v835, %v834
        %v861 = vpack.c.bf16 %v837, %v836
        %v862 = vpack.c.bf16 %v839, %v838
        %v863 = vpack.c.bf16 %v841, %v840
        %v864 = vpack.c.bf16 %v843, %v842
        %v865 = vpack.c.bf16 %v845, %v844
        %v866 = vpack.c.bf16 %v847, %v846
        %v867 = vpack.c.bf16 %v849, %v848
        %v868 = vpack.c.bf16 %v851, %v850
        %v869 = vpack.c.bf16 %v853, %v852
        %870 = vst [vmem:[#allocation3 + $0x20] sm:$0xff] %v854
        %871 = vst [vmem:[#allocation3 + $0x68] sm:$0xff] %v855
        %872 = vst [vmem:[#allocation3 + $0xb0] sm:$0xff] %v856
        %873 = vst [vmem:[#allocation3 + $0xf8] sm:$0xff] %v857
        %874 = vst [vmem:[#allocation3 + $0x140] sm:$0xff] %v858
        %875 = vst [vmem:[#allocation3 + $0x188] sm:$0xff] %v859
        %876 = vst [vmem:[#allocation3 + $0x1d0] sm:$0xff] %v860
        %877 = vst [vmem:[#allocation3 + $0x218] sm:$0xff] %v861
        %878 = vst [vmem:[#allocation3 + $0x260] sm:$0xff] %v862
        %879 = vst [vmem:[#allocation3 + $0x2a8] sm:$0xff] %v863
        %880 = vst [vmem:[#allocation3 + $0x2f0] sm:$0xff] %v864
        %881 = vst [vmem:[#allocation3 + $0x338] sm:$0xff] %v865
        %882 = vst [vmem:[#allocation3 + $0x380] sm:$0xff] %v866
        %883 = vst [vmem:[#allocation3 + $0x3c8] sm:$0xff] %v867
        %884 = vst [vmem:[#allocation3 + $0x410] sm:$0xff] %v868
        %885 = vst [vmem:[#allocation3 + $0x458] sm:$0xff] %v869
        %v886 = vld [vmem:[%s469 + $0x9] sm:$0xff]
        %v887 = vld [vmem:[%s469 + $0x11] sm:$0xff]
        %v888 = vld [vmem:[%s469 + $0x29] sm:$0xff]
        %v889 = vld [vmem:[%s469 + $0x31] sm:$0xff]
        %v890 = vld [vmem:[%s469 + $0x49] sm:$0xff]
        %v891 = vld [vmem:[%s469 + $0x51] sm:$0xff]
        %v892 = vld [vmem:[%s469 + $0x69] sm:$0xff]
        %v893 = vld [vmem:[%s469 + $0x71] sm:$0xff]
        %v894 = vld [vmem:[%s469 + $0x89] sm:$0xff]
        %v895 = vld [vmem:[%s469 + $0x91] sm:$0xff]
        %v896 = vld [vmem:[%s469 + $0xa9] sm:$0xff]
        %v897 = vld [vmem:[%s469 + $0xb1] sm:$0xff]
        %v898 = vld [vmem:[%s469 + $0xc9] sm:$0xff]
        %v899 = vld [vmem:[%s469 + $0xd1] sm:$0xff]
        %v900 = vld [vmem:[%s469 + $0xe9] sm:$0xff]
        %v901 = vld [vmem:[%s469 + $0xf1] sm:$0xff]
        %v902 = vld [vmem:[%s469 + $0x109] sm:$0xff]
        %v903 = vld [vmem:[%s469 + $0x111] sm:$0xff]
        %v904 = vld [vmem:[%s469 + $0x129] sm:$0xff]
        %v905 = vld [vmem:[%s469 + $0x131] sm:$0xff]
        %v906 = vld [vmem:[%s469 + $0x149] sm:$0xff]
        %v907 = vld [vmem:[%s469 + $0x151] sm:$0xff]
        %v908 = vld [vmem:[%s469 + $0x169] sm:$0xff]
        %v909 = vld [vmem:[%s469 + $0x171] sm:$0xff]
        %v910 = vld [vmem:[%s469 + $0x189] sm:$0xff]
        %v911 = vld [vmem:[%s469 + $0x191] sm:$0xff]
        %v912 = vld [vmem:[%s469 + $0x1a9] sm:$0xff]
        %v913 = vld [vmem:[%s469 + $0x1b1] sm:$0xff]
        %v914 = vld [vmem:[%s469 + $0x1c9] sm:$0xff]
        %v915 = vld [vmem:[%s469 + $0x1d1] sm:$0xff]
        %v916 = vld [vmem:[%s469 + $0x1e9] sm:$0xff]
        %v917 = vld [vmem:[%s469 + $0x1f1] sm:$0xff]
        %v918 = vpack.c.bf16 %v887, %v886
        %v919 = vpack.c.bf16 %v889, %v888
        %v920 = vpack.c.bf16 %v891, %v890
        %v921 = vpack.c.bf16 %v893, %v892
        %v922 = vpack.c.bf16 %v895, %v894
        %v923 = vpack.c.bf16 %v897, %v896
        %v924 = vpack.c.bf16 %v899, %v898
        %v925 = vpack.c.bf16 %v901, %v900
        %v926 = vpack.c.bf16 %v903, %v902
        %v927 = vpack.c.bf16 %v905, %v904
        %v928 = vpack.c.bf16 %v907, %v906
        %v929 = vpack.c.bf16 %v909, %v908
        %v930 = vpack.c.bf16 %v911, %v910
        %v931 = vpack.c.bf16 %v913, %v912
        %v932 = vpack.c.bf16 %v915, %v914
        %v933 = vpack.c.bf16 %v917, %v916
        %934 = vst [vmem:[#allocation3 + $0x28] sm:$0xff] %v918
        %935 = vst [vmem:[#allocation3 + $0x70] sm:$0xff] %v919
        %936 = vst [vmem:[#allocation3 + $0xb8] sm:$0xff] %v920
        %937 = vst [vmem:[#allocation3 + $0x100] sm:$0xff] %v921
        %938 = vst [vmem:[#allocation3 + $0x148] sm:$0xff] %v922
        %939 = vst [vmem:[#allocation3 + $0x190] sm:$0xff] %v923
        %940 = vst [vmem:[#allocation3 + $0x1d8] sm:$0xff] %v924
        %941 = vst [vmem:[#allocation3 + $0x220] sm:$0xff] %v925
        %942 = vst [vmem:[#allocation3 + $0x268] sm:$0xff] %v926
        %943 = vst [vmem:[#allocation3 + $0x2b0] sm:$0xff] %v927
        %944 = vst [vmem:[#allocation3 + $0x2f8] sm:$0xff] %v928
        %945 = vst [vmem:[#allocation3 + $0x340] sm:$0xff] %v929
        %946 = vst [vmem:[#allocation3 + $0x388] sm:$0xff] %v930
        %947 = vst [vmem:[#allocation3 + $0x3d0] sm:$0xff] %v931
        %948 = vst [vmem:[#allocation3 + $0x418] sm:$0xff] %v932
        %949 = vst [vmem:[#allocation3 + $0x460] sm:$0xff] %v933
        %s950 = scalar_lea.vmem [#allocation2], 64
        %v951 = vld [vmem:[%s950 + $0x7] sm:$0xff]
        %v952 = vld [vmem:[%s950 + $0xf] sm:$0xff]
        %v953 = vld [vmem:[%s950 + $0x27] sm:$0xff]
        %v954 = vld [vmem:[%s950 + $0x2f] sm:$0xff]
        %v955 = vld [vmem:[%s950 + $0x47] sm:$0xff]
        %v956 = vld [vmem:[%s950 + $0x4f] sm:$0xff]
        %v957 = vld [vmem:[%s950 + $0x67] sm:$0xff]
        %v958 = vld [vmem:[%s950 + $0x6f] sm:$0xff]
        %v959 = vld [vmem:[%s950 + $0x87] sm:$0xff]
        %v960 = vld [vmem:[%s950 + $0x8f] sm:$0xff]
        %v961 = vld [vmem:[%s950 + $0xa7] sm:$0xff]
        %v962 = vld [vmem:[%s950 + $0xaf] sm:$0xff]
        %v963 = vld [vmem:[%s950 + $0xc7] sm:$0xff]
        %v964 = vld [vmem:[%s950 + $0xcf] sm:$0xff]
        %v965 = vld [vmem:[%s950 + $0xe7] sm:$0xff]
        %v966 = vld [vmem:[%s950 + $0xef] sm:$0xff]
        %v967 = vld [vmem:[%s950 + $0x107] sm:$0xff]
        %v968 = vld [vmem:[%s950 + $0x10f] sm:$0xff]
        %v969 = vld [vmem:[%s950 + $0x127] sm:$0xff]
        %v970 = vld [vmem:[%s950 + $0x12f] sm:$0xff]
        %v971 = vld [vmem:[%s950 + $0x147] sm:$0xff]
        %v972 = vld [vmem:[%s950 + $0x14f] sm:$0xff]
        %v973 = vld [vmem:[%s950 + $0x167] sm:$0xff]
        %v974 = vld [vmem:[%s950 + $0x16f] sm:$0xff]
        %v975 = vld [vmem:[%s950 + $0x187] sm:$0xff]
        %v976 = vld [vmem:[%s950 + $0x18f] sm:$0xff]
        %v977 = vld [vmem:[%s950 + $0x1a7] sm:$0xff]
        %v978 = vld [vmem:[%s950 + $0x1af] sm:$0xff]
        %v979 = vld [vmem:[%s950 + $0x1c7] sm:$0xff]
        %v980 = vld [vmem:[%s950 + $0x1cf] sm:$0xff]
        %v981 = vld [vmem:[%s950 + $0x1e7] sm:$0xff]
        %v982 = vld [vmem:[%s950 + $0x1ef] sm:$0xff]
        %v983 = vpack.c.bf16 %v952, %v951
        %v984 = vpack.c.bf16 %v954, %v953
        %v985 = vpack.c.bf16 %v956, %v955
        %v986 = vpack.c.bf16 %v958, %v957
        %v987 = vpack.c.bf16 %v960, %v959
        %v988 = vpack.c.bf16 %v962, %v961
        %v989 = vpack.c.bf16 %v964, %v963
        %v990 = vpack.c.bf16 %v966, %v965
        %v991 = vpack.c.bf16 %v968, %v967
        %v992 = vpack.c.bf16 %v970, %v969
        %v993 = vpack.c.bf16 %v972, %v971
        %v994 = vpack.c.bf16 %v974, %v973
        %v995 = vpack.c.bf16 %v976, %v975
        %v996 = vpack.c.bf16 %v978, %v977
        %v997 = vpack.c.bf16 %v980, %v979
        %v998 = vpack.c.bf16 %v982, %v981
        %999 = vst [vmem:[#allocation3 + $0x30] sm:$0xff] %v983
        %1000 = vst [vmem:[#allocation3 + $0x78] sm:$0xff] %v984
        %1001 = vst [vmem:[#allocation3 + $0xc0] sm:$0xff] %v985
        %1002 = vst [vmem:[#allocation3 + $0x108] sm:$0xff] %v986
        %1003 = vst [vmem:[#allocation3 + $0x150] sm:$0xff] %v987
        %1004 = vst [vmem:[#allocation3 + $0x198] sm:$0xff] %v988
        %1005 = vst [vmem:[#allocation3 + $0x1e0] sm:$0xff] %v989
        %1006 = vst [vmem:[#allocation3 + $0x228] sm:$0xff] %v990
        %1007 = vst [vmem:[#allocation3 + $0x270] sm:$0xff] %v991
        %1008 = vst [vmem:[#allocation3 + $0x2b8] sm:$0xff] %v992
        %1009 = vst [vmem:[#allocation3 + $0x300] sm:$0xff] %v993
        %1010 = vst [vmem:[#allocation3 + $0x348] sm:$0xff] %v994
        %1011 = vst [vmem:[#allocation3 + $0x390] sm:$0xff] %v995
        %1012 = vst [vmem:[#allocation3 + $0x3d8] sm:$0xff] %v996
        %1013 = vst [vmem:[#allocation3 + $0x420] sm:$0xff] %v997
        %1014 = vst [vmem:[#allocation3 + $0x468] sm:$0xff] %v998
        %v1015 = vld [vmem:[%s950 + $0x8] sm:$0xff]
        %v1016 = vld [vmem:[%s950 + $0x10] sm:$0xff]
        %v1017 = vld [vmem:[%s950 + $0x28] sm:$0xff]
        %v1018 = vld [vmem:[%s950 + $0x30] sm:$0xff]
        %v1019 = vld [vmem:[%s950 + $0x48] sm:$0xff]
        %v1020 = vld [vmem:[%s950 + $0x50] sm:$0xff]
        %v1021 = vld [vmem:[%s950 + $0x68] sm:$0xff]
        %v1022 = vld [vmem:[%s950 + $0x70] sm:$0xff]
        %v1023 = vld [vmem:[%s950 + $0x88] sm:$0xff]
        %v1024 = vld [vmem:[%s950 + $0x90] sm:$0xff]
        %v1025 = vld [vmem:[%s950 + $0xa8] sm:$0xff]
        %v1026 = vld [vmem:[%s950 + $0xb0] sm:$0xff]
        %v1027 = vld [vmem:[%s950 + $0xc8] sm:$0xff]
        %v1028 = vld [vmem:[%s950 + $0xd0] sm:$0xff]
        %v1029 = vld [vmem:[%s950 + $0xe8] sm:$0xff]
        %v1030 = vld [vmem:[%s950 + $0xf0] sm:$0xff]
        %v1031 = vld [vmem:[%s950 + $0x108] sm:$0xff]
        %v1032 = vld [vmem:[%s950 + $0x110] sm:$0xff]
        %v1033 = vld [vmem:[%s950 + $0x128] sm:$0xff]
        %v1034 = vld [vmem:[%s950 + $0x130] sm:$0xff]
        %v1035 = vld [vmem:[%s950 + $0x148] sm:$0xff]
        %v1036 = vld [vmem:[%s950 + $0x150] sm:$0xff]
        %v1037 = vld [vmem:[%s950 + $0x168] sm:$0xff]
        %v1038 = vld [vmem:[%s950 + $0x170] sm:$0xff]
        %v1039 = vld [vmem:[%s950 + $0x188] sm:$0xff]
        %v1040 = vld [vmem:[%s950 + $0x190] sm:$0xff]
        %v1041 = vld [vmem:[%s950 + $0x1a8] sm:$0xff]
        %v1042 = vld [vmem:[%s950 + $0x1b0] sm:$0xff]
        %v1043 = vld [vmem:[%s950 + $0x1c8] sm:$0xff]
        %v1044 = vld [vmem:[%s950 + $0x1d0] sm:$0xff]
        %v1045 = vld [vmem:[%s950 + $0x1e8] sm:$0xff]
        %v1046 = vld [vmem:[%s950 + $0x1f0] sm:$0xff]
        %v1047 = vpack.c.bf16 %v1016, %v1015
        %v1048 = vpack.c.bf16 %v1018, %v1017
        %v1049 = vpack.c.bf16 %v1020, %v1019
        %v1050 = vpack.c.bf16 %v1022, %v1021
        %v1051 = vpack.c.bf16 %v1024, %v1023
        %v1052 = vpack.c.bf16 %v1026, %v1025
        %v1053 = vpack.c.bf16 %v1028, %v1027
        %v1054 = vpack.c.bf16 %v1030, %v1029
        %v1055 = vpack.c.bf16 %v1032, %v1031
        %v1056 = vpack.c.bf16 %v1034, %v1033
        %v1057 = vpack.c.bf16 %v1036, %v1035
        %v1058 = vpack.c.bf16 %v1038, %v1037
        %v1059 = vpack.c.bf16 %v1040, %v1039
        %v1060 = vpack.c.bf16 %v1042, %v1041
        %v1061 = vpack.c.bf16 %v1044, %v1043
        %v1062 = vpack.c.bf16 %v1046, %v1045
        %1063 = vst [vmem:[#allocation3 + $0x38] sm:$0xff] %v1047
        %1064 = vst [vmem:[#allocation3 + $0x80] sm:$0xff] %v1048
        %1065 = vst [vmem:[#allocation3 + $0xc8] sm:$0xff] %v1049
        %1066 = vst [vmem:[#allocation3 + $0x110] sm:$0xff] %v1050
        %1067 = vst [vmem:[#allocation3 + $0x158] sm:$0xff] %v1051
        %1068 = vst [vmem:[#allocation3 + $0x1a0] sm:$0xff] %v1052
        %1069 = vst [vmem:[#allocation3 + $0x1e8] sm:$0xff] %v1053
        %1070 = vst [vmem:[#allocation3 + $0x230] sm:$0xff] %v1054
        %1071 = vst [vmem:[#allocation3 + $0x278] sm:$0xff] %v1055
        %1072 = vst [vmem:[#allocation3 + $0x2c0] sm:$0xff] %v1056
        %1073 = vst [vmem:[#allocation3 + $0x308] sm:$0xff] %v1057
        %1074 = vst [vmem:[#allocation3 + $0x350] sm:$0xff] %v1058
        %1075 = vst [vmem:[#allocation3 + $0x398] sm:$0xff] %v1059
        %1076 = vst [vmem:[#allocation3 + $0x3e0] sm:$0xff] %v1060
        %1077 = vst [vmem:[#allocation3 + $0x428] sm:$0xff] %v1061
        %1078 = vst [vmem:[#allocation3 + $0x470] sm:$0xff] %v1062
        %v1079 = vld [vmem:[%s950 + $0x9] sm:$0xff]
        %v1080 = vld [vmem:[%s950 + $0x11] sm:$0xff]
        %v1081 = vld [vmem:[%s950 + $0x29] sm:$0xff]
        %v1082 = vld [vmem:[%s950 + $0x31] sm:$0xff]
        %v1083 = vld [vmem:[%s950 + $0x49] sm:$0xff]
        %v1084 = vld [vmem:[%s950 + $0x51] sm:$0xff]
        %v1085 = vld [vmem:[%s950 + $0x69] sm:$0xff]
        %v1086 = vld [vmem:[%s950 + $0x71] sm:$0xff]
        %v1087 = vld [vmem:[%s950 + $0x89] sm:$0xff]
        %v1088 = vld [vmem:[%s950 + $0x91] sm:$0xff]
        %v1089 = vld [vmem:[%s950 + $0xa9] sm:$0xff]
        %v1090 = vld [vmem:[%s950 + $0xb1] sm:$0xff]
        %v1091 = vld [vmem:[%s950 + $0xc9] sm:$0xff]
        %v1092 = vld [vmem:[%s950 + $0xd1] sm:$0xff]
        %v1093 = vld [vmem:[%s950 + $0xe9] sm:$0xff]
        %v1094 = vld [vmem:[%s950 + $0xf1] sm:$0xff]
        %v1095 = vld [vmem:[%s950 + $0x109] sm:$0xff]
        %v1096 = vld [vmem:[%s950 + $0x111] sm:$0xff]
        %v1097 = vld [vmem:[%s950 + $0x129] sm:$0xff]
        %v1098 = vld [vmem:[%s950 + $0x131] sm:$0xff]
        %v1099 = vld [vmem:[%s950 + $0x149] sm:$0xff]
        %v1100 = vld [vmem:[%s950 + $0x151] sm:$0xff]
        %v1101 = vld [vmem:[%s950 + $0x169] sm:$0xff]
        %v1102 = vld [vmem:[%s950 + $0x171] sm:$0xff]
        %v1103 = vld [vmem:[%s950 + $0x189] sm:$0xff]
        %v1104 = vld [vmem:[%s950 + $0x191] sm:$0xff]
        %v1105 = vld [vmem:[%s950 + $0x1a9] sm:$0xff]
        %v1106 = vld [vmem:[%s950 + $0x1b1] sm:$0xff]
        %v1107 = vld [vmem:[%s950 + $0x1c9] sm:$0xff]
        %v1108 = vld [vmem:[%s950 + $0x1d1] sm:$0xff]
        %v1109 = vld [vmem:[%s950 + $0x1e9] sm:$0xff]
        %v1110 = vld [vmem:[%s950 + $0x1f1] sm:$0xff]
        %v1111 = vpack.c.bf16 %v1080, %v1079
        %v1112 = vpack.c.bf16 %v1082, %v1081
        %v1113 = vpack.c.bf16 %v1084, %v1083
        %v1114 = vpack.c.bf16 %v1086, %v1085
        %v1115 = vpack.c.bf16 %v1088, %v1087
        %v1116 = vpack.c.bf16 %v1090, %v1089
        %v1117 = vpack.c.bf16 %v1092, %v1091
        %v1118 = vpack.c.bf16 %v1094, %v1093
        %v1119 = vpack.c.bf16 %v1096, %v1095
        %v1120 = vpack.c.bf16 %v1098, %v1097
        %v1121 = vpack.c.bf16 %v1100, %v1099
        %v1122 = vpack.c.bf16 %v1102, %v1101
        %v1123 = vpack.c.bf16 %v1104, %v1103
        %v1124 = vpack.c.bf16 %v1106, %v1105
        %v1125 = vpack.c.bf16 %v1108, %v1107
        %v1126 = vpack.c.bf16 %v1110, %v1109
        %1127 = vst [vmem:[#allocation3 + $0x40] sm:$0xff] %v1111
        %1128 = vst [vmem:[#allocation3 + $0x88] sm:$0xff] %v1112
        %1129 = vst [vmem:[#allocation3 + $0xd0] sm:$0xff] %v1113
        %1130 = vst [vmem:[#allocation3 + $0x118] sm:$0xff] %v1114
        %1131 = vst [vmem:[#allocation3 + $0x160] sm:$0xff] %v1115
        %1132 = vst [vmem:[#allocation3 + $0x1a8] sm:$0xff] %v1116
        %1133 = vst [vmem:[#allocation3 + $0x1f0] sm:$0xff] %v1117
        %1134 = vst [vmem:[#allocation3 + $0x238] sm:$0xff] %v1118
        %1135 = vst [vmem:[#allocation3 + $0x280] sm:$0xff] %v1119
        %1136 = vst [vmem:[#allocation3 + $0x2c8] sm:$0xff] %v1120
        %1137 = vst [vmem:[#allocation3 + $0x310] sm:$0xff] %v1121
        %1138 = vst [vmem:[#allocation3 + $0x358] sm:$0xff] %v1122
        %1139 = vst [vmem:[#allocation3 + $0x3a0] sm:$0xff] %v1123
        %1140 = vst [vmem:[#allocation3 + $0x3e8] sm:$0xff] %v1124
        %1141 = vst [vmem:[#allocation3 + $0x430] sm:$0xff] %v1125
        %1142 = vst [vmem:[#allocation3 + $0x478] sm:$0xff] %v1126
        %v1143 = vld [vmem:[#allocation3] sm:$0xff]
        %v1144 = vld [vmem:[#allocation3 + $0x8] sm:$0xff]
        %v1145 = vld [vmem:[#allocation3 + $0x10] sm:$0xff]
        %v1146 = vld [vmem:[#allocation3 + $0x18] sm:$0xff]
        %v1147 = vld [vmem:[#allocation3 + $0x20] sm:$0xff]
        %v1148 = vld [vmem:[#allocation3 + $0x28] sm:$0xff]
        %v1149 = vld [vmem:[#allocation3 + $0x30] sm:$0xff]
        %v1150 = vld [vmem:[#allocation3 + $0x38] sm:$0xff]
        %v1151 = vld [vmem:[#allocation3 + $0x40] sm:$0xff]
        %v1152 = vld [vmem:[#allocation3 + $0x48] sm:$0xff]
        %v1153 = vld [vmem:[#allocation3 + $0x50] sm:$0xff]
        %v1154 = vld [vmem:[#allocation3 + $0x58] sm:$0xff]
        %v1155 = vld [vmem:[#allocation3 + $0x60] sm:$0xff]
        %v1156 = vld [vmem:[#allocation3 + $0x68] sm:$0xff]
        %v1157 = vld [vmem:[#allocation3 + $0x70] sm:$0xff]
        %v1158 = vld [vmem:[#allocation3 + $0x78] sm:$0xff]
        %v1159 = vld [vmem:[#allocation3 + $0x80] sm:$0xff]
        %v1160 = vld [vmem:[#allocation3 + $0x88] sm:$0xff]
        %v1161 = vld [vmem:[#allocation3 + $0x90] sm:$0xff]
        %v1162 = vld [vmem:[#allocation3 + $0x98] sm:$0xff]
        %v1163 = vld [vmem:[#allocation3 + $0xa0] sm:$0xff]
        %v1164 = vld [vmem:[#allocation3 + $0xa8] sm:$0xff]
        %v1165 = vld [vmem:[#allocation3 + $0xb0] sm:$0xff]
        %v1166 = vld [vmem:[#allocation3 + $0xb8] sm:$0xff]
        %v1167 = vld [vmem:[#allocation3 + $0xc0] sm:$0xff]
        %v1168 = vld [vmem:[#allocation3 + $0xc8] sm:$0xff]
        %v1169 = vld [vmem:[#allocation3 + $0xd0] sm:$0xff]
        %v1170 = vld [vmem:[#allocation3 + $0xd8] sm:$0xff]
        %v1171 = vld [vmem:[#allocation3 + $0xe0] sm:$0xff]
        %v1172 = vld [vmem:[#allocation3 + $0xe8] sm:$0xff]
        %v1173 = vld [vmem:[#allocation3 + $0xf0] sm:$0xff]
        %v1174 = vld [vmem:[#allocation3 + $0xf8] sm:$0xff]
        %v1175 = vld [vmem:[#allocation3 + $0x100] sm:$0xff]
        %v1176 = vld [vmem:[#allocation3 + $0x108] sm:$0xff]
        %v1177 = vld [vmem:[#allocation3 + $0x110] sm:$0xff]
        %v1178 = vld [vmem:[#allocation3 + $0x118] sm:$0xff]
        %v1179 = vld [vmem:[#allocation3 + $0x120] sm:$0xff]
        %v1180 = vld [vmem:[#allocation3 + $0x128] sm:$0xff]
        %v1181 = vld [vmem:[#allocation3 + $0x130] sm:$0xff]
        %v1182 = vld [vmem:[#allocation3 + $0x138] sm:$0xff]
        %v1183 = vld [vmem:[#allocation3 + $0x140] sm:$0xff]
        %v1184 = vld [vmem:[#allocation3 + $0x148] sm:$0xff]
        %v1185 = vld [vmem:[#allocation3 + $0x150] sm:$0xff]
        %v1186 = vld [vmem:[#allocation3 + $0x158] sm:$0xff]
        %v1187 = vld [vmem:[#allocation3 + $0x160] sm:$0xff]
        %v1188 = vld [vmem:[#allocation3 + $0x168] sm:$0xff]
        %v1189 = vld [vmem:[#allocation3 + $0x170] sm:$0xff]
        %v1190 = vld [vmem:[#allocation3 + $0x178] sm:$0xff]
        %v1191 = vld [vmem:[#allocation3 + $0x180] sm:$0xff]
        %v1192 = vld [vmem:[#allocation3 + $0x188] sm:$0xff]
        %v1193 = vld [vmem:[#allocation3 + $0x190] sm:$0xff]
        %v1194 = vld [vmem:[#allocation3 + $0x198] sm:$0xff]
        %v1195 = vld [vmem:[#allocation3 + $0x1a0] sm:$0xff]
        %v1196 = vld [vmem:[#allocation3 + $0x1a8] sm:$0xff]
        %v1197 = vld [vmem:[#allocation3 + $0x1b0] sm:$0xff]
        %v1198 = vld [vmem:[#allocation3 + $0x1b8] sm:$0xff]
        %v1199 = vld [vmem:[#allocation3 + $0x1c0] sm:$0xff]
        %v1200 = vld [vmem:[#allocation3 + $0x1c8] sm:$0xff]
        %v1201 = vld [vmem:[#allocation3 + $0x1d0] sm:$0xff]
        %v1202 = vld [vmem:[#allocation3 + $0x1d8] sm:$0xff]
        %v1203 = vld [vmem:[#allocation3 + $0x1e0] sm:$0xff]
        %v1204 = vld [vmem:[#allocation3 + $0x1e8] sm:$0xff]
        %v1205 = vld [vmem:[#allocation3 + $0x1f0] sm:$0xff]
        %v1206 = vld [vmem:[#allocation3 + $0x1f8] sm:$0xff]
        %v1207 = vld [vmem:[#allocation3 + $0x200] sm:$0xff]
        %v1208 = vld [vmem:[#allocation3 + $0x208] sm:$0xff]
        %v1209 = vld [vmem:[#allocation3 + $0x210] sm:$0xff]
        %v1210 = vld [vmem:[#allocation3 + $0x218] sm:$0xff]
        %v1211 = vld [vmem:[#allocation3 + $0x220] sm:$0xff]
        %v1212 = vld [vmem:[#allocation3 + $0x228] sm:$0xff]
        %v1213 = vld [vmem:[#allocation3 + $0x230] sm:$0xff]
        %v1214 = vld [vmem:[#allocation3 + $0x238] sm:$0xff]
        %v1215 = vld [vmem:[#allocation3 + $0x240] sm:$0xff]
        %v1216 = vld [vmem:[#allocation3 + $0x248] sm:$0xff]
        %v1217 = vld [vmem:[#allocation3 + $0x250] sm:$0xff]
        %v1218 = vld [vmem:[#allocation3 + $0x258] sm:$0xff]
        %v1219 = vld [vmem:[#allocation3 + $0x260] sm:$0xff]
        %v1220 = vld [vmem:[#allocation3 + $0x268] sm:$0xff]
        %v1221 = vld [vmem:[#allocation3 + $0x270] sm:$0xff]
        %v1222 = vld [vmem:[#allocation3 + $0x278] sm:$0xff]
        %v1223 = vld [vmem:[#allocation3 + $0x280] sm:$0xff]
        %v1224 = vld [vmem:[#allocation3 + $0x288] sm:$0xff]
        %v1225 = vld [vmem:[#allocation3 + $0x290] sm:$0xff]
        %v1226 = vld [vmem:[#allocation3 + $0x298] sm:$0xff]
        %v1227 = vld [vmem:[#allocation3 + $0x2a0] sm:$0xff]
        %v1228 = vld [vmem:[#allocation3 + $0x2a8] sm:$0xff]
        %v1229 = vld [vmem:[#allocation3 + $0x2b0] sm:$0xff]
        %v1230 = vld [vmem:[#allocation3 + $0x2b8] sm:$0xff]
        %v1231 = vld [vmem:[#allocation3 + $0x2c0] sm:$0xff]
        %v1232 = vld [vmem:[#allocation3 + $0x2c8] sm:$0xff]
        %v1233 = vld [vmem:[#allocation3 + $0x2d0] sm:$0xff]
        %v1234 = vld [vmem:[#allocation3 + $0x2d8] sm:$0xff]
        %v1235 = vld [vmem:[#allocation3 + $0x2e0] sm:$0xff]
        %v1236 = vld [vmem:[#allocation3 + $0x2e8] sm:$0xff]
        %v1237 = vld [vmem:[#allocation3 + $0x2f0] sm:$0xff]
        %v1238 = vld [vmem:[#allocation3 + $0x2f8] sm:$0xff]
        %v1239 = vld [vmem:[#allocation3 + $0x300] sm:$0xff]
        %v1240 = vld [vmem:[#allocation3 + $0x308] sm:$0xff]
        %v1241 = vld [vmem:[#allocation3 + $0x310] sm:$0xff]
        %v1242 = vld [vmem:[#allocation3 + $0x318] sm:$0xff]
        %v1243 = vld [vmem:[#allocation3 + $0x320] sm:$0xff]
        %v1244 = vld [vmem:[#allocation3 + $0x328] sm:$0xff]
        %v1245 = vld [vmem:[#allocation3 + $0x330] sm:$0xff]
        %v1246 = vld [vmem:[#allocation3 + $0x338] sm:$0xff]
        %v1247 = vld [vmem:[#allocation3 + $0x340] sm:$0xff]
        %v1248 = vld [vmem:[#allocation3 + $0x348] sm:$0xff]
        %v1249 = vld [vmem:[#allocation3 + $0x350] sm:$0xff]
        %v1250 = vld [vmem:[#allocation3 + $0x358] sm:$0xff]
        %v1251 = vld [vmem:[#allocation3 + $0x360] sm:$0xff]
        %v1252 = vld [vmem:[#allocation3 + $0x368] sm:$0xff]
        %v1253 = vld [vmem:[#allocation3 + $0x370] sm:$0xff]
        %v1254 = vld [vmem:[#allocation3 + $0x378] sm:$0xff]
        %v1255 = vld [vmem:[#allocation3 + $0x380] sm:$0xff]
        %v1256 = vld [vmem:[#allocation3 + $0x388] sm:$0xff]
        %v1257 = vld [vmem:[#allocation3 + $0x390] sm:$0xff]
        %v1258 = vld [vmem:[#allocation3 + $0x398] sm:$0xff]
        %v1259 = vld [vmem:[#allocation3 + $0x3a0] sm:$0xff]
        %v1260 = vld [vmem:[#allocation3 + $0x3a8] sm:$0xff]
        %v1261 = vld [vmem:[#allocation3 + $0x3b0] sm:$0xff]
        %v1262 = vld [vmem:[#allocation3 + $0x3b8] sm:$0xff]
        %v1263 = vld [vmem:[#allocation3 + $0x3c0] sm:$0xff]
        %v1264 = vld [vmem:[#allocation3 + $0x3c8] sm:$0xff]
        %v1265 = vld [vmem:[#allocation3 + $0x3d0] sm:$0xff]
        %v1266 = vld [vmem:[#allocation3 + $0x3d8] sm:$0xff]
        %v1267 = vld [vmem:[#allocation3 + $0x3e0] sm:$0xff]
        %v1268 = vld [vmem:[#allocation3 + $0x3e8] sm:$0xff]
        %v1269 = vld [vmem:[#allocation3 + $0x3f0] sm:$0xff]
        %v1270 = vld [vmem:[#allocation3 + $0x3f8] sm:$0xff]
        %v1271 = vld [vmem:[#allocation3 + $0x400] sm:$0xff]
        %v1272 = vld [vmem:[#allocation3 + $0x408] sm:$0xff]
        %v1273 = vld [vmem:[#allocation3 + $0x410] sm:$0xff]
        %v1274 = vld [vmem:[#allocation3 + $0x418] sm:$0xff]
        %v1275 = vld [vmem:[#allocation3 + $0x420] sm:$0xff]
        %v1276 = vld [vmem:[#allocation3 + $0x428] sm:$0xff]
        %v1277 = vld [vmem:[#allocation3 + $0x430] sm:$0xff]
        %v1278 = vld [vmem:[#allocation3 + $0x438] sm:$0xff]
        %v1279 = vld [vmem:[#allocation3 + $0x440] sm:$0xff]
        %v1280 = vld [vmem:[#allocation3 + $0x448] sm:$0xff]
        %v1281 = vld [vmem:[#allocation3 + $0x450] sm:$0xff]
        %v1282 = vld [vmem:[#allocation3 + $0x458] sm:$0xff]
        %v1283 = vld [vmem:[#allocation3 + $0x460] sm:$0xff]
        %v1284 = vld [vmem:[#allocation3 + $0x468] sm:$0xff]
        %v1285 = vld [vmem:[#allocation3 + $0x470] sm:$0xff]
        %v1286 = vld [vmem:[#allocation3 + $0x478] sm:$0xff]
        %v1287 = vld [vmem:[#allocation7] sm:$0xf]
        %v1288 = vld [vmem:[#allocation7 + $0x4] sm:$0xf]
        %v1289 = vld [vmem:[#allocation7 + $0x8] sm:$0xf]
        %v1290 = vld [vmem:[#allocation7 + $0xc] sm:$0xf]
        %v1291 = vld [vmem:[#allocation7 + $0x10] sm:$0xf]
        %v1292 = vld [vmem:[#allocation7 + $0x14] sm:$0xf]
        %v1293 = vld [vmem:[#allocation7 + $0x18] sm:$0xf]
        %v1294 = vld [vmem:[#allocation7 + $0x1c] sm:$0xf]
        %v1295 = vld [vmem:[#allocation7 + $0x20] sm:$0xf]
        %v1296 = vld [vmem:[#allocation7 + $0x24] sm:$0xf]
        %v1297 = vld [vmem:[#allocation7 + $0x28] sm:$0xf]
        %v1298 = vld [vmem:[#allocation7 + $0x2c] sm:$0xf]
        %v1299 = vld [vmem:[#allocation7 + $0x30] sm:$0xf]
        %v1300 = vld [vmem:[#allocation7 + $0x34] sm:$0xf]
        %v1301 = vld [vmem:[#allocation7 + $0x38] sm:$0xf]
        %v1302 = vld [vmem:[#allocation7 + $0x3c] sm:$0xf]
        %v1303 = vld [vmem:[#allocation7 + $0x40] sm:$0xf]
        %v1304 = vld [vmem:[#allocation7 + $0x44] sm:$0xf]
        %v1305 = vld [vmem:[#allocation7 + $0x48] sm:$0xf]
        %v1306 = vld [vmem:[#allocation7 + $0x4c] sm:$0xf]
        %v1307 = vld [vmem:[#allocation7 + $0x50] sm:$0xf]
        %v1308 = vld [vmem:[#allocation7 + $0x54] sm:$0xf]
        %v1309 = vld [vmem:[#allocation7 + $0x58] sm:$0xf]
        %v1310 = vld [vmem:[#allocation7 + $0x5c] sm:$0xf]
        %v1311 = vld [vmem:[#allocation7 + $0x60] sm:$0xf]
        %v1312 = vld [vmem:[#allocation7 + $0x64] sm:$0xf]
        %v1313 = vld [vmem:[#allocation7 + $0x68] sm:$0xf]
        %v1314 = vld [vmem:[#allocation7 + $0x6c] sm:$0xf]
        %v1315 = vld [vmem:[#allocation7 + $0x70] sm:$0xf]
        %v1316 = vld [vmem:[#allocation7 + $0x74] sm:$0xf]
        %v1317 = vld [vmem:[#allocation7 + $0x78] sm:$0xf]
        %v1318 = vld [vmem:[#allocation7 + $0x7c] sm:$0xf]
        %v1319 = vld [vmem:[#allocation7 + $0x80] sm:$0xf]
        %v1320 = vld [vmem:[#allocation7 + $0x84] sm:$0xf]
        %v1321 = vld [vmem:[#allocation7 + $0x88] sm:$0xf]
        %v1322 = vld [vmem:[#allocation7 + $0x8c] sm:$0xf]
        %v1323 = vld [vmem:[#allocation7 + $0x90] sm:$0xf]
        %v1324 = vld [vmem:[#allocation7 + $0x94] sm:$0xf]
        %v1325 = vld [vmem:[#allocation7 + $0x98] sm:$0xf]
        %v1326 = vld [vmem:[#allocation7 + $0x9c] sm:$0xf]
        %v1327 = vld [vmem:[#allocation7 + $0xa0] sm:$0xf]
        %v1328 = vld [vmem:[#allocation7 + $0xa4] sm:$0xf]
        %v1329 = vld [vmem:[#allocation7 + $0xa8] sm:$0xf]
        %v1330 = vld [vmem:[#allocation7 + $0xac] sm:$0xf]
        %v1331 = vld [vmem:[#allocation7 + $0xb0] sm:$0xf]
        %v1332 = vld [vmem:[#allocation7 + $0xb4] sm:$0xf]
        %v1333 = vld [vmem:[#allocation7 + $0xb8] sm:$0xf]
        %v1334 = vld [vmem:[#allocation7 + $0xbc] sm:$0xf]
        %v1335 = vld [vmem:[#allocation7 + $0xc0] sm:$0xf]
        %v1336 = vld [vmem:[#allocation7 + $0xc4] sm:$0xf]
        %v1337 = vld [vmem:[#allocation7 + $0xc8] sm:$0xf]
        %v1338 = vld [vmem:[#allocation7 + $0xcc] sm:$0xf]
        %v1339 = vld [vmem:[#allocation7 + $0xd0] sm:$0xf]
        %v1340 = vld [vmem:[#allocation7 + $0xd4] sm:$0xf]
        %v1341 = vld [vmem:[#allocation7 + $0xd8] sm:$0xf]
        %v1342 = vld [vmem:[#allocation7 + $0xdc] sm:$0xf]
        %v1343 = vld [vmem:[#allocation7 + $0xe0] sm:$0xf]
        %v1344 = vld [vmem:[#allocation7 + $0xe4] sm:$0xf]
        %v1345 = vld [vmem:[#allocation7 + $0xe8] sm:$0xf]
        %v1346 = vld [vmem:[#allocation7 + $0xec] sm:$0xf]
        %v1347 = vld [vmem:[#allocation7 + $0xf0] sm:$0xf]
        %v1348 = vld [vmem:[#allocation7 + $0xf4] sm:$0xf]
        %v1349 = vld [vmem:[#allocation7 + $0xf8] sm:$0xf]
        %v1350 = vld [vmem:[#allocation7 + $0xfc] sm:$0xf]
        %v1351 = vld [vmem:[#allocation7 + $0x100] sm:$0xf]
        %v1352 = vld [vmem:[#allocation7 + $0x104] sm:$0xf]
        %v1353 = vld [vmem:[#allocation7 + $0x108] sm:$0xf]
        %v1354 = vld [vmem:[#allocation7 + $0x10c] sm:$0xf]
        %v1355 = vld [vmem:[#allocation7 + $0x110] sm:$0xf]
        %v1356 = vld [vmem:[#allocation7 + $0x114] sm:$0xf]
        %v1357 = vld [vmem:[#allocation7 + $0x118] sm:$0xf]
        %v1358 = vld [vmem:[#allocation7 + $0x11c] sm:$0xf]
        %v1359 = vld [vmem:[#allocation7 + $0x120] sm:$0xf]
        %v1360 = vld [vmem:[#allocation7 + $0x124] sm:$0xf]
        %v1361 = vld [vmem:[#allocation7 + $0x128] sm:$0xf]
        %v1362 = vld [vmem:[#allocation7 + $0x12c] sm:$0xf]
        %v1363 = vld [vmem:[#allocation7 + $0x130] sm:$0xf]
        %v1364 = vld [vmem:[#allocation7 + $0x134] sm:$0xf]
        %v1365 = vld [vmem:[#allocation7 + $0x138] sm:$0xf]
        %v1366 = vld [vmem:[#allocation7 + $0x13c] sm:$0xf]
        %v1367 = vld [vmem:[#allocation7 + $0x140] sm:$0xf]
        %v1368 = vld [vmem:[#allocation7 + $0x144] sm:$0xf]
        %v1369 = vld [vmem:[#allocation7 + $0x148] sm:$0xf]
        %v1370 = vld [vmem:[#allocation7 + $0x14c] sm:$0xf]
        %v1371 = vld [vmem:[#allocation7 + $0x150] sm:$0xf]
        %v1372 = vld [vmem:[#allocation7 + $0x154] sm:$0xf]
        %v1373 = vld [vmem:[#allocation7 + $0x158] sm:$0xf]
        %v1374 = vld [vmem:[#allocation7 + $0x15c] sm:$0xf]
        %v1375 = vld [vmem:[#allocation7 + $0x160] sm:$0xf]
        %v1376 = vld [vmem:[#allocation7 + $0x164] sm:$0xf]
        %v1377 = vld [vmem:[#allocation7 + $0x168] sm:$0xf]
        %v1378 = vld [vmem:[#allocation7 + $0x16c] sm:$0xf]
        %v1379 = vld [vmem:[#allocation7 + $0x170] sm:$0xf]
        %v1380 = vld [vmem:[#allocation7 + $0x174] sm:$0xf]
        %v1381 = vld [vmem:[#allocation7 + $0x178] sm:$0xf]
        %v1382 = vld [vmem:[#allocation7 + $0x17c] sm:$0xf]
        %v1383 = vld [vmem:[#allocation7 + $0x180] sm:$0xf]
        %v1384 = vld [vmem:[#allocation7 + $0x184] sm:$0xf]
        %v1385 = vld [vmem:[#allocation7 + $0x188] sm:$0xf]
        %v1386 = vld [vmem:[#allocation7 + $0x18c] sm:$0xf]
        %v1387 = vld [vmem:[#allocation7 + $0x190] sm:$0xf]
        %v1388 = vld [vmem:[#allocation7 + $0x194] sm:$0xf]
        %v1389 = vld [vmem:[#allocation7 + $0x198] sm:$0xf]
        %v1390 = vld [vmem:[#allocation7 + $0x19c] sm:$0xf]
        %v1391 = vld [vmem:[#allocation7 + $0x1a0] sm:$0xf]
        %v1392 = vld [vmem:[#allocation7 + $0x1a4] sm:$0xf]
        %v1393 = vld [vmem:[#allocation7 + $0x1a8] sm:$0xf]
        %v1394 = vld [vmem:[#allocation7 + $0x1ac] sm:$0xf]
        %v1395 = vld [vmem:[#allocation7 + $0x1b0] sm:$0xf]
        %v1396 = vld [vmem:[#allocation7 + $0x1b4] sm:$0xf]
        %v1397 = vld [vmem:[#allocation7 + $0x1b8] sm:$0xf]
        %v1398 = vld [vmem:[#allocation7 + $0x1bc] sm:$0xf]
        %v1399 = vld [vmem:[#allocation7 + $0x1c0] sm:$0xf]
        %v1400 = vld [vmem:[#allocation7 + $0x1c4] sm:$0xf]
        %v1401 = vld [vmem:[#allocation7 + $0x1c8] sm:$0xf]
        %v1402 = vld [vmem:[#allocation7 + $0x1cc] sm:$0xf]
        %v1403 = vld [vmem:[#allocation7 + $0x1d0] sm:$0xf]
        %v1404 = vld [vmem:[#allocation7 + $0x1d4] sm:$0xf]
        %v1405 = vld [vmem:[#allocation7 + $0x1d8] sm:$0xf]
        %v1406 = vld [vmem:[#allocation7 + $0x1dc] sm:$0xf]
        %v1407 = vld [vmem:[#allocation7 + $0x1e0] sm:$0xf]
        %v1408 = vld [vmem:[#allocation7 + $0x1e4] sm:$0xf]
        %v1409 = vld [vmem:[#allocation7 + $0x1e8] sm:$0xf]
        %v1410 = vld [vmem:[#allocation7 + $0x1ec] sm:$0xf]
        %v1411 = vld [vmem:[#allocation7 + $0x1f0] sm:$0xf]
        %v1412 = vld [vmem:[#allocation7 + $0x1f4] sm:$0xf]
        %v1413 = vld [vmem:[#allocation7 + $0x1f8] sm:$0xf]
        %v1414 = vld [vmem:[#allocation7 + $0x1fc] sm:$0xf]
        %v1415 = vld [vmem:[#allocation7 + $0x200] sm:$0xf]
        %v1416 = vld [vmem:[#allocation7 + $0x204] sm:$0xf]
        %v1417 = vld [vmem:[#allocation7 + $0x208] sm:$0xf]
        %v1418 = vld [vmem:[#allocation7 + $0x20c] sm:$0xf]
        %v1419 = vld [vmem:[#allocation7 + $0x210] sm:$0xf]
        %v1420 = vld [vmem:[#allocation7 + $0x214] sm:$0xf]
        %v1421 = vld [vmem:[#allocation7 + $0x218] sm:$0xf]
        %v1422 = vld [vmem:[#allocation7 + $0x21c] sm:$0xf]
        %v1423 = vld [vmem:[#allocation7 + $0x220] sm:$0xf]
        %v1424 = vld [vmem:[#allocation7 + $0x224] sm:$0xf]
        %v1425 = vld [vmem:[#allocation7 + $0x228] sm:$0xf]
        %v1426 = vld [vmem:[#allocation7 + $0x22c] sm:$0xf]
        %v1427 = vld [vmem:[#allocation7 + $0x230] sm:$0xf]
        %v1428 = vld [vmem:[#allocation7 + $0x234] sm:$0xf]
        %v1429 = vld [vmem:[#allocation7 + $0x238] sm:$0xf]
        %v1430 = vld [vmem:[#allocation7 + $0x23c] sm:$0xf]
        %v1431 = vld [vmem:[#allocation9] sm:$0x1]
        %v1433 = vlaneseq
        %v1434 = vshrl.u32 %v1433, 7
        %v1435 = vsub.s32 0, %v1434
        %v1436 = vrot.slane %v1431, %v1435
        %v1582 = vunpack.c.l.b16 %v1287
        %v1583 = vunpack.c.l.b16 %v1288
        %v1584 = vunpack.c.l.b16 %v1289
        %v1585 = vunpack.c.l.b16 %v1290
        %v1586 = vunpack.c.l.b16 %v1291
        %v1587 = vunpack.c.l.b16 %v1292
        %v1588 = vunpack.c.l.b16 %v1293
        %v1589 = vunpack.c.l.b16 %v1294
        %v1590 = vunpack.c.l.b16 %v1295
        %v1591 = vunpack.c.l.b16 %v1296
        %v1592 = vunpack.c.l.b16 %v1297
        %v1593 = vunpack.c.l.b16 %v1298
        %v1594 = vunpack.c.l.b16 %v1299
        %v1595 = vunpack.c.l.b16 %v1300
        %v1596 = vunpack.c.l.b16 %v1301
        %v1597 = vunpack.c.l.b16 %v1302
        %v1598 = vunpack.c.l.b16 %v1303
        %v1599 = vunpack.c.l.b16 %v1304
        %v1600 = vunpack.c.l.b16 %v1305
        %v1601 = vunpack.c.l.b16 %v1306
        %v1602 = vunpack.c.l.b16 %v1307
        %v1603 = vunpack.c.l.b16 %v1308
        %v1604 = vunpack.c.l.b16 %v1309
        %v1605 = vunpack.c.l.b16 %v1310
        %v1606 = vunpack.c.l.b16 %v1311
        %v1607 = vunpack.c.l.b16 %v1312
        %v1608 = vunpack.c.l.b16 %v1313
        %v1609 = vunpack.c.l.b16 %v1314
        %v1610 = vunpack.c.l.b16 %v1315
        %v1611 = vunpack.c.l.b16 %v1316
        %v1612 = vunpack.c.l.b16 %v1317
        %v1613 = vunpack.c.l.b16 %v1318
        %v1614 = vunpack.c.l.b16 %v1319
        %v1615 = vunpack.c.l.b16 %v1320
        %v1616 = vunpack.c.l.b16 %v1321
        %v1617 = vunpack.c.l.b16 %v1322
        %v1618 = vunpack.c.l.b16 %v1323
        %v1619 = vunpack.c.l.b16 %v1324
        %v1620 = vunpack.c.l.b16 %v1325
        %v1621 = vunpack.c.l.b16 %v1326
        %v1622 = vunpack.c.l.b16 %v1327
        %v1623 = vunpack.c.l.b16 %v1328
        %v1624 = vunpack.c.l.b16 %v1329
        %v1625 = vunpack.c.l.b16 %v1330
        %v1626 = vunpack.c.l.b16 %v1331
        %v1627 = vunpack.c.l.b16 %v1332
        %v1628 = vunpack.c.l.b16 %v1333
        %v1629 = vunpack.c.l.b16 %v1334
        %v1630 = vunpack.c.l.b16 %v1335
        %v1631 = vunpack.c.l.b16 %v1336
        %v1632 = vunpack.c.l.b16 %v1337
        %v1633 = vunpack.c.l.b16 %v1338
        %v1634 = vunpack.c.l.b16 %v1339
        %v1635 = vunpack.c.l.b16 %v1340
        %v1636 = vunpack.c.l.b16 %v1341
        %v1637 = vunpack.c.l.b16 %v1342
        %v1638 = vunpack.c.l.b16 %v1343
        %v1639 = vunpack.c.l.b16 %v1344
        %v1640 = vunpack.c.l.b16 %v1345
        %v1641 = vunpack.c.l.b16 %v1346
        %v1642 = vunpack.c.l.b16 %v1347
        %v1643 = vunpack.c.l.b16 %v1348
        %v1644 = vunpack.c.l.b16 %v1349
        %v1645 = vunpack.c.l.b16 %v1350
        %v1646 = vunpack.c.l.b16 %v1351
        %v1647 = vunpack.c.l.b16 %v1352
        %v1648 = vunpack.c.l.b16 %v1353
        %v1649 = vunpack.c.l.b16 %v1354
        %v1650 = vunpack.c.l.b16 %v1355
        %v1651 = vunpack.c.l.b16 %v1356
        %v1652 = vunpack.c.l.b16 %v1357
        %v1653 = vunpack.c.l.b16 %v1358
        %v1654 = vunpack.c.l.b16 %v1359
        %v1655 = vunpack.c.l.b16 %v1360
        %v1656 = vunpack.c.l.b16 %v1361
        %v1657 = vunpack.c.l.b16 %v1362
        %v1658 = vunpack.c.l.b16 %v1363
        %v1659 = vunpack.c.l.b16 %v1364
        %v1660 = vunpack.c.l.b16 %v1365
        %v1661 = vunpack.c.l.b16 %v1366
        %v1662 = vunpack.c.l.b16 %v1367
        %v1663 = vunpack.c.l.b16 %v1368
        %v1664 = vunpack.c.l.b16 %v1369
        %v1665 = vunpack.c.l.b16 %v1370
        %v1666 = vunpack.c.l.b16 %v1371
        %v1667 = vunpack.c.l.b16 %v1372
        %v1668 = vunpack.c.l.b16 %v1373
        %v1669 = vunpack.c.l.b16 %v1374
        %v1670 = vunpack.c.l.b16 %v1375
        %v1671 = vunpack.c.l.b16 %v1376
        %v1672 = vunpack.c.l.b16 %v1377
        %v1673 = vunpack.c.l.b16 %v1378
        %v1674 = vunpack.c.l.b16 %v1379
        %v1675 = vunpack.c.l.b16 %v1380
        %v1676 = vunpack.c.l.b16 %v1381
        %v1677 = vunpack.c.l.b16 %v1382
        %v1678 = vunpack.c.l.b16 %v1383
        %v1679 = vunpack.c.l.b16 %v1384
        %v1680 = vunpack.c.l.b16 %v1385
        %v1681 = vunpack.c.l.b16 %v1386
        %v1682 = vunpack.c.l.b16 %v1387
        %v1683 = vunpack.c.l.b16 %v1388
        %v1684 = vunpack.c.l.b16 %v1389
        %v1685 = vunpack.c.l.b16 %v1390
        %v1686 = vunpack.c.l.b16 %v1391
        %v1687 = vunpack.c.l.b16 %v1392
        %v1688 = vunpack.c.l.b16 %v1393
        %v1689 = vunpack.c.l.b16 %v1394
        %v1690 = vunpack.c.l.b16 %v1395
        %v1691 = vunpack.c.l.b16 %v1396
        %v1692 = vunpack.c.l.b16 %v1397
        %v1693 = vunpack.c.l.b16 %v1398
        %v1694 = vunpack.c.l.b16 %v1399
        %v1695 = vunpack.c.l.b16 %v1400
        %v1696 = vunpack.c.l.b16 %v1401
        %v1697 = vunpack.c.l.b16 %v1402
        %v1698 = vunpack.c.l.b16 %v1403
        %v1699 = vunpack.c.l.b16 %v1404
        %v1700 = vunpack.c.l.b16 %v1405
        %v1701 = vunpack.c.l.b16 %v1406
        %v1702 = vunpack.c.l.b16 %v1407
        %v1703 = vunpack.c.l.b16 %v1408
        %v1704 = vunpack.c.l.b16 %v1409
        %v1705 = vunpack.c.l.b16 %v1410
        %v1706 = vunpack.c.l.b16 %v1411
        %v1707 = vunpack.c.l.b16 %v1412
        %v1708 = vunpack.c.l.b16 %v1413
        %v1709 = vunpack.c.l.b16 %v1414
        %v1710 = vunpack.c.l.b16 %v1415
        %v1711 = vunpack.c.l.b16 %v1416
        %v1712 = vunpack.c.l.b16 %v1417
        %v1713 = vunpack.c.l.b16 %v1418
        %v1714 = vunpack.c.l.b16 %v1419
        %v1715 = vunpack.c.l.b16 %v1420
        %v1716 = vunpack.c.l.b16 %v1421
        %v1717 = vunpack.c.l.b16 %v1422
        %v1718 = vunpack.c.l.b16 %v1423
        %v1719 = vunpack.c.l.b16 %v1424
        %v1720 = vunpack.c.l.b16 %v1425
        %v1721 = vunpack.c.l.b16 %v1426
        %v1722 = vunpack.c.l.b16 %v1427
        %v1723 = vunpack.c.l.b16 %v1428
        %v1724 = vunpack.c.l.b16 %v1429
        %v1725 = vunpack.c.l.b16 %v1430
        %v1726 = vpack.c.b16 %v1583, %v1582
        %v1727 = vpack.c.b16 %v1585, %v1584
        %v1728 = vpack.c.b16 %v1587, %v1586
        %v1729 = vpack.c.b16 %v1589, %v1588
        %v1730 = vpack.c.b16 %v1591, %v1590
        %v1731 = vpack.c.b16 %v1593, %v1592
        %v1732 = vpack.c.b16 %v1595, %v1594
        %v1733 = vpack.c.b16 %v1597, %v1596
        %v1734 = vpack.c.b16 %v1599, %v1598
        %v1735 = vpack.c.b16 %v1601, %v1600
        %v1736 = vpack.c.b16 %v1603, %v1602
        %v1737 = vpack.c.b16 %v1605, %v1604
        %v1738 = vpack.c.b16 %v1607, %v1606
        %v1739 = vpack.c.b16 %v1609, %v1608
        %v1740 = vpack.c.b16 %v1611, %v1610
        %v1741 = vpack.c.b16 %v1613, %v1612
        %v1742 = vpack.c.b16 %v1615, %v1614
        %v1743 = vpack.c.b16 %v1617, %v1616
        %v1744 = vpack.c.b16 %v1619, %v1618
        %v1745 = vpack.c.b16 %v1621, %v1620
        %v1746 = vpack.c.b16 %v1623, %v1622
        %v1747 = vpack.c.b16 %v1625, %v1624
        %v1748 = vpack.c.b16 %v1627, %v1626
        %v1749 = vpack.c.b16 %v1629, %v1628
        %v1750 = vpack.c.b16 %v1631, %v1630
        %v1751 = vpack.c.b16 %v1633, %v1632
        %v1752 = vpack.c.b16 %v1635, %v1634
        %v1753 = vpack.c.b16 %v1637, %v1636
        %v1754 = vpack.c.b16 %v1639, %v1638
        %v1755 = vpack.c.b16 %v1641, %v1640
        %v1756 = vpack.c.b16 %v1643, %v1642
        %v1757 = vpack.c.b16 %v1645, %v1644
        %v1758 = vpack.c.b16 %v1647, %v1646
        %v1759 = vpack.c.b16 %v1649, %v1648
        %v1760 = vpack.c.b16 %v1651, %v1650
        %v1761 = vpack.c.b16 %v1653, %v1652
        %v1762 = vpack.c.b16 %v1655, %v1654
        %v1763 = vpack.c.b16 %v1657, %v1656
        %v1764 = vpack.c.b16 %v1659, %v1658
        %v1765 = vpack.c.b16 %v1661, %v1660
        %v1766 = vpack.c.b16 %v1663, %v1662
        %v1767 = vpack.c.b16 %v1665, %v1664
        %v1768 = vpack.c.b16 %v1667, %v1666
        %v1769 = vpack.c.b16 %v1669, %v1668
        %v1770 = vpack.c.b16 %v1671, %v1670
        %v1771 = vpack.c.b16 %v1673, %v1672
        %v1772 = vpack.c.b16 %v1675, %v1674
        %v1773 = vpack.c.b16 %v1677, %v1676
        %v1774 = vpack.c.b16 %v1679, %v1678
        %v1775 = vpack.c.b16 %v1681, %v1680
        %v1776 = vpack.c.b16 %v1683, %v1682
        %v1777 = vpack.c.b16 %v1685, %v1684
        %v1778 = vpack.c.b16 %v1687, %v1686
        %v1779 = vpack.c.b16 %v1689, %v1688
        %v1780 = vpack.c.b16 %v1691, %v1690
        %v1781 = vpack.c.b16 %v1693, %v1692
        %v1782 = vpack.c.b16 %v1695, %v1694
        %v1783 = vpack.c.b16 %v1697, %v1696
        %v1784 = vpack.c.b16 %v1699, %v1698
        %v1785 = vpack.c.b16 %v1701, %v1700
        %v1786 = vpack.c.b16 %v1703, %v1702
        %v1787 = vpack.c.b16 %v1705, %v1704
        %v1788 = vpack.c.b16 %v1707, %v1706
        %v1789 = vpack.c.b16 %v1709, %v1708
        %v1790 = vpack.c.b16 %v1711, %v1710
        %v1791 = vpack.c.b16 %v1713, %v1712
        %v1792 = vpack.c.b16 %v1715, %v1714
        %v1793 = vpack.c.b16 %v1717, %v1716
        %v1794 = vpack.c.b16 %v1719, %v1718
        %v1795 = vpack.c.b16 %v1721, %v1720
        %v1796 = vpack.c.b16 %v1723, %v1722
        %v1797 = vpack.c.b16 %v1725, %v1724
        %1870 = vmatprep.subr.bf16.mxu0 0
        %1871 = vmatpush1.bf16.msra.mxu0 %v1726
        %1872 = vmatprep.subr.bf16.mxu0 0
        %1873 = vmatpush1.bf16.msra.mxu0 %v1727
        %1874 = vmatprep.subr.bf16.mxu0 0
        %1875 = vmatpush1.bf16.msra.mxu0 %v1728
        %1876 = vmatprep.subr.bf16.mxu0 0
        %1877 = vmatpush1.bf16.msra.mxu0 %v1729
        %1878 = vmatprep.subr.bf16.mxu0 0
        %1879 = vmatpush1.bf16.msra.mxu0 %v1730
        %1880 = vmatprep.subr.bf16.mxu0 0
        %1881 = vmatpush1.bf16.msra.mxu0 %v1731
        %1882 = vmatprep.subr.bf16.mxu0 0
        %1883 = vmatpush1.bf16.msra.mxu0 %v1732
        %1884 = vmatprep.subr.bf16.mxu0 0
        %1885 = vmatpush1.bf16.msra.mxu0 %v1733
        %1886 = vmatprep.subr.bf16.mxu0 0
        %1887 = vmatpush1.bf16.msra.mxu0 %v1734
        %1888 = vmatprep.subr.bf16.mxu0 0
        %1889 = vmatpush1.bf16.msra.mxu0 %v1735
        %1890 = vmatprep.subr.bf16.mxu0 0
        %1891 = vmatpush1.bf16.msra.mxu0 %v1736
        %1892 = vmatprep.subr.bf16.mxu0 0
        %1893 = vmatpush1.bf16.msra.mxu0 %v1737
        %1894 = vmatprep.subr.bf16.mxu0 0
        %1895 = vmatpush1.bf16.msra.mxu0 %v1738
        %1896 = vmatprep.subr.bf16.mxu0 0
        %1897 = vmatpush1.bf16.msra.mxu0 %v1739
        %1898 = vmatprep.subr.bf16.mxu0 0
        %1899 = vmatpush1.bf16.msra.mxu0 %v1740
        %1900 = vmatprep.subr.bf16.mxu0 0
        %1901 = vmatpush1.bf16.msra.mxu0 %v1741
        %1902 = vmatprep.mubr.bf16.mxu0 %v1144
        %1903 = vmatmul.mubr.bf16.gmra.mrb[0].mxu0 %v1143
        %v1904 = vpop.f32.mrb[0].mxu0
        %v1905 = vadd.f32 %v1436, %v1904
        %v1906 = vpop.f32.mrb[0].mxu0
        %v1907 = vpop.f32.mrb[0].mxu0
        %v1908 = vadd.f32 %v1436, %v1907
        %v1909 = vpop.f32.mrb[0].mxu0
        %1910 = vmatprep.mubr.bf16.mxu0 %v1153
        %1911 = vmatmul.mubr.bf16.gmra.mrb[0].mxu0 %v1152
        %v1912 = vpop.f32.mrb[0].mxu0
        %v1913 = vadd.f32 %v1436, %v1912
        %v1914 = vpop.f32.mrb[0].mxu0
        %v1915 = vpop.f32.mrb[0].mxu0
        %v1916 = vadd.f32 %v1436, %v1915
        %v1917 = vpop.f32.mrb[0].mxu0
        %1918 = vmatprep.mubr.bf16.mxu0 %v1162
        %1919 = vmatmul.mubr.bf16.gmra.mrb[0].mxu0 %v1161
        %v1920 = vpop.f32.mrb[0].mxu0
        %v1921 = vadd.f32 %v1436, %v1920
        %v1922 = vpop.f32.mrb[0].mxu0
        %v1923 = vpop.f32.mrb[0].mxu0
        %v1924 = vadd.f32 %v1436, %v1923
        %v1925 = vpop.f32.mrb[0].mxu0
        %1926 = vmatprep.mubr.bf16.mxu0 %v1171
        %1927 = vmatmul.mubr.bf16.gmra.mrb[0].mxu0 %v1170
        %v1928 = vpop.f32.mrb[0].mxu0
        %v1929 = vadd.f32 %v1436, %v1928
        %v1930 = vpop.f32.mrb[0].mxu0
        %v1931 = vpop.f32.mrb[0].mxu0
        %v1932 = vadd.f32 %v1436, %v1931
        %v1933 = vpop.f32.mrb[0].mxu0
        %1934 = vmatprep.mubr.bf16.mxu0 %v1180
        %1935 = vmatmul.mubr.bf16.gmra.mrb[0].mxu0 %v1179
        %v1936 = vpop.f32.mrb[0].mxu0
        %v1937 = vadd.f32 %v1436, %v1936
        %v1938 = vpop.f32.mrb[0].mxu0
        %v1939 = vpop.f32.mrb[0].mxu0
        %v1940 = vadd.f32 %v1436, %v1939
        %v1941 = vpop.f32.mrb[0].mxu0
        %1942 = vmatprep.mubr.bf16.mxu0 %v1189
        %1943 = vmatmul.mubr.bf16.gmra.mrb[0].mxu0 %v1188
        %v1944 = vpop.f32.mrb[0].mxu0
        %v1945 = vadd.f32 %v1436, %v1944
        %v1946 = vpop.f32.mrb[0].mxu0
        %v1947 = vpop.f32.mrb[0].mxu0
        %v1948 = vadd.f32 %v1436, %v1947
        %v1949 = vpop.f32.mrb[0].mxu0
        %1950 = vmatprep.mubr.bf16.mxu0 %v1198
        %1951 = vmatmul.mubr.bf16.gmra.mrb[0].mxu0 %v1197
        %v1952 = vpop.f32.mrb[0].mxu0
        %v1953 = vadd.f32 %v1436, %v1952
        %v1954 = vpop.f32.mrb[0].mxu0
        %v1955 = vpop.f32.mrb[0].mxu0
        %v1956 = vadd.f32 %v1436, %v1955
        %v1957 = vpop.f32.mrb[0].mxu0
        %1958 = vmatprep.mubr.bf16.mxu0 %v1207
        %1959 = vmatmul.mubr.bf16.gmra.mrb[0].mxu0 %v1206
        %v1960 = vpop.f32.mrb[0].mxu0
        %v1961 = vadd.f32 %v1436, %v1960
        %v1962 = vpop.f32.mrb[0].mxu0
        %v1963 = vpop.f32.mrb[0].mxu0
        %v1964 = vadd.f32 %v1436, %v1963
        %v1965 = vpop.f32.mrb[0].mxu0
        %1966 = vmatprep.mubr.bf16.mxu0 %v1216
        %1967 = vmatmul.mubr.bf16.gmra.mrb[0].mxu0 %v1215
        %v1968 = vpop.f32.mrb[0].mxu0
        %v1969 = vadd.f32 %v1436, %v1968
        %v1970 = vpop.f32.mrb[0].mxu0
        %v1971 = vpop.f32.mrb[0].mxu0
        %v1972 = vadd.f32 %v1436, %v1971
        %v1973 = vpop.f32.mrb[0].mxu0
        %1974 = vmatprep.mubr.bf16.mxu0 %v1225
        %1975 = vmatmul.mubr.bf16.gmra.mrb[0].mxu0 %v1224
        %v1976 = vpop.f32.mrb[0].mxu0
        %v1977 = vadd.f32 %v1436, %v1976
        %v1978 = vpop.f32.mrb[0].mxu0
        %v1979 = vpop.f32.mrb[0].mxu0
        %v1980 = vadd.f32 %v1436, %v1979
        %v1981 = vpop.f32.mrb[0].mxu0
        %1982 = vmatprep.mubr.bf16.mxu0 %v1234
        %1983 = vmatmul.mubr.bf16.gmra.mrb[0].mxu0 %v1233
        %v1984 = vpop.f32.mrb[0].mxu0
        %v1985 = vadd.f32 %v1436, %v1984
        %v1986 = vpop.f32.mrb[0].mxu0
        %v1987 = vpop.f32.mrb[0].mxu0
        %v1988 = vadd.f32 %v1436, %v1987
        %v1989 = vpop.f32.mrb[0].mxu0
        %1990 = vmatprep.mubr.bf16.mxu0 %v1243
        %1991 = vmatmul.mubr.bf16.gmra.mrb[0].mxu0 %v1242
        %v1992 = vpop.f32.mrb[0].mxu0
        %v1993 = vadd.f32 %v1436, %v1992
        %v1994 = vpop.f32.mrb[0].mxu0
        %v1995 = vpop.f32.mrb[0].mxu0
        %v1996 = vadd.f32 %v1436, %v1995
        %v1997 = vpop.f32.mrb[0].mxu0
        %1998 = vmatprep.mubr.bf16.mxu0 %v1252
        %1999 = vmatmul.mubr.bf16.gmra.mrb[0].mxu0 %v1251
        %v2000 = vpop.f32.mrb[0].mxu0
        %v2001 = vadd.f32 %v1436, %v2000
        %v2002 = vpop.f32.mrb[0].mxu0
        %v2003 = vpop.f32.mrb[0].mxu0
        %v2004 = vadd.f32 %v1436, %v2003
        %v2005 = vpop.f32.mrb[0].mxu0
        %2006 = vmatprep.mubr.bf16.mxu0 %v1261
        %2007 = vmatmul.mubr.bf16.gmra.mrb[0].mxu0 %v1260
        %v2008 = vpop.f32.mrb[0].mxu0
        %v2009 = vadd.f32 %v1436, %v2008
        %v2010 = vpop.f32.mrb[0].mxu0
        %v2011 = vpop.f32.mrb[0].mxu0
        %v2012 = vadd.f32 %v1436, %v2011
        %v2013 = vpop.f32.mrb[0].mxu0
        %2014 = vmatprep.mubr.bf16.mxu0 %v1270
        %2015 = vmatmul.mubr.bf16.gmra.mrb[0].mxu0 %v1269
        %v2016 = vpop.f32.mrb[0].mxu0
        %v2017 = vadd.f32 %v1436, %v2016
        %v2018 = vpop.f32.mrb[0].mxu0
        %v2019 = vpop.f32.mrb[0].mxu0
        %v2020 = vadd.f32 %v1436, %v2019
        %v2021 = vpop.f32.mrb[0].mxu0
        %2022 = vmatprep.mubr.bf16.mxu0 %v1279
        %2023 = vmatmul.mubr.bf16.gmra.mrb[0].mxu0 %v1278
        %v2024 = vpop.f32.mrb[0].mxu0
        %v2025 = vadd.f32 %v1436, %v2024
        %v2026 = vpop.f32.mrb[0].mxu0
        %v2027 = vpop.f32.mrb[0].mxu0
        %v2028 = vadd.f32 %v1436, %v2027
        %v2029 = vpop.f32.mrb[0].mxu0
        %2030 = vdwg.mxu0
        %2031 = vmatprep.subr.bf16.mxu0 0
        %2032 = vmatpush1.bf16.msra.mxu0 %v1742
        %2033 = vmatprep.subr.bf16.mxu0 0
        %2034 = vmatpush1.bf16.msra.mxu0 %v1743
        %2035 = vmatprep.subr.bf16.mxu0 0
        %2036 = vmatpush1.bf16.msra.mxu0 %v1744
        %2037 = vmatprep.subr.bf16.mxu0 0
        %2038 = vmatpush1.bf16.msra.mxu0 %v1745
        %2039 = vmatprep.subr.bf16.mxu0 0
        %2040 = vmatpush1.bf16.msra.mxu0 %v1746
        %2041 = vmatprep.subr.bf16.mxu0 0
        %2042 = vmatpush1.bf16.msra.mxu0 %v1747
        %2043 = vmatprep.subr.bf16.mxu0 0
        %2044 = vmatpush1.bf16.msra.mxu0 %v1748
        %2045 = vmatprep.subr.bf16.mxu0 0
        %2046 = vmatpush1.bf16.msra.mxu0 %v1749
        %2047 = vmatprep.subr.bf16.mxu0 0
        %2048 = vmatpush1.bf16.msra.mxu0 %v1750
        %2049 = vmatprep.subr.bf16.mxu0 0
        %2050 = vmatpush1.bf16.msra.mxu0 %v1751
        %2051 = vmatprep.subr.bf16.mxu0 0
        %2052 = vmatpush1.bf16.msra.mxu0 %v1752
        %2053 = vmatprep.subr.bf16.mxu0 0
        %2054 = vmatpush1.bf16.msra.mxu0 %v1753
        %2055 = vmatprep.subr.bf16.mxu0 0
        %2056 = vmatpush1.bf16.msra.mxu0 %v1754
        %2057 = vmatprep.subr.bf16.mxu0 0
        %2058 = vmatpush1.bf16.msra.mxu0 %v1755
        %2059 = vmatprep.subr.bf16.mxu0 0
        %2060 = vmatpush1.bf16.msra.mxu0 %v1756
        %2061 = vmatprep.subr.bf16.mxu0 0
        %2062 = vmatpush1.bf16.msra.mxu0 %v1757
        %2063 = vmatprep.mubr.bf16.mxu0 %v1146
        %2064 = vmatmul.mubr.bf16.gmra.mrb[0].mxu0 %v1145
        %v2065 = vpop.f32.mrb[0].mxu0
        %v2066 = vadd.f32 %v1905, %v2065
        %v2067 = vpop.f32.mrb[0].mxu0
        %v2068 = vpop.f32.mrb[0].mxu0
        %v2069 = vadd.f32 %v1908, %v2068
        %v2070 = vpop.f32.mrb[0].mxu0
        %2071 = vmatprep.mubr.bf16.mxu0 %v1155
        %2072 = vmatmul.mubr.bf16.gmra.mrb[0].mxu0 %v1154
        %v2073 = vpop.f32.mrb[0].mxu0
        %v2074 = vadd.f32 %v1913, %v2073
        %v2075 = vpop.f32.mrb[0].mxu0
        %v2076 = vpop.f32.mrb[0].mxu0
        %v2077 = vadd.f32 %v1916, %v2076
        %v2078 = vpop.f32.mrb[0].mxu0
        %2079 = vmatprep.mubr.bf16.mxu0 %v1164
        %2080 = vmatmul.mubr.bf16.gmra.mrb[0].mxu0 %v1163
        %v2081 = vpop.f32.mrb[0].mxu0
        %v2082 = vadd.f32 %v1921, %v2081
        %v2083 = vpop.f32.mrb[0].mxu0
        %v2084 = vpop.f32.mrb[0].mxu0
        %v2085 = vadd.f32 %v1924, %v2084
        %v2086 = vpop.f32.mrb[0].mxu0
        %2087 = vmatprep.mubr.bf16.mxu0 %v1173
        %2088 = vmatmul.mubr.bf16.gmra.mrb[0].mxu0 %v1172
        %v2089 = vpop.f32.mrb[0].mxu0
        %v2090 = vadd.f32 %v1929, %v2089
        %v2091 = vpop.f32.mrb[0].mxu0
        %v2092 = vpop.f32.mrb[0].mxu0
        %v2093 = vadd.f32 %v1932, %v2092
        %v2094 = vpop.f32.mrb[0].mxu0
        %2095 = vmatprep.mubr.bf16.mxu0 %v1182
        %2096 = vmatmul.mubr.bf16.gmra.mrb[0].mxu0 %v1181
        %v2097 = vpop.f32.mrb[0].mxu0
        %v2098 = vadd.f32 %v1937, %v2097
        %v2099 = vpop.f32.mrb[0].mxu0
        %v2100 = vpop.f32.mrb[0].mxu0
        %v2101 = vadd.f32 %v1940, %v2100
        %v2102 = vpop.f32.mrb[0].mxu0
        %2103 = vmatprep.mubr.bf16.mxu0 %v1191
        %2104 = vmatmul.mubr.bf16.gmra.mrb[0].mxu0 %v1190
        %v2105 = vpop.f32.mrb[0].mxu0
        %v2106 = vadd.f32 %v1945, %v2105
        %v2107 = vpop.f32.mrb[0].mxu0
        %v2108 = vpop.f32.mrb[0].mxu0
        %v2109 = vadd.f32 %v1948, %v2108
        %v2110 = vpop.f32.mrb[0].mxu0
        %2111 = vmatprep.mubr.bf16.mxu0 %v1200
        %2112 = vmatmul.mubr.bf16.gmra.mrb[0].mxu0 %v1199
        %v2113 = vpop.f32.mrb[0].mxu0
        %v2114 = vadd.f32 %v1953, %v2113
        %v2115 = vpop.f32.mrb[0].mxu0
        %v2116 = vpop.f32.mrb[0].mxu0
        %v2117 = vadd.f32 %v1956, %v2116
        %v2118 = vpop.f32.mrb[0].mxu0
        %2119 = vmatprep.mubr.bf16.mxu0 %v1209
        %2120 = vmatmul.mubr.bf16.gmra.mrb[0].mxu0 %v1208
        %v2121 = vpop.f32.mrb[0].mxu0
        %v2122 = vadd.f32 %v1961, %v2121
        %v2123 = vpop.f32.mrb[0].mxu0
        %v2124 = vpop.f32.mrb[0].mxu0
        %v2125 = vadd.f32 %v1964, %v2124
        %v2126 = vpop.f32.mrb[0].mxu0
        %2127 = vmatprep.mubr.bf16.mxu0 %v1218
        %2128 = vmatmul.mubr.bf16.gmra.mrb[0].mxu0 %v1217
        %v2129 = vpop.f32.mrb[0].mxu0
        %v2130 = vadd.f32 %v1969, %v2129
        %v2131 = vpop.f32.mrb[0].mxu0
        %v2132 = vpop.f32.mrb[0].mxu0
        %v2133 = vadd.f32 %v1972, %v2132
        %v2134 = vpop.f32.mrb[0].mxu0
        %2135 = vmatprep.mubr.bf16.mxu0 %v1227
        %2136 = vmatmul.mubr.bf16.gmra.mrb[0].mxu0 %v1226
        %v2137 = vpop.f32.mrb[0].mxu0
        %v2138 = vadd.f32 %v1977, %v2137
        %v2139 = vpop.f32.mrb[0].mxu0
        %v2140 = vpop.f32.mrb[0].mxu0
        %v2141 = vadd.f32 %v1980, %v2140
        %v2142 = vpop.f32.mrb[0].mxu0
        %2143 = vmatprep.mubr.bf16.mxu0 %v1236
        %2144 = vmatmul.mubr.bf16.gmra.mrb[0].mxu0 %v1235
        %v2145 = vpop.f32.mrb[0].mxu0
        %v2146 = vadd.f32 %v1985, %v2145
        %v2147 = vpop.f32.mrb[0].mxu0
        %v2148 = vpop.f32.mrb[0].mxu0
        %v2149 = vadd.f32 %v1988, %v2148
        %v2150 = vpop.f32.mrb[0].mxu0
        %2151 = vmatprep.mubr.bf16.mxu0 %v1245
        %2152 = vmatmul.mubr.bf16.gmra.mrb[0].mxu0 %v1244
        %v2153 = vpop.f32.mrb[0].mxu0
        %v2154 = vadd.f32 %v1993, %v2153
        %v2155 = vpop.f32.mrb[0].mxu0
        %v2156 = vpop.f32.mrb[0].mxu0
        %v2157 = vadd.f32 %v1996, %v2156
        %v2158 = vpop.f32.mrb[0].mxu0
        %2159 = vmatprep.mubr.bf16.mxu0 %v1254
        %2160 = vmatmul.mubr.bf16.gmra.mrb[0].mxu0 %v1253
        %v2161 = vpop.f32.mrb[0].mxu0
        %v2162 = vadd.f32 %v2001, %v2161
        %v2163 = vpop.f32.mrb[0].mxu0
        %v2164 = vpop.f32.mrb[0].mxu0
        %v2165 = vadd.f32 %v2004, %v2164
        %v2166 = vpop.f32.mrb[0].mxu0
        %2167 = vmatprep.mubr.bf16.mxu0 %v1263
        %2168 = vmatmul.mubr.bf16.gmra.mrb[0].mxu0 %v1262
        %v2169 = vpop.f32.mrb[0].mxu0
        %v2170 = vadd.f32 %v2009, %v2169
        %v2171 = vpop.f32.mrb[0].mxu0
        %v2172 = vpop.f32.mrb[0].mxu0
        %v2173 = vadd.f32 %v2012, %v2172
        %v2174 = vpop.f32.mrb[0].mxu0
        %2175 = vmatprep.mubr.bf16.mxu0 %v1272
        %2176 = vmatmul.mubr.bf16.gmra.mrb[0].mxu0 %v1271
        %v2177 = vpop.f32.mrb[0].mxu0
        %v2178 = vadd.f32 %v2017, %v2177
        %v2179 = vpop.f32.mrb[0].mxu0
        %v2180 = vpop.f32.mrb[0].mxu0
        %v2181 = vadd.f32 %v2020, %v2180
        %v2182 = vpop.f32.mrb[0].mxu0
        %2183 = vmatprep.mubr.bf16.mxu0 %v1281
        %2184 = vmatmul.mubr.bf16.gmra.mrb[0].mxu0 %v1280
        %v2185 = vpop.f32.mrb[0].mxu0
        %v2186 = vadd.f32 %v2025, %v2185
        %v2187 = vpop.f32.mrb[0].mxu0
        %v2188 = vpop.f32.mrb[0].mxu0
        %v2189 = vadd.f32 %v2028, %v2188
        %v2190 = vpop.f32.mrb[0].mxu0
        %2191 = vdwg.mxu0
        %2192 = vmatprep.subr.bf16.mxu0 0
        %2193 = vmatpush1.bf16.msra.mxu0 %v1758
        %2194 = vmatprep.subr.bf16.mxu0 0
        %2195 = vmatpush1.bf16.msra.mxu0 %v1759
        %2196 = vmatprep.subr.bf16.mxu0 0
        %2197 = vmatpush1.bf16.msra.mxu0 %v1760
        %2198 = vmatprep.subr.bf16.mxu0 0
        %2199 = vmatpush1.bf16.msra.mxu0 %v1761
        %2200 = vmatprep.subr.bf16.mxu0 0
        %2201 = vmatpush1.bf16.msra.mxu0 %v1762
        %2202 = vmatprep.subr.bf16.mxu0 0
        %2203 = vmatpush1.bf16.msra.mxu0 %v1763
        %2204 = vmatprep.subr.bf16.mxu0 0
        %2205 = vmatpush1.bf16.msra.mxu0 %v1764
        %2206 = vmatprep.subr.bf16.mxu0 0
        %2207 = vmatpush1.bf16.msra.mxu0 %v1765
        %2208 = vmatprep.subr.bf16.mxu0 0
        %2209 = vmatpush1.bf16.msra.mxu0 %v1766
        %2210 = vmatprep.subr.bf16.mxu0 0
        %2211 = vmatpush1.bf16.msra.mxu0 %v1767
        %2212 = vmatprep.subr.bf16.mxu0 0
        %2213 = vmatpush1.bf16.msra.mxu0 %v1768
        %2214 = vmatprep.subr.bf16.mxu0 0
        %2215 = vmatpush1.bf16.msra.mxu0 %v1769
        %2216 = vmatprep.subr.bf16.mxu0 0
        %2217 = vmatpush1.bf16.msra.mxu0 %v1770
        %2218 = vmatprep.subr.bf16.mxu0 0
        %2219 = vmatpush1.bf16.msra.mxu0 %v1771
        %2220 = vmatprep.subr.bf16.mxu0 0
        %2221 = vmatpush1.bf16.msra.mxu0 %v1772
        %2222 = vmatprep.subr.bf16.mxu0 0
        %2223 = vmatpush1.bf16.msra.mxu0 %v1773
        %2224 = vmatprep.mubr.bf16.mxu0 %v1148
        %2225 = vmatmul.mubr.bf16.gmra.mrb[0].mxu0 %v1147
        %v2226 = vpop.f32.mrb[0].mxu0
        %v2227 = vadd.f32 %v2066, %v2226
        %v2228 = vpop.f32.mrb[0].mxu0
        %v2229 = vpop.f32.mrb[0].mxu0
        %v2230 = vadd.f32 %v2069, %v2229
        %v2231 = vpop.f32.mrb[0].mxu0
        %2232 = vmatprep.mubr.bf16.mxu0 %v1157
        %2233 = vmatmul.mubr.bf16.gmra.mrb[0].mxu0 %v1156
        %v2234 = vpop.f32.mrb[0].mxu0
        %v2235 = vadd.f32 %v2074, %v2234
        %v2236 = vpop.f32.mrb[0].mxu0
        %v2237 = vpop.f32.mrb[0].mxu0
        %v2238 = vadd.f32 %v2077, %v2237
        %v2239 = vpop.f32.mrb[0].mxu0
        %2240 = vmatprep.mubr.bf16.mxu0 %v1166
        %2241 = vmatmul.mubr.bf16.gmra.mrb[0].mxu0 %v1165
        %v2242 = vpop.f32.mrb[0].mxu0
        %v2243 = vadd.f32 %v2082, %v2242
        %v2244 = vpop.f32.mrb[0].mxu0
        %v2245 = vpop.f32.mrb[0].mxu0
        %v2246 = vadd.f32 %v2085, %v2245
        %v2247 = vpop.f32.mrb[0].mxu0
        %2248 = vmatprep.mubr.bf16.mxu0 %v1175
        %2249 = vmatmul.mubr.bf16.gmra.mrb[0].mxu0 %v1174
        %v2250 = vpop.f32.mrb[0].mxu0
        %v2251 = vadd.f32 %v2090, %v2250
        %v2252 = vpop.f32.mrb[0].mxu0
        %v2253 = vpop.f32.mrb[0].mxu0
        %v2254 = vadd.f32 %v2093, %v2253
        %v2255 = vpop.f32.mrb[0].mxu0
        %2256 = vmatprep.mubr.bf16.mxu0 %v1184
        %2257 = vmatmul.mubr.bf16.gmra.mrb[0].mxu0 %v1183
        %v2258 = vpop.f32.mrb[0].mxu0
        %v2259 = vadd.f32 %v2098, %v2258
        %v2260 = vpop.f32.mrb[0].mxu0
        %v2261 = vpop.f32.mrb[0].mxu0
        %v2262 = vadd.f32 %v2101, %v2261
        %v2263 = vpop.f32.mrb[0].mxu0
        %2264 = vmatprep.mubr.bf16.mxu0 %v1193
        %2265 = vmatmul.mubr.bf16.gmra.mrb[0].mxu0 %v1192
        %v2266 = vpop.f32.mrb[0].mxu0
        %v2267 = vadd.f32 %v2106, %v2266
        %v2268 = vpop.f32.mrb[0].mxu0
        %v2269 = vpop.f32.mrb[0].mxu0
        %v2270 = vadd.f32 %v2109, %v2269
        %v2271 = vpop.f32.mrb[0].mxu0
        %2272 = vmatprep.mubr.bf16.mxu0 %v1202
        %2273 = vmatmul.mubr.bf16.gmra.mrb[0].mxu0 %v1201
        %v2274 = vpop.f32.mrb[0].mxu0
        %v2275 = vadd.f32 %v2114, %v2274
        %v2276 = vpop.f32.mrb[0].mxu0
        %v2277 = vpop.f32.mrb[0].mxu0
        %v2278 = vadd.f32 %v2117, %v2277
        %v2279 = vpop.f32.mrb[0].mxu0
        %2280 = vmatprep.mubr.bf16.mxu0 %v1211
        %2281 = vmatmul.mubr.bf16.gmra.mrb[0].mxu0 %v1210
        %v2282 = vpop.f32.mrb[0].mxu0
        %v2283 = vadd.f32 %v2122, %v2282
        %v2284 = vpop.f32.mrb[0].mxu0
        %v2285 = vpop.f32.mrb[0].mxu0
        %v2286 = vadd.f32 %v2125, %v2285
        %v2287 = vpop.f32.mrb[0].mxu0
        %2288 = vmatprep.mubr.bf16.mxu0 %v1220
        %2289 = vmatmul.mubr.bf16.gmra.mrb[0].mxu0 %v1219
        %v2290 = vpop.f32.mrb[0].mxu0
        %v2291 = vadd.f32 %v2130, %v2290
        %v2292 = vpop.f32.mrb[0].mxu0
        %v2293 = vpop.f32.mrb[0].mxu0
        %v2294 = vadd.f32 %v2133, %v2293
        %v2295 = vpop.f32.mrb[0].mxu0
        %2296 = vmatprep.mubr.bf16.mxu0 %v1229
        %2297 = vmatmul.mubr.bf16.gmra.mrb[0].mxu0 %v1228
        %v2298 = vpop.f32.mrb[0].mxu0
        %v2299 = vadd.f32 %v2138, %v2298
        %v2300 = vpop.f32.mrb[0].mxu0
        %v2301 = vpop.f32.mrb[0].mxu0
        %v2302 = vadd.f32 %v2141, %v2301
        %v2303 = vpop.f32.mrb[0].mxu0
        %2304 = vmatprep.mubr.bf16.mxu0 %v1238
        %2305 = vmatmul.mubr.bf16.gmra.mrb[0].mxu0 %v1237
        %v2306 = vpop.f32.mrb[0].mxu0
        %v2307 = vadd.f32 %v2146, %v2306
        %v2308 = vpop.f32.mrb[0].mxu0
        %v2309 = vpop.f32.mrb[0].mxu0
        %v2310 = vadd.f32 %v2149, %v2309
        %v2311 = vpop.f32.mrb[0].mxu0
        %2312 = vmatprep.mubr.bf16.mxu0 %v1247
        %2313 = vmatmul.mubr.bf16.gmra.mrb[0].mxu0 %v1246
        %v2314 = vpop.f32.mrb[0].mxu0
        %v2315 = vadd.f32 %v2154, %v2314
        %v2316 = vpop.f32.mrb[0].mxu0
        %v2317 = vpop.f32.mrb[0].mxu0
        %v2318 = vadd.f32 %v2157, %v2317
        %v2319 = vpop.f32.mrb[0].mxu0
        %2320 = vmatprep.mubr.bf16.mxu0 %v1256
        %2321 = vmatmul.mubr.bf16.gmra.mrb[0].mxu0 %v1255
        %v2322 = vpop.f32.mrb[0].mxu0
        %v2323 = vadd.f32 %v2162, %v2322
        %v2324 = vpop.f32.mrb[0].mxu0
        %v2325 = vpop.f32.mrb[0].mxu0
        %v2326 = vadd.f32 %v2165, %v2325
        %v2327 = vpop.f32.mrb[0].mxu0
        %2328 = vmatprep.mubr.bf16.mxu0 %v1265
        %2329 = vmatmul.mubr.bf16.gmra.mrb[0].mxu0 %v1264
        %v2330 = vpop.f32.mrb[0].mxu0
        %v2331 = vadd.f32 %v2170, %v2330
        %v2332 = vpop.f32.mrb[0].mxu0
        %v2333 = vpop.f32.mrb[0].mxu0
        %v2334 = vadd.f32 %v2173, %v2333
        %v2335 = vpop.f32.mrb[0].mxu0
        %2336 = vmatprep.mubr.bf16.mxu0 %v1274
        %2337 = vmatmul.mubr.bf16.gmra.mrb[0].mxu0 %v1273
        %v2338 = vpop.f32.mrb[0].mxu0
        %v2339 = vadd.f32 %v2178, %v2338
        %v2340 = vpop.f32.mrb[0].mxu0
        %v2341 = vpop.f32.mrb[0].mxu0
        %v2342 = vadd.f32 %v2181, %v2341
        %v2343 = vpop.f32.mrb[0].mxu0
        %2344 = vmatprep.mubr.bf16.mxu0 %v1283
        %2345 = vmatmul.mubr.bf16.gmra.mrb[0].mxu0 %v1282
        %v2346 = vpop.f32.mrb[0].mxu0
        %v2347 = vadd.f32 %v2186, %v2346
        %v2348 = vpop.f32.mrb[0].mxu0
        %v2349 = vpop.f32.mrb[0].mxu0
        %v2350 = vadd.f32 %v2189, %v2349
        %v2351 = vpop.f32.mrb[0].mxu0
        %2352 = vdwg.mxu0
        %2353 = vmatprep.subr.bf16.mxu0 0
        %2354 = vmatpush1.bf16.msra.mxu0 %v1774
        %2355 = vmatprep.subr.bf16.mxu0 0
        %2356 = vmatpush1.bf16.msra.mxu0 %v1775
        %2357 = vmatprep.subr.bf16.mxu0 0
        %2358 = vmatpush1.bf16.msra.mxu0 %v1776
        %2359 = vmatprep.subr.bf16.mxu0 0
        %2360 = vmatpush1.bf16.msra.mxu0 %v1777
        %2361 = vmatprep.subr.bf16.mxu0 0
        %2362 = vmatpush1.bf16.msra.mxu0 %v1778
        %2363 = vmatprep.subr.bf16.mxu0 0
        %2364 = vmatpush1.bf16.msra.mxu0 %v1779
        %2365 = vmatprep.subr.bf16.mxu0 0
        %2366 = vmatpush1.bf16.msra.mxu0 %v1780
        %2367 = vmatprep.subr.bf16.mxu0 0
        %2368 = vmatpush1.bf16.msra.mxu0 %v1781
        %2369 = vmatprep.subr.bf16.mxu0 0
        %2370 = vmatpush1.bf16.msra.mxu0 %v1782
        %2371 = vmatprep.subr.bf16.mxu0 0
        %2372 = vmatpush1.bf16.msra.mxu0 %v1783
        %2373 = vmatprep.subr.bf16.mxu0 0
        %2374 = vmatpush1.bf16.msra.mxu0 %v1784
        %2375 = vmatprep.subr.bf16.mxu0 0
        %2376 = vmatpush1.bf16.msra.mxu0 %v1785
        %2377 = vmatprep.subr.bf16.mxu0 0
        %2378 = vmatpush1.bf16.msra.mxu0 %v1786
        %2379 = vmatprep.subr.bf16.mxu0 0
        %2380 = vmatpush1.bf16.msra.mxu0 %v1787
        %2381 = vmatprep.subr.bf16.mxu0 0
        %2382 = vmatpush1.bf16.msra.mxu0 %v1788
        %2383 = vmatprep.subr.bf16.mxu0 0
        %2384 = vmatpush1.bf16.msra.mxu0 %v1789
        %2385 = vmatprep.mubr.bf16.mxu0 %v1150
        %2386 = vmatmul.mubr.bf16.gmra.mrb[0].mxu0 %v1149
        %v2387 = vpop.f32.mrb[0].mxu0
        %v2388 = vadd.f32 %v2227, %v2387
        %v2389 = vpop.f32.mrb[0].mxu0
        %v2390 = vpop.f32.mrb[0].mxu0
        %v2391 = vadd.f32 %v2230, %v2390
        %v2392 = vpop.f32.mrb[0].mxu0
        %2393 = vmatprep.mubr.bf16.mxu0 %v1159
        %2394 = vmatmul.mubr.bf16.gmra.mrb[0].mxu0 %v1158
        %v2395 = vpop.f32.mrb[0].mxu0
        %v2396 = vadd.f32 %v2235, %v2395
        %v2397 = vpop.f32.mrb[0].mxu0
        %v2398 = vpop.f32.mrb[0].mxu0
        %v2399 = vadd.f32 %v2238, %v2398
        %v2400 = vpop.f32.mrb[0].mxu0
        %2401 = vmatprep.mubr.bf16.mxu0 %v1168
        %2402 = vmatmul.mubr.bf16.gmra.mrb[0].mxu0 %v1167
        %v2403 = vpop.f32.mrb[0].mxu0
        %v2404 = vadd.f32 %v2243, %v2403
        %v2405 = vpop.f32.mrb[0].mxu0
        %v2406 = vpop.f32.mrb[0].mxu0
        %v2407 = vadd.f32 %v2246, %v2406
        %v2408 = vpop.f32.mrb[0].mxu0
        %2409 = vmatprep.mubr.bf16.mxu0 %v1177
        %2410 = vmatmul.mubr.bf16.gmra.mrb[0].mxu0 %v1176
        %v2411 = vpop.f32.mrb[0].mxu0
        %v2412 = vadd.f32 %v2251, %v2411
        %v2413 = vpop.f32.mrb[0].mxu0
        %v2414 = vpop.f32.mrb[0].mxu0
        %v2415 = vadd.f32 %v2254, %v2414
        %v2416 = vpop.f32.mrb[0].mxu0
        %2417 = vmatprep.mubr.bf16.mxu0 %v1186
        %2418 = vmatmul.mubr.bf16.gmra.mrb[0].mxu0 %v1185
        %v2419 = vpop.f32.mrb[0].mxu0
        %v2420 = vadd.f32 %v2259, %v2419
        %v2421 = vpop.f32.mrb[0].mxu0
        %v2422 = vpop.f32.mrb[0].mxu0
        %v2423 = vadd.f32 %v2262, %v2422
        %v2424 = vpop.f32.mrb[0].mxu0
        %2425 = vmatprep.mubr.bf16.mxu0 %v1195
        %2426 = vmatmul.mubr.bf16.gmra.mrb[0].mxu0 %v1194
        %v2427 = vpop.f32.mrb[0].mxu0
        %v2428 = vadd.f32 %v2267, %v2427
        %v2429 = vpop.f32.mrb[0].mxu0
        %v2430 = vpop.f32.mrb[0].mxu0
        %v2431 = vadd.f32 %v2270, %v2430
        %v2432 = vpop.f32.mrb[0].mxu0
        %2433 = vmatprep.mubr.bf16.mxu0 %v1204
        %2434 = vmatmul.mubr.bf16.gmra.mrb[0].mxu0 %v1203
        %v2435 = vpop.f32.mrb[0].mxu0
        %v2436 = vadd.f32 %v2275, %v2435
        %v2437 = vpop.f32.mrb[0].mxu0
        %v2438 = vpop.f32.mrb[0].mxu0
        %v2439 = vadd.f32 %v2278, %v2438
        %v2440 = vpop.f32.mrb[0].mxu0
        %2441 = vmatprep.mubr.bf16.mxu0 %v1213
        %2442 = vmatmul.mubr.bf16.gmra.mrb[0].mxu0 %v1212
        %v2443 = vpop.f32.mrb[0].mxu0
        %v2444 = vadd.f32 %v2283, %v2443
        %v2445 = vpop.f32.mrb[0].mxu0
        %v2446 = vpop.f32.mrb[0].mxu0
        %v2447 = vadd.f32 %v2286, %v2446
        %v2448 = vpop.f32.mrb[0].mxu0
        %2449 = vmatprep.mubr.bf16.mxu0 %v1222
        %2450 = vmatmul.mubr.bf16.gmra.mrb[0].mxu0 %v1221
        %v2451 = vpop.f32.mrb[0].mxu0
        %v2452 = vadd.f32 %v2291, %v2451
        %v2453 = vpop.f32.mrb[0].mxu0
        %v2454 = vpop.f32.mrb[0].mxu0
        %v2455 = vadd.f32 %v2294, %v2454
        %v2456 = vpop.f32.mrb[0].mxu0
        %2457 = vmatprep.mubr.bf16.mxu0 %v1231
        %2458 = vmatmul.mubr.bf16.gmra.mrb[0].mxu0 %v1230
        %v2459 = vpop.f32.mrb[0].mxu0
        %v2460 = vadd.f32 %v2299, %v2459
        %v2461 = vpop.f32.mrb[0].mxu0
        %v2462 = vpop.f32.mrb[0].mxu0
        %v2463 = vadd.f32 %v2302, %v2462
        %v2464 = vpop.f32.mrb[0].mxu0
        %2465 = vmatprep.mubr.bf16.mxu0 %v1240
        %2466 = vmatmul.mubr.bf16.gmra.mrb[0].mxu0 %v1239
        %v2467 = vpop.f32.mrb[0].mxu0
        %v2468 = vadd.f32 %v2307, %v2467
        %v2469 = vpop.f32.mrb[0].mxu0
        %v2470 = vpop.f32.mrb[0].mxu0
        %v2471 = vadd.f32 %v2310, %v2470
        %v2472 = vpop.f32.mrb[0].mxu0
        %2473 = vmatprep.mubr.bf16.mxu0 %v1249
        %2474 = vmatmul.mubr.bf16.gmra.mrb[0].mxu0 %v1248
        %v2475 = vpop.f32.mrb[0].mxu0
        %v2476 = vadd.f32 %v2315, %v2475
        %v2477 = vpop.f32.mrb[0].mxu0
        %v2478 = vpop.f32.mrb[0].mxu0
        %v2479 = vadd.f32 %v2318, %v2478
        %v2480 = vpop.f32.mrb[0].mxu0
        %2481 = vmatprep.mubr.bf16.mxu0 %v1258
        %2482 = vmatmul.mubr.bf16.gmra.mrb[0].mxu0 %v1257
        %v2483 = vpop.f32.mrb[0].mxu0
        %v2484 = vadd.f32 %v2323, %v2483
        %v2485 = vpop.f32.mrb[0].mxu0
        %v2486 = vpop.f32.mrb[0].mxu0
        %v2487 = vadd.f32 %v2326, %v2486
        %v2488 = vpop.f32.mrb[0].mxu0
        %2489 = vmatprep.mubr.bf16.mxu0 %v1267
        %2490 = vmatmul.mubr.bf16.gmra.mrb[0].mxu0 %v1266
        %v2491 = vpop.f32.mrb[0].mxu0
        %v2492 = vadd.f32 %v2331, %v2491
        %v2493 = vpop.f32.mrb[0].mxu0
        %v2494 = vpop.f32.mrb[0].mxu0
        %v2495 = vadd.f32 %v2334, %v2494
        %v2496 = vpop.f32.mrb[0].mxu0
        %2497 = vmatprep.mubr.bf16.mxu0 %v1276
        %2498 = vmatmul.mubr.bf16.gmra.mrb[0].mxu0 %v1275
        %v2499 = vpop.f32.mrb[0].mxu0
        %v2500 = vadd.f32 %v2339, %v2499
        %v2501 = vpop.f32.mrb[0].mxu0
        %v2502 = vpop.f32.mrb[0].mxu0
        %v2503 = vadd.f32 %v2342, %v2502
        %v2504 = vpop.f32.mrb[0].mxu0
        %2505 = vmatprep.mubr.bf16.mxu0 %v1285
        %2506 = vmatmul.mubr.bf16.gmra.mrb[0].mxu0 %v1284
        %v2507 = vpop.f32.mrb[0].mxu0
        %v2508 = vadd.f32 %v2347, %v2507
        %v2509 = vpop.f32.mrb[0].mxu0
        %v2510 = vpop.f32.mrb[0].mxu0
        %v2511 = vadd.f32 %v2350, %v2510
        %v2512 = vpop.f32.mrb[0].mxu0
        %2513 = vdwg.mxu0
        %2514 = vmatprep.subr.bf16.mxu0 0
        %2515 = vmatpush1.bf16.msra.mxu0 %v1790
        %2516 = vmatprep.subr.bf16.mxu0 0
        %2517 = vmatpush1.bf16.msra.mxu0 %v1791
        %2518 = vmatprep.subr.bf16.mxu0 0
        %2519 = vmatpush1.bf16.msra.mxu0 %v1792
        %2520 = vmatprep.subr.bf16.mxu0 0
        %2521 = vmatpush1.bf16.msra.mxu0 %v1793
        %2522 = vmatprep.subr.bf16.mxu0 0
        %2523 = vmatpush1.bf16.msra.mxu0 %v1794
        %2524 = vmatprep.subr.bf16.mxu0 0
        %2525 = vmatpush1.bf16.msra.mxu0 %v1795
        %2526 = vmatprep.subr.bf16.mxu0 0
        %2527 = vmatpush1.bf16.msra.mxu0 %v1796
        %2528 = vmatprep.subr.bf16.mxu0 0
        %2529 = vmatpush1.bf16.msra.mxu0 %v1797
        %2530 = vmatprep.subr.bf16.mxu0 0
        %2531 = vmatpush1.bf16.msra.mxu0 0
        %2532 = vmatprep.subr.bf16.mxu0 0
        %2533 = vmatpush1.bf16.msra.mxu0 0
        %2534 = vmatprep.subr.bf16.mxu0 0
        %2535 = vmatpush1.bf16.msra.mxu0 0
        %2536 = vmatprep.subr.bf16.mxu0 0
        %2537 = vmatpush1.bf16.msra.mxu0 0
        %2538 = vmatprep.subr.bf16.mxu0 0
        %2539 = vmatpush1.bf16.msra.mxu0 0
        %2540 = vmatprep.subr.bf16.mxu0 0
        %2541 = vmatpush1.bf16.msra.mxu0 0
        %2542 = vmatprep.subr.bf16.mxu0 0
        %2543 = vmatpush1.bf16.msra.mxu0 0
        %2544 = vmatprep.subr.bf16.mxu0 0
        %2545 = vmatpush1.bf16.msra.mxu0 0
        %2546 = vmatprep.mubr.bf16.mxu0 0
        %2547 = vmatmul.mubr.bf16.gmra.mrb[0].mxu0 %v1151
        %v2548 = vpop.f32.mrb[0].mxu0
        %v2549 = vadd.f32 %v2388, %v2548
        %v2550 = vpop.f32.mrb[0].mxu0
        %v2551 = vpop.f32.mrb[0].mxu0
        %v2552 = vadd.f32 %v2391, %v2551
        %v2553 = vpop.f32.mrb[0].mxu0
        %2554 = vmatprep.mubr.bf16.mxu0 0
        %2555 = vmatmul.mubr.bf16.gmra.mrb[0].mxu0 %v1160
        %v2556 = vpop.f32.mrb[0].mxu0
        %v2557 = vadd.f32 %v2396, %v2556
        %v2558 = vpop.f32.mrb[0].mxu0
        %v2559 = vpop.f32.mrb[0].mxu0
        %v2560 = vadd.f32 %v2399, %v2559
        %v2561 = vpop.f32.mrb[0].mxu0
        %2562 = vmatprep.mubr.bf16.mxu0 0
        %2563 = vmatmul.mubr.bf16.gmra.mrb[0].mxu0 %v1169
        %v2564 = vpop.f32.mrb[0].mxu0
        %v2565 = vadd.f32 %v2404, %v2564
        %v2566 = vpop.f32.mrb[0].mxu0
        %v2567 = vpop.f32.mrb[0].mxu0
        %v2568 = vadd.f32 %v2407, %v2567
        %v2569 = vpop.f32.mrb[0].mxu0
        %2570 = vmatprep.mubr.bf16.mxu0 0
        %2571 = vmatmul.mubr.bf16.gmra.mrb[0].mxu0 %v1178
        %v2572 = vpop.f32.mrb[0].mxu0
        %v2573 = vadd.f32 %v2412, %v2572
        %v2574 = vpop.f32.mrb[0].mxu0
        %v2575 = vpop.f32.mrb[0].mxu0
        %v2576 = vadd.f32 %v2415, %v2575
        %v2577 = vpop.f32.mrb[0].mxu0
        %2578 = vmatprep.mubr.bf16.mxu0 0
        %2579 = vmatmul.mubr.bf16.gmra.mrb[0].mxu0 %v1187
        %v2580 = vpop.f32.mrb[0].mxu0
        %v2581 = vadd.f32 %v2420, %v2580
        %v2582 = vpop.f32.mrb[0].mxu0
        %v2583 = vpop.f32.mrb[0].mxu0
        %v2584 = vadd.f32 %v2423, %v2583
        %v2585 = vpop.f32.mrb[0].mxu0
        %2586 = vmatprep.mubr.bf16.mxu0 0
        %2587 = vmatmul.mubr.bf16.gmra.mrb[0].mxu0 %v1196
        %v2588 = vpop.f32.mrb[0].mxu0
        %v2589 = vadd.f32 %v2428, %v2588
        %v2590 = vpop.f32.mrb[0].mxu0
        %v2591 = vpop.f32.mrb[0].mxu0
        %v2592 = vadd.f32 %v2431, %v2591
        %v2593 = vpop.f32.mrb[0].mxu0
        %2594 = vmatprep.mubr.bf16.mxu0 0
        %2595 = vmatmul.mubr.bf16.gmra.mrb[0].mxu0 %v1205
        %v2596 = vpop.f32.mrb[0].mxu0
        %v2597 = vadd.f32 %v2436, %v2596
        %v2598 = vpop.f32.mrb[0].mxu0
        %v2599 = vpop.f32.mrb[0].mxu0
        %v2600 = vadd.f32 %v2439, %v2599
        %v2601 = vpop.f32.mrb[0].mxu0
        %2602 = vmatprep.mubr.bf16.mxu0 0
        %2603 = vmatmul.mubr.bf16.gmra.mrb[0].mxu0 %v1214
        %v2604 = vpop.f32.mrb[0].mxu0
        %v2605 = vadd.f32 %v2444, %v2604
        %v2606 = vpop.f32.mrb[0].mxu0
        %v2607 = vpop.f32.mrb[0].mxu0
        %v2608 = vadd.f32 %v2447, %v2607
        %v2609 = vpop.f32.mrb[0].mxu0
        %2610 = vmatprep.mubr.bf16.mxu0 0
        %2611 = vmatmul.mubr.bf16.gmra.mrb[0].mxu0 %v1223
        %v2612 = vpop.f32.mrb[0].mxu0
        %v2613 = vadd.f32 %v2452, %v2612
        %v2614 = vpop.f32.mrb[0].mxu0
        %v2615 = vpop.f32.mrb[0].mxu0
        %v2616 = vadd.f32 %v2455, %v2615
        %v2617 = vpop.f32.mrb[0].mxu0
        %2618 = vmatprep.mubr.bf16.mxu0 0
        %2619 = vmatmul.mubr.bf16.gmra.mrb[0].mxu0 %v1232
        %v2620 = vpop.f32.mrb[0].mxu0
        %v2621 = vadd.f32 %v2460, %v2620
        %v2622 = vpop.f32.mrb[0].mxu0
        %v2623 = vpop.f32.mrb[0].mxu0
        %v2624 = vadd.f32 %v2463, %v2623
        %v2625 = vpop.f32.mrb[0].mxu0
        %2626 = vmatprep.mubr.bf16.mxu0 0
        %2627 = vmatmul.mubr.bf16.gmra.mrb[0].mxu0 %v1241
        %v2628 = vpop.f32.mrb[0].mxu0
        %v2629 = vadd.f32 %v2468, %v2628
        %v2630 = vpop.f32.mrb[0].mxu0
        %v2631 = vpop.f32.mrb[0].mxu0
        %v2632 = vadd.f32 %v2471, %v2631
        %v2633 = vpop.f32.mrb[0].mxu0
        %2634 = vmatprep.mubr.bf16.mxu0 0
        %2635 = vmatmul.mubr.bf16.gmra.mrb[0].mxu0 %v1250
        %v2636 = vpop.f32.mrb[0].mxu0
        %v2637 = vadd.f32 %v2476, %v2636
        %v2638 = vpop.f32.mrb[0].mxu0
        %v2639 = vpop.f32.mrb[0].mxu0
        %v2640 = vadd.f32 %v2479, %v2639
        %v2641 = vpop.f32.mrb[0].mxu0
        %2642 = vmatprep.mubr.bf16.mxu0 0
        %2643 = vmatmul.mubr.bf16.gmra.mrb[0].mxu0 %v1259
        %v2644 = vpop.f32.mrb[0].mxu0
        %v2645 = vadd.f32 %v2484, %v2644
        %v2646 = vpop.f32.mrb[0].mxu0
        %v2647 = vpop.f32.mrb[0].mxu0
        %v2648 = vadd.f32 %v2487, %v2647
        %v2649 = vpop.f32.mrb[0].mxu0
        %2650 = vmatprep.mubr.bf16.mxu0 0
        %2651 = vmatmul.mubr.bf16.gmra.mrb[0].mxu0 %v1268
        %v2652 = vpop.f32.mrb[0].mxu0
        %v2653 = vadd.f32 %v2492, %v2652
        %v2654 = vpop.f32.mrb[0].mxu0
        %v2655 = vpop.f32.mrb[0].mxu0
        %v2656 = vadd.f32 %v2495, %v2655
        %v2657 = vpop.f32.mrb[0].mxu0
        %2658 = vmatprep.mubr.bf16.mxu0 0
        %2659 = vmatmul.mubr.bf16.gmra.mrb[0].mxu0 %v1277
        %v2660 = vpop.f32.mrb[0].mxu0
        %v2661 = vadd.f32 %v2500, %v2660
        %v2662 = vpop.f32.mrb[0].mxu0
        %v2663 = vpop.f32.mrb[0].mxu0
        %v2664 = vadd.f32 %v2503, %v2663
        %v2665 = vpop.f32.mrb[0].mxu0
        %2666 = vmatprep.mubr.bf16.mxu0 0
        %2667 = vmatmul.mubr.bf16.gmra.mrb[0].mxu0 %v1286
        %v2668 = vpop.f32.mrb[0].mxu0
        %v2669 = vadd.f32 %v2508, %v2668
        %v2670 = vpop.f32.mrb[0].mxu0
        %v2671 = vpop.f32.mrb[0].mxu0
        %v2672 = vadd.f32 %v2511, %v2671
        %v2673 = vpop.f32.mrb[0].mxu0
        %2674 = vdwg.mxu0
        %v2675 = vmax.f32 %v2549, 0.0
        %v2676 = vmax.f32 %v2552, 0.0
        %v2677 = vmax.f32 %v2557, 0.0
        %v2678 = vmax.f32 %v2560, 0.0
        %v2679 = vmax.f32 %v2565, 0.0
        %v2680 = vmax.f32 %v2568, 0.0
        %v2681 = vmax.f32 %v2573, 0.0
        %v2682 = vmax.f32 %v2576, 0.0
        %v2683 = vmax.f32 %v2581, 0.0
        %v2684 = vmax.f32 %v2584, 0.0
        %v2685 = vmax.f32 %v2589, 0.0
        %v2686 = vmax.f32 %v2592, 0.0
        %v2687 = vmax.f32 %v2597, 0.0
        %v2688 = vmax.f32 %v2600, 0.0
        %v2689 = vmax.f32 %v2605, 0.0
        %v2690 = vmax.f32 %v2608, 0.0
        %v2691 = vmax.f32 %v2613, 0.0
        %v2692 = vmax.f32 %v2616, 0.0
        %v2693 = vmax.f32 %v2621, 0.0
        %v2694 = vmax.f32 %v2624, 0.0
        %v2695 = vmax.f32 %v2629, 0.0
        %v2696 = vmax.f32 %v2632, 0.0
        %v2697 = vmax.f32 %v2637, 0.0
        %v2698 = vmax.f32 %v2640, 0.0
        %v2699 = vmax.f32 %v2645, 0.0
        %v2700 = vmax.f32 %v2648, 0.0
        %v2701 = vmax.f32 %v2653, 0.0
        %v2702 = vmax.f32 %v2656, 0.0
        %v2703 = vmax.f32 %v2661, 0.0
        %v2704 = vmax.f32 %v2664, 0.0
        %v2705 = vmax.f32 %v2669, 0.0
        %v2706 = vmax.f32 %v2672, 0.0
        %2707 = vst [vmem:[%s469 + $0x8] sm:$0xff] %v2675
        %2708 = vst [vmem:[%s469 + $0x10] sm:$0xff] %v2676
        %2709 = vst [vmem:[%s469 + $0x28] sm:$0xff] %v2677
        %2710 = vst [vmem:[%s469 + $0x30] sm:$0xff] %v2678
        %2711 = vst [vmem:[%s469 + $0x48] sm:$0xff] %v2679
        %2712 = vst [vmem:[%s469 + $0x50] sm:$0xff] %v2680
        %2713 = vst [vmem:[%s469 + $0x68] sm:$0xff] %v2681
        %2714 = vst [vmem:[%s469 + $0x70] sm:$0xff] %v2682
        %2715 = vst [vmem:[%s469 + $0x88] sm:$0xff] %v2683
        %2716 = vst [vmem:[%s469 + $0x90] sm:$0xff] %v2684
        %2717 = vst [vmem:[%s469 + $0xa8] sm:$0xff] %v2685
        %2718 = vst [vmem:[%s469 + $0xb0] sm:$0xff] %v2686
        %2719 = vst [vmem:[%s469 + $0xc8] sm:$0xff] %v2687
        %2720 = vst [vmem:[%s469 + $0xd0] sm:$0xff] %v2688
        %2721 = vst [vmem:[%s469 + $0xe8] sm:$0xff] %v2689
        %2722 = vst [vmem:[%s469 + $0xf0] sm:$0xff] %v2690
        %2723 = vst [vmem:[%s469 + $0x108] sm:$0xff] %v2691
        %2724 = vst [vmem:[%s469 + $0x110] sm:$0xff] %v2692
        %2725 = vst [vmem:[%s469 + $0x128] sm:$0xff] %v2693
        %2726 = vst [vmem:[%s469 + $0x130] sm:$0xff] %v2694
        %2727 = vst [vmem:[%s469 + $0x148] sm:$0xff] %v2695
        %2728 = vst [vmem:[%s469 + $0x150] sm:$0xff] %v2696
        %2729 = vst [vmem:[%s469 + $0x168] sm:$0xff] %v2697
        %2730 = vst [vmem:[%s469 + $0x170] sm:$0xff] %v2698
        %2731 = vst [vmem:[%s469 + $0x188] sm:$0xff] %v2699
        %2732 = vst [vmem:[%s469 + $0x190] sm:$0xff] %v2700
        %2733 = vst [vmem:[%s469 + $0x1a8] sm:$0xff] %v2701
        %2734 = vst [vmem:[%s469 + $0x1b0] sm:$0xff] %v2702
        %2735 = vst [vmem:[%s469 + $0x1c8] sm:$0xff] %v2703
        %2736 = vst [vmem:[%s469 + $0x1d0] sm:$0xff] %v2704
        %2737 = vst [vmem:[%s469 + $0x1e8] sm:$0xff] %v2705
        %2738 = vst [vmem:[%s469 + $0x1f0] sm:$0xff] %v2706
        %v2739 = vld [vmem:[#allocation2 + $0x7] sm:$0xff]
        %v2740 = vld [vmem:[#allocation2 + $0xf] sm:$0xff]
        %v2741 = vld [vmem:[#allocation2 + $0x27] sm:$0xff]
        %v2742 = vld [vmem:[#allocation2 + $0x2f] sm:$0xff]
        %v2743 = vld [vmem:[#allocation2 + $0x47] sm:$0xff]
        %v2744 = vld [vmem:[#allocation2 + $0x4f] sm:$0xff]
        %v2745 = vld [vmem:[#allocation2 + $0x67] sm:$0xff]
        %v2746 = vld [vmem:[#allocation2 + $0x6f] sm:$0xff]
        %v2747 = vld [vmem:[#allocation2 + $0x87] sm:$0xff]
        %v2748 = vld [vmem:[#allocation2 + $0x8f] sm:$0xff]
        %v2749 = vld [vmem:[#allocation2 + $0xa7] sm:$0xff]
        %v2750 = vld [vmem:[#allocation2 + $0xaf] sm:$0xff]
        %v2751 = vld [vmem:[#allocation2 + $0xc7] sm:$0xff]
        %v2752 = vld [vmem:[#allocation2 + $0xcf] sm:$0xff]
        %v2753 = vld [vmem:[#allocation2 + $0xe7] sm:$0xff]
        %v2754 = vld [vmem:[#allocation2 + $0xef] sm:$0xff]
        %v2755 = vld [vmem:[#allocation2 + $0x107] sm:$0xff]
        %v2756 = vld [vmem:[#allocation2 + $0x10f] sm:$0xff]
        %v2757 = vld [vmem:[#allocation2 + $0x127] sm:$0xff]
        %v2758 = vld [vmem:[#allocation2 + $0x12f] sm:$0xff]
        %v2759 = vld [vmem:[#allocation2 + $0x147] sm:$0xff]
        %v2760 = vld [vmem:[#allocation2 + $0x14f] sm:$0xff]
        %v2761 = vld [vmem:[#allocation2 + $0x167] sm:$0xff]
        %v2762 = vld [vmem:[#allocation2 + $0x16f] sm:$0xff]
        %v2763 = vld [vmem:[#allocation2 + $0x187] sm:$0xff]
        %v2764 = vld [vmem:[#allocation2 + $0x18f] sm:$0xff]
        %v2765 = vld [vmem:[#allocation2 + $0x1a7] sm:$0xff]
        %v2766 = vld [vmem:[#allocation2 + $0x1af] sm:$0xff]
        %v2767 = vld [vmem:[#allocation2 + $0x1c7] sm:$0xff]
        %v2768 = vld [vmem:[#allocation2 + $0x1cf] sm:$0xff]
        %v2769 = vld [vmem:[#allocation2 + $0x1e7] sm:$0xff]
        %v2770 = vld [vmem:[#allocation2 + $0x1ef] sm:$0xff]
        %v2771 = vpack.c.bf16 %v2740, %v2739
        %v2772 = vpack.c.bf16 %v2742, %v2741
        %v2773 = vpack.c.bf16 %v2744, %v2743
        %v2774 = vpack.c.bf16 %v2746, %v2745
        %v2775 = vpack.c.bf16 %v2748, %v2747
        %v2776 = vpack.c.bf16 %v2750, %v2749
        %v2777 = vpack.c.bf16 %v2752, %v2751
        %v2778 = vpack.c.bf16 %v2754, %v2753
        %v2779 = vpack.c.bf16 %v2756, %v2755
        %v2780 = vpack.c.bf16 %v2758, %v2757
        %v2781 = vpack.c.bf16 %v2760, %v2759
        %v2782 = vpack.c.bf16 %v2762, %v2761
        %v2783 = vpack.c.bf16 %v2764, %v2763
        %v2784 = vpack.c.bf16 %v2766, %v2765
        %v2785 = vpack.c.bf16 %v2768, %v2767
        %v2786 = vpack.c.bf16 %v2770, %v2769
        %2787 = vst [vmem:[#allocation3] sm:$0xff] %v2771
        %2788 = vst [vmem:[#allocation3 + $0x48] sm:$0xff] %v2772
        %2789 = vst [vmem:[#allocation3 + $0x90] sm:$0xff] %v2773
        %2790 = vst [vmem:[#allocation3 + $0xd8] sm:$0xff] %v2774
        %2791 = vst [vmem:[#allocation3 + $0x120] sm:$0xff] %v2775
        %2792 = vst [vmem:[#allocation3 + $0x168] sm:$0xff] %v2776
        %2793 = vst [vmem:[#allocation3 + $0x1b0] sm:$0xff] %v2777
        %2794 = vst [vmem:[#allocation3 + $0x1f8] sm:$0xff] %v2778
        %2795 = vst [vmem:[#allocation3 + $0x240] sm:$0xff] %v2779
        %2796 = vst [vmem:[#allocation3 + $0x288] sm:$0xff] %v2780
        %2797 = vst [vmem:[#allocation3 + $0x2d0] sm:$0xff] %v2781
        %2798 = vst [vmem:[#allocation3 + $0x318] sm:$0xff] %v2782
        %2799 = vst [vmem:[#allocation3 + $0x360] sm:$0xff] %v2783
        %2800 = vst [vmem:[#allocation3 + $0x3a8] sm:$0xff] %v2784
        %2801 = vst [vmem:[#allocation3 + $0x3f0] sm:$0xff] %v2785
        %2802 = vst [vmem:[#allocation3 + $0x438] sm:$0xff] %v2786
        %v2803 = vld [vmem:[#allocation2 + $0x8] sm:$0xff]
        %v2804 = vld [vmem:[#allocation2 + $0x10] sm:$0xff]
        %v2805 = vld [vmem:[#allocation2 + $0x28] sm:$0xff]
        %v2806 = vld [vmem:[#allocation2 + $0x30] sm:$0xff]
        %v2807 = vld [vmem:[#allocation2 + $0x48] sm:$0xff]
        %v2808 = vld [vmem:[#allocation2 + $0x50] sm:$0xff]
        %v2809 = vld [vmem:[#allocation2 + $0x68] sm:$0xff]
        %v2810 = vld [vmem:[#allocation2 + $0x70] sm:$0xff]
        %v2811 = vld [vmem:[#allocation2 + $0x88] sm:$0xff]
        %v2812 = vld [vmem:[#allocation2 + $0x90] sm:$0xff]
        %v2813 = vld [vmem:[#allocation2 + $0xa8] sm:$0xff]
        %v2814 = vld [vmem:[#allocation2 + $0xb0] sm:$0xff]
        %v2815 = vld [vmem:[#allocation2 + $0xc8] sm:$0xff]
        %v2816 = vld [vmem:[#allocation2 + $0xd0] sm:$0xff]
        %v2817 = vld [vmem:[#allocation2 + $0xe8] sm:$0xff]
        %v2818 = vld [vmem:[#allocation2 + $0xf0] sm:$0xff]
        %v2819 = vld [vmem:[#allocation2 + $0x108] sm:$0xff]
        %v2820 = vld [vmem:[#allocation2 + $0x110] sm:$0xff]
        %v2821 = vld [vmem:[#allocation2 + $0x128] sm:$0xff]
        %v2822 = vld [vmem:[#allocation2 + $0x130] sm:$0xff]
        %v2823 = vld [vmem:[#allocation2 + $0x148] sm:$0xff]
        %v2824 = vld [vmem:[#allocation2 + $0x150] sm:$0xff]
        %v2825 = vld [vmem:[#allocation2 + $0x168] sm:$0xff]
        %v2826 = vld [vmem:[#allocation2 + $0x170] sm:$0xff]
        %v2827 = vld [vmem:[#allocation2 + $0x188] sm:$0xff]
        %v2828 = vld [vmem:[#allocation2 + $0x190] sm:$0xff]
        %v2829 = vld [vmem:[#allocation2 + $0x1a8] sm:$0xff]
        %v2830 = vld [vmem:[#allocation2 + $0x1b0] sm:$0xff]
        %v2831 = vld [vmem:[#allocation2 + $0x1c8] sm:$0xff]
        %v2832 = vld [vmem:[#allocation2 + $0x1d0] sm:$0xff]
        %v2833 = vld [vmem:[#allocation2 + $0x1e8] sm:$0xff]
        %v2834 = vld [vmem:[#allocation2 + $0x1f0] sm:$0xff]
        %v2835 = vpack.c.bf16 %v2804, %v2803
        %v2836 = vpack.c.bf16 %v2806, %v2805
        %v2837 = vpack.c.bf16 %v2808, %v2807
        %v2838 = vpack.c.bf16 %v2810, %v2809
        %v2839 = vpack.c.bf16 %v2812, %v2811
        %v2840 = vpack.c.bf16 %v2814, %v2813
        %v2841 = vpack.c.bf16 %v2816, %v2815
        %v2842 = vpack.c.bf16 %v2818, %v2817
        %v2843 = vpack.c.bf16 %v2820, %v2819
        %v2844 = vpack.c.bf16 %v2822, %v2821
        %v2845 = vpack.c.bf16 %v2824, %v2823
        %v2846 = vpack.c.bf16 %v2826, %v2825
        %v2847 = vpack.c.bf16 %v2828, %v2827
        %v2848 = vpack.c.bf16 %v2830, %v2829
        %v2849 = vpack.c.bf16 %v2832, %v2831
        %v2850 = vpack.c.bf16 %v2834, %v2833
        %2851 = vst [vmem:[#allocation3 + $0x8] sm:$0xff] %v2835
        %2852 = vst [vmem:[#allocation3 + $0x50] sm:$0xff] %v2836
        %2853 = vst [vmem:[#allocation3 + $0x98] sm:$0xff] %v2837
        %2854 = vst [vmem:[#allocation3 + $0xe0] sm:$0xff] %v2838
        %2855 = vst [vmem:[#allocation3 + $0x128] sm:$0xff] %v2839
        %2856 = vst [vmem:[#allocation3 + $0x170] sm:$0xff] %v2840
        %2857 = vst [vmem:[#allocation3 + $0x1b8] sm:$0xff] %v2841
        %2858 = vst [vmem:[#allocation3 + $0x200] sm:$0xff] %v2842
        %2859 = vst [vmem:[#allocation3 + $0x248] sm:$0xff] %v2843
        %2860 = vst [vmem:[#allocation3 + $0x290] sm:$0xff] %v2844
        %2861 = vst [vmem:[#allocation3 + $0x2d8] sm:$0xff] %v2845
        %2862 = vst [vmem:[#allocation3 + $0x320] sm:$0xff] %v2846
        %2863 = vst [vmem:[#allocation3 + $0x368] sm:$0xff] %v2847
        %2864 = vst [vmem:[#allocation3 + $0x3b0] sm:$0xff] %v2848
        %2865 = vst [vmem:[#allocation3 + $0x3f8] sm:$0xff] %v2849
        %2866 = vst [vmem:[#allocation3 + $0x440] sm:$0xff] %v2850
        %v2867 = vld [vmem:[#allocation2 + $0x9] sm:$0xff]
        %v2868 = vld [vmem:[#allocation2 + $0x11] sm:$0xff]
        %v2869 = vld [vmem:[#allocation2 + $0x29] sm:$0xff]
        %v2870 = vld [vmem:[#allocation2 + $0x31] sm:$0xff]
        %v2871 = vld [vmem:[#allocation2 + $0x49] sm:$0xff]
        %v2872 = vld [vmem:[#allocation2 + $0x51] sm:$0xff]
        %v2873 = vld [vmem:[#allocation2 + $0x69] sm:$0xff]
        %v2874 = vld [vmem:[#allocation2 + $0x71] sm:$0xff]
        %v2875 = vld [vmem:[#allocation2 + $0x89] sm:$0xff]
        %v2876 = vld [vmem:[#allocation2 + $0x91] sm:$0xff]
        %v2877 = vld [vmem:[#allocation2 + $0xa9] sm:$0xff]
        %v2878 = vld [vmem:[#allocation2 + $0xb1] sm:$0xff]
        %v2879 = vld [vmem:[#allocation2 + $0xc9] sm:$0xff]
        %v2880 = vld [vmem:[#allocation2 + $0xd1] sm:$0xff]
        %v2881 = vld [vmem:[#allocation2 + $0xe9] sm:$0xff]
        %v2882 = vld [vmem:[#allocation2 + $0xf1] sm:$0xff]
        %v2883 = vld [vmem:[#allocation2 + $0x109] sm:$0xff]
        %v2884 = vld [vmem:[#allocation2 + $0x111] sm:$0xff]
        %v2885 = vld [vmem:[#allocation2 + $0x129] sm:$0xff]
        %v2886 = vld [vmem:[#allocation2 + $0x131] sm:$0xff]
        %v2887 = vld [vmem:[#allocation2 + $0x149] sm:$0xff]
        %v2888 = vld [vmem:[#allocation2 + $0x151] sm:$0xff]
        %v2889 = vld [vmem:[#allocation2 + $0x169] sm:$0xff]
        %v2890 = vld [vmem:[#allocation2 + $0x171] sm:$0xff]
        %v2891 = vld [vmem:[#allocation2 + $0x189] sm:$0xff]
        %v2892 = vld [vmem:[#allocation2 + $0x191] sm:$0xff]
        %v2893 = vld [vmem:[#allocation2 + $0x1a9] sm:$0xff]
        %v2894 = vld [vmem:[#allocation2 + $0x1b1] sm:$0xff]
        %v2895 = vld [vmem:[#allocation2 + $0x1c9] sm:$0xff]
        %v2896 = vld [vmem:[#allocation2 + $0x1d1] sm:$0xff]
        %v2897 = vld [vmem:[#allocation2 + $0x1e9] sm:$0xff]
        %v2898 = vld [vmem:[#allocation2 + $0x1f1] sm:$0xff]
        %v2899 = vpack.c.bf16 %v2868, %v2867
        %v2900 = vpack.c.bf16 %v2870, %v2869
        %v2901 = vpack.c.bf16 %v2872, %v2871
        %v2902 = vpack.c.bf16 %v2874, %v2873
        %v2903 = vpack.c.bf16 %v2876, %v2875
        %v2904 = vpack.c.bf16 %v2878, %v2877
        %v2905 = vpack.c.bf16 %v2880, %v2879
        %v2906 = vpack.c.bf16 %v2882, %v2881
        %v2907 = vpack.c.bf16 %v2884, %v2883
        %v2908 = vpack.c.bf16 %v2886, %v2885
        %v2909 = vpack.c.bf16 %v2888, %v2887
        %v2910 = vpack.c.bf16 %v2890, %v2889
        %v2911 = vpack.c.bf16 %v2892, %v2891
        %v2912 = vpack.c.bf16 %v2894, %v2893
        %v2913 = vpack.c.bf16 %v2896, %v2895
        %v2914 = vpack.c.bf16 %v2898, %v2897
        %2915 = vst [vmem:[#allocation3 + $0x10] sm:$0xff] %v2899
        %2916 = vst [vmem:[#allocation3 + $0x58] sm:$0xff] %v2900
        %2917 = vst [vmem:[#allocation3 + $0xa0] sm:$0xff] %v2901
        %2918 = vst [vmem:[#allocation3 + $0xe8] sm:$0xff] %v2902
        %2919 = vst [vmem:[#allocation3 + $0x130] sm:$0xff] %v2903
        %2920 = vst [vmem:[#allocation3 + $0x178] sm:$0xff] %v2904
        %2921 = vst [vmem:[#allocation3 + $0x1c0] sm:$0xff] %v2905
        %2922 = vst [vmem:[#allocation3 + $0x208] sm:$0xff] %v2906
        %2923 = vst [vmem:[#allocation3 + $0x250] sm:$0xff] %v2907
        %2924 = vst [vmem:[#allocation3 + $0x298] sm:$0xff] %v2908
        %2925 = vst [vmem:[#allocation3 + $0x2e0] sm:$0xff] %v2909
        %2926 = vst [vmem:[#allocation3 + $0x328] sm:$0xff] %v2910
        %2927 = vst [vmem:[#allocation3 + $0x370] sm:$0xff] %v2911
        %2928 = vst [vmem:[#allocation3 + $0x3b8] sm:$0xff] %v2912
        %2929 = vst [vmem:[#allocation3 + $0x400] sm:$0xff] %v2913
        %2930 = vst [vmem:[#allocation3 + $0x448] sm:$0xff] %v2914
        %v2931 = vld [vmem:[%s469 + $0x7] sm:$0xff]
        %v2932 = vld [vmem:[%s469 + $0xf] sm:$0xff]
        %v2933 = vld [vmem:[%s469 + $0x27] sm:$0xff]
        %v2934 = vld [vmem:[%s469 + $0x2f] sm:$0xff]
        %v2935 = vld [vmem:[%s469 + $0x47] sm:$0xff]
        %v2936 = vld [vmem:[%s469 + $0x4f] sm:$0xff]
        %v2937 = vld [vmem:[%s469 + $0x67] sm:$0xff]
        %v2938 = vld [vmem:[%s469 + $0x6f] sm:$0xff]
        %v2939 = vld [vmem:[%s469 + $0x87] sm:$0xff]
        %v2940 = vld [vmem:[%s469 + $0x8f] sm:$0xff]
        %v2941 = vld [vmem:[%s469 + $0xa7] sm:$0xff]
        %v2942 = vld [vmem:[%s469 + $0xaf] sm:$0xff]
        %v2943 = vld [vmem:[%s469 + $0xc7] sm:$0xff]
        %v2944 = vld [vmem:[%s469 + $0xcf] sm:$0xff]
        %v2945 = vld [vmem:[%s469 + $0xe7] sm:$0xff]
        %v2946 = vld [vmem:[%s469 + $0xef] sm:$0xff]
        %v2947 = vld [vmem:[%s469 + $0x107] sm:$0xff]
        %v2948 = vld [vmem:[%s469 + $0x10f] sm:$0xff]
        %v2949 = vld [vmem:[%s469 + $0x127] sm:$0xff]
        %v2950 = vld [vmem:[%s469 + $0x12f] sm:$0xff]
        %v2951 = vld [vmem:[%s469 + $0x147] sm:$0xff]
        %v2952 = vld [vmem:[%s469 + $0x14f] sm:$0xff]
        %v2953 = vld [vmem:[%s469 + $0x167] sm:$0xff]
        %v2954 = vld [vmem:[%s469 + $0x16f] sm:$0xff]
        %v2955 = vld [vmem:[%s469 + $0x187] sm:$0xff]
        %v2956 = vld [vmem:[%s469 + $0x18f] sm:$0xff]
        %v2957 = vld [vmem:[%s469 + $0x1a7] sm:$0xff]
        %v2958 = vld [vmem:[%s469 + $0x1af] sm:$0xff]
        %v2959 = vld [vmem:[%s469 + $0x1c7] sm:$0xff]
        %v2960 = vld [vmem:[%s469 + $0x1cf] sm:$0xff]
        %v2961 = vld [vmem:[%s469 + $0x1e7] sm:$0xff]
        %v2962 = vld [vmem:[%s469 + $0x1ef] sm:$0xff]
        %v2963 = vpack.c.bf16 %v2932, %v2931
        %v2964 = vpack.c.bf16 %v2934, %v2933
        %v2965 = vpack.c.bf16 %v2936, %v2935
        %v2966 = vpack.c.bf16 %v2938, %v2937
        %v2967 = vpack.c.bf16 %v2940, %v2939
        %v2968 = vpack.c.bf16 %v2942, %v2941
        %v2969 = vpack.c.bf16 %v2944, %v2943
        %v2970 = vpack.c.bf16 %v2946, %v2945
        %v2971 = vpack.c.bf16 %v2948, %v2947
        %v2972 = vpack.c.bf16 %v2950, %v2949
        %v2973 = vpack.c.bf16 %v2952, %v2951
        %v2974 = vpack.c.bf16 %v2954, %v2953
        %v2975 = vpack.c.bf16 %v2956, %v2955
        %v2976 = vpack.c.bf16 %v2958, %v2957
        %v2977 = vpack.c.bf16 %v2960, %v2959
        %v2978 = vpack.c.bf16 %v2962, %v2961
        %2979 = vst [vmem:[#allocation3 + $0x18] sm:$0xff] %v2963
        %2980 = vst [vmem:[#allocation3 + $0x60] sm:$0xff] %v2964
        %2981 = vst [vmem:[#allocation3 + $0xa8] sm:$0xff] %v2965
        %2982 = vst [vmem:[#allocation3 + $0xf0] sm:$0xff] %v2966
        %2983 = vst [vmem:[#allocation3 + $0x138] sm:$0xff] %v2967
        %2984 = vst [vmem:[#allocation3 + $0x180] sm:$0xff] %v2968
        %2985 = vst [vmem:[#allocation3 + $0x1c8] sm:$0xff] %v2969
        %2986 = vst [vmem:[#allocation3 + $0x210] sm:$0xff] %v2970
        %2987 = vst [vmem:[#allocation3 + $0x258] sm:$0xff] %v2971
        %2988 = vst [vmem:[#allocation3 + $0x2a0] sm:$0xff] %v2972
        %2989 = vst [vmem:[#allocation3 + $0x2e8] sm:$0xff] %v2973
        %2990 = vst [vmem:[#allocation3 + $0x330] sm:$0xff] %v2974
        %2991 = vst [vmem:[#allocation3 + $0x378] sm:$0xff] %v2975
        %2992 = vst [vmem:[#allocation3 + $0x3c0] sm:$0xff] %v2976
        %2993 = vst [vmem:[#allocation3 + $0x408] sm:$0xff] %v2977
        %2994 = vst [vmem:[#allocation3 + $0x450] sm:$0xff] %v2978
        %v2995 = vld [vmem:[%s469 + $0x8] sm:$0xff]
        %v2996 = vld [vmem:[%s469 + $0x10] sm:$0xff]
        %v2997 = vld [vmem:[%s469 + $0x28] sm:$0xff]
        %v2998 = vld [vmem:[%s469 + $0x30] sm:$0xff]
        %v2999 = vld [vmem:[%s469 + $0x48] sm:$0xff]
        %v3000 = vld [vmem:[%s469 + $0x50] sm:$0xff]
        %v3001 = vld [vmem:[%s469 + $0x68] sm:$0xff]
        %v3002 = vld [vmem:[%s469 + $0x70] sm:$0xff]
        %v3003 = vld [vmem:[%s469 + $0x88] sm:$0xff]
        %v3004 = vld [vmem:[%s469 + $0x90] sm:$0xff]
        %v3005 = vld [vmem:[%s469 + $0xa8] sm:$0xff]
        %v3006 = vld [vmem:[%s469 + $0xb0] sm:$0xff]
        %v3007 = vld [vmem:[%s469 + $0xc8] sm:$0xff]
        %v3008 = vld [vmem:[%s469 + $0xd0] sm:$0xff]
        %v3009 = vld [vmem:[%s469 + $0xe8] sm:$0xff]
        %v3010 = vld [vmem:[%s469 + $0xf0] sm:$0xff]
        %v3011 = vld [vmem:[%s469 + $0x108] sm:$0xff]
        %v3012 = vld [vmem:[%s469 + $0x110] sm:$0xff]
        %v3013 = vld [vmem:[%s469 + $0x128] sm:$0xff]
        %v3014 = vld [vmem:[%s469 + $0x130] sm:$0xff]
        %v3015 = vld [vmem:[%s469 + $0x148] sm:$0xff]
        %v3016 = vld [vmem:[%s469 + $0x150] sm:$0xff]
        %v3017 = vld [vmem:[%s469 + $0x168] sm:$0xff]
        %v3018 = vld [vmem:[%s469 + $0x170] sm:$0xff]
        %v3019 = vld [vmem:[%s469 + $0x188] sm:$0xff]
        %v3020 = vld [vmem:[%s469 + $0x190] sm:$0xff]
        %v3021 = vld [vmem:[%s469 + $0x1a8] sm:$0xff]
        %v3022 = vld [vmem:[%s469 + $0x1b0] sm:$0xff]
        %v3023 = vld [vmem:[%s469 + $0x1c8] sm:$0xff]
        %v3024 = vld [vmem:[%s469 + $0x1d0] sm:$0xff]
        %v3025 = vld [vmem:[%s469 + $0x1e8] sm:$0xff]
        %v3026 = vld [vmem:[%s469 + $0x1f0] sm:$0xff]
        %v3027 = vpack.c.bf16 %v2996, %v2995
        %v3028 = vpack.c.bf16 %v2998, %v2997
        %v3029 = vpack.c.bf16 %v3000, %v2999
        %v3030 = vpack.c.bf16 %v3002, %v3001
        %v3031 = vpack.c.bf16 %v3004, %v3003
        %v3032 = vpack.c.bf16 %v3006, %v3005
        %v3033 = vpack.c.bf16 %v3008, %v3007
        %v3034 = vpack.c.bf16 %v3010, %v3009
        %v3035 = vpack.c.bf16 %v3012, %v3011
        %v3036 = vpack.c.bf16 %v3014, %v3013
        %v3037 = vpack.c.bf16 %v3016, %v3015
        %v3038 = vpack.c.bf16 %v3018, %v3017
        %v3039 = vpack.c.bf16 %v3020, %v3019
        %v3040 = vpack.c.bf16 %v3022, %v3021
        %v3041 = vpack.c.bf16 %v3024, %v3023
        %v3042 = vpack.c.bf16 %v3026, %v3025
        %3043 = vst [vmem:[#allocation3 + $0x20] sm:$0xff] %v3027
        %3044 = vst [vmem:[#allocation3 + $0x68] sm:$0xff] %v3028
        %3045 = vst [vmem:[#allocation3 + $0xb0] sm:$0xff] %v3029
        %3046 = vst [vmem:[#allocation3 + $0xf8] sm:$0xff] %v3030
        %3047 = vst [vmem:[#allocation3 + $0x140] sm:$0xff] %v3031
        %3048 = vst [vmem:[#allocation3 + $0x188] sm:$0xff] %v3032
        %3049 = vst [vmem:[#allocation3 + $0x1d0] sm:$0xff] %v3033
        %3050 = vst [vmem:[#allocation3 + $0x218] sm:$0xff] %v3034
        %3051 = vst [vmem:[#allocation3 + $0x260] sm:$0xff] %v3035
        %3052 = vst [vmem:[#allocation3 + $0x2a8] sm:$0xff] %v3036
        %3053 = vst [vmem:[#allocation3 + $0x2f0] sm:$0xff] %v3037
        %3054 = vst [vmem:[#allocation3 + $0x338] sm:$0xff] %v3038
        %3055 = vst [vmem:[#allocation3 + $0x380] sm:$0xff] %v3039
        %3056 = vst [vmem:[#allocation3 + $0x3c8] sm:$0xff] %v3040
        %3057 = vst [vmem:[#allocation3 + $0x410] sm:$0xff] %v3041
        %3058 = vst [vmem:[#allocation3 + $0x458] sm:$0xff] %v3042
        %v3059 = vld [vmem:[%s469 + $0x9] sm:$0xff]
        %v3060 = vld [vmem:[%s469 + $0x11] sm:$0xff]
        %v3061 = vld [vmem:[%s469 + $0x29] sm:$0xff]
        %v3062 = vld [vmem:[%s469 + $0x31] sm:$0xff]
        %v3063 = vld [vmem:[%s469 + $0x49] sm:$0xff]
        %v3064 = vld [vmem:[%s469 + $0x51] sm:$0xff]
        %v3065 = vld [vmem:[%s469 + $0x69] sm:$0xff]
        %v3066 = vld [vmem:[%s469 + $0x71] sm:$0xff]
        %v3067 = vld [vmem:[%s469 + $0x89] sm:$0xff]
        %v3068 = vld [vmem:[%s469 + $0x91] sm:$0xff]
        %v3069 = vld [vmem:[%s469 + $0xa9] sm:$0xff]
        %v3070 = vld [vmem:[%s469 + $0xb1] sm:$0xff]
        %v3071 = vld [vmem:[%s469 + $0xc9] sm:$0xff]
        %v3072 = vld [vmem:[%s469 + $0xd1] sm:$0xff]
        %v3073 = vld [vmem:[%s469 + $0xe9] sm:$0xff]
        %v3074 = vld [vmem:[%s469 + $0xf1] sm:$0xff]
        %v3075 = vld [vmem:[%s469 + $0x109] sm:$0xff]
        %v3076 = vld [vmem:[%s469 + $0x111] sm:$0xff]
        %v3077 = vld [vmem:[%s469 + $0x129] sm:$0xff]
        %v3078 = vld [vmem:[%s469 + $0x131] sm:$0xff]
        %v3079 = vld [vmem:[%s469 + $0x149] sm:$0xff]
        %v3080 = vld [vmem:[%s469 + $0x151] sm:$0xff]
        %v3081 = vld [vmem:[%s469 + $0x169] sm:$0xff]
        %v3082 = vld [vmem:[%s469 + $0x171] sm:$0xff]
        %v3083 = vld [vmem:[%s469 + $0x189] sm:$0xff]
        %v3084 = vld [vmem:[%s469 + $0x191] sm:$0xff]
        %v3085 = vld [vmem:[%s469 + $0x1a9] sm:$0xff]
        %v3086 = vld [vmem:[%s469 + $0x1b1] sm:$0xff]
        %v3087 = vld [vmem:[%s469 + $0x1c9] sm:$0xff]
        %v3088 = vld [vmem:[%s469 + $0x1d1] sm:$0xff]
        %v3089 = vld [vmem:[%s469 + $0x1e9] sm:$0xff]
        %v3090 = vld [vmem:[%s469 + $0x1f1] sm:$0xff]
        %v3091 = vpack.c.bf16 %v3060, %v3059
        %v3092 = vpack.c.bf16 %v3062, %v3061
        %v3093 = vpack.c.bf16 %v3064, %v3063
        %v3094 = vpack.c.bf16 %v3066, %v3065
        %v3095 = vpack.c.bf16 %v3068, %v3067
        %v3096 = vpack.c.bf16 %v3070, %v3069
        %v3097 = vpack.c.bf16 %v3072, %v3071
        %v3098 = vpack.c.bf16 %v3074, %v3073
        %v3099 = vpack.c.bf16 %v3076, %v3075
        %v3100 = vpack.c.bf16 %v3078, %v3077
        %v3101 = vpack.c.bf16 %v3080, %v3079
        %v3102 = vpack.c.bf16 %v3082, %v3081
        %v3103 = vpack.c.bf16 %v3084, %v3083
        %v3104 = vpack.c.bf16 %v3086, %v3085
        %v3105 = vpack.c.bf16 %v3088, %v3087
        %v3106 = vpack.c.bf16 %v3090, %v3089
        %3107 = vst [vmem:[#allocation3 + $0x28] sm:$0xff] %v3091
        %3108 = vst [vmem:[#allocation3 + $0x70] sm:$0xff] %v3092
        %3109 = vst [vmem:[#allocation3 + $0xb8] sm:$0xff] %v3093
        %3110 = vst [vmem:[#allocation3 + $0x100] sm:$0xff] %v3094
        %3111 = vst [vmem:[#allocation3 + $0x148] sm:$0xff] %v3095
        %3112 = vst [vmem:[#allocation3 + $0x190] sm:$0xff] %v3096
        %3113 = vst [vmem:[#allocation3 + $0x1d8] sm:$0xff] %v3097
        %3114 = vst [vmem:[#allocation3 + $0x220] sm:$0xff] %v3098
        %3115 = vst [vmem:[#allocation3 + $0x268] sm:$0xff] %v3099
        %3116 = vst [vmem:[#allocation3 + $0x2b0] sm:$0xff] %v3100
        %3117 = vst [vmem:[#allocation3 + $0x2f8] sm:$0xff] %v3101
        %3118 = vst [vmem:[#allocation3 + $0x340] sm:$0xff] %v3102
        %3119 = vst [vmem:[#allocation3 + $0x388] sm:$0xff] %v3103
        %3120 = vst [vmem:[#allocation3 + $0x3d0] sm:$0xff] %v3104
        %3121 = vst [vmem:[#allocation3 + $0x418] sm:$0xff] %v3105
        %3122 = vst [vmem:[#allocation3 + $0x460] sm:$0xff] %v3106
        %v3123 = vld [vmem:[%s950 + $0x7] sm:$0xff]
        %v3124 = vld [vmem:[%s950 + $0xf] sm:$0xff]
        %v3125 = vld [vmem:[%s950 + $0x27] sm:$0xff]
        %v3126 = vld [vmem:[%s950 + $0x2f] sm:$0xff]
        %v3127 = vld [vmem:[%s950 + $0x47] sm:$0xff]
        %v3128 = vld [vmem:[%s950 + $0x4f] sm:$0xff]
        %v3129 = vld [vmem:[%s950 + $0x67] sm:$0xff]
        %v3130 = vld [vmem:[%s950 + $0x6f] sm:$0xff]
        %v3131 = vld [vmem:[%s950 + $0x87] sm:$0xff]
        %v3132 = vld [vmem:[%s950 + $0x8f] sm:$0xff]
        %v3133 = vld [vmem:[%s950 + $0xa7] sm:$0xff]
        %v3134 = vld [vmem:[%s950 + $0xaf] sm:$0xff]
        %v3135 = vld [vmem:[%s950 + $0xc7] sm:$0xff]
        %v3136 = vld [vmem:[%s950 + $0xcf] sm:$0xff]
        %v3137 = vld [vmem:[%s950 + $0xe7] sm:$0xff]
        %v3138 = vld [vmem:[%s950 + $0xef] sm:$0xff]
        %v3139 = vld [vmem:[%s950 + $0x107] sm:$0xff]
        %v3140 = vld [vmem:[%s950 + $0x10f] sm:$0xff]
        %v3141 = vld [vmem:[%s950 + $0x127] sm:$0xff]
        %v3142 = vld [vmem:[%s950 + $0x12f] sm:$0xff]
        %v3143 = vld [vmem:[%s950 + $0x147] sm:$0xff]
        %v3144 = vld [vmem:[%s950 + $0x14f] sm:$0xff]
        %v3145 = vld [vmem:[%s950 + $0x167] sm:$0xff]
        %v3146 = vld [vmem:[%s950 + $0x16f] sm:$0xff]
        %v3147 = vld [vmem:[%s950 + $0x187] sm:$0xff]
        %v3148 = vld [vmem:[%s950 + $0x18f] sm:$0xff]
        %v3149 = vld [vmem:[%s950 + $0x1a7] sm:$0xff]
        %v3150 = vld [vmem:[%s950 + $0x1af] sm:$0xff]
        %v3151 = vld [vmem:[%s950 + $0x1c7] sm:$0xff]
        %v3152 = vld [vmem:[%s950 + $0x1cf] sm:$0xff]
        %v3153 = vld [vmem:[%s950 + $0x1e7] sm:$0xff]
        %v3154 = vld [vmem:[%s950 + $0x1ef] sm:$0xff]
        %v3155 = vpack.c.bf16 %v3124, %v3123
        %v3156 = vpack.c.bf16 %v3126, %v3125
        %v3157 = vpack.c.bf16 %v3128, %v3127
        %v3158 = vpack.c.bf16 %v3130, %v3129
        %v3159 = vpack.c.bf16 %v3132, %v3131
        %v3160 = vpack.c.bf16 %v3134, %v3133
        %v3161 = vpack.c.bf16 %v3136, %v3135
        %v3162 = vpack.c.bf16 %v3138, %v3137
        %v3163 = vpack.c.bf16 %v3140, %v3139
        %v3164 = vpack.c.bf16 %v3142, %v3141
        %v3165 = vpack.c.bf16 %v3144, %v3143
        %v3166 = vpack.c.bf16 %v3146, %v3145
        %v3167 = vpack.c.bf16 %v3148, %v3147
        %v3168 = vpack.c.bf16 %v3150, %v3149
        %v3169 = vpack.c.bf16 %v3152, %v3151
        %v3170 = vpack.c.bf16 %v3154, %v3153
        %3171 = vst [vmem:[#allocation3 + $0x30] sm:$0xff] %v3155
        %3172 = vst [vmem:[#allocation3 + $0x78] sm:$0xff] %v3156
        %3173 = vst [vmem:[#allocation3 + $0xc0] sm:$0xff] %v3157
        %3174 = vst [vmem:[#allocation3 + $0x108] sm:$0xff] %v3158
        %3175 = vst [vmem:[#allocation3 + $0x150] sm:$0xff] %v3159
        %3176 = vst [vmem:[#allocation3 + $0x198] sm:$0xff] %v3160
        %3177 = vst [vmem:[#allocation3 + $0x1e0] sm:$0xff] %v3161
        %3178 = vst [vmem:[#allocation3 + $0x228] sm:$0xff] %v3162
        %3179 = vst [vmem:[#allocation3 + $0x270] sm:$0xff] %v3163
        %3180 = vst [vmem:[#allocation3 + $0x2b8] sm:$0xff] %v3164
        %3181 = vst [vmem:[#allocation3 + $0x300] sm:$0xff] %v3165
        %3182 = vst [vmem:[#allocation3 + $0x348] sm:$0xff] %v3166
        %3183 = vst [vmem:[#allocation3 + $0x390] sm:$0xff] %v3167
        %3184 = vst [vmem:[#allocation3 + $0x3d8] sm:$0xff] %v3168
        %3185 = vst [vmem:[#allocation3 + $0x420] sm:$0xff] %v3169
        %3186 = vst [vmem:[#allocation3 + $0x468] sm:$0xff] %v3170
        %v3187 = vld [vmem:[%s950 + $0x8] sm:$0xff]
        %v3188 = vld [vmem:[%s950 + $0x10] sm:$0xff]
        %v3189 = vld [vmem:[%s950 + $0x28] sm:$0xff]
        %v3190 = vld [vmem:[%s950 + $0x30] sm:$0xff]
        %v3191 = vld [vmem:[%s950 + $0x48] sm:$0xff]
        %v3192 = vld [vmem:[%s950 + $0x50] sm:$0xff]
        %v3193 = vld [vmem:[%s950 + $0x68] sm:$0xff]
        %v3194 = vld [vmem:[%s950 + $0x70] sm:$0xff]
        %v3195 = vld [vmem:[%s950 + $0x88] sm:$0xff]
        %v3196 = vld [vmem:[%s950 + $0x90] sm:$0xff]
        %v3197 = vld [vmem:[%s950 + $0xa8] sm:$0xff]
        %v3198 = vld [vmem:[%s950 + $0xb0] sm:$0xff]
        %v3199 = vld [vmem:[%s950 + $0xc8] sm:$0xff]
        %v3200 = vld [vmem:[%s950 + $0xd0] sm:$0xff]
        %v3201 = vld [vmem:[%s950 + $0xe8] sm:$0xff]
        %v3202 = vld [vmem:[%s950 + $0xf0] sm:$0xff]
        %v3203 = vld [vmem:[%s950 + $0x108] sm:$0xff]
        %v3204 = vld [vmem:[%s950 + $0x110] sm:$0xff]
        %v3205 = vld [vmem:[%s950 + $0x128] sm:$0xff]
        %v3206 = vld [vmem:[%s950 + $0x130] sm:$0xff]
        %v3207 = vld [vmem:[%s950 + $0x148] sm:$0xff]
        %v3208 = vld [vmem:[%s950 + $0x150] sm:$0xff]
        %v3209 = vld [vmem:[%s950 + $0x168] sm:$0xff]
        %v3210 = vld [vmem:[%s950 + $0x170] sm:$0xff]
        %v3211 = vld [vmem:[%s950 + $0x188] sm:$0xff]
        %v3212 = vld [vmem:[%s950 + $0x190] sm:$0xff]
        %v3213 = vld [vmem:[%s950 + $0x1a8] sm:$0xff]
        %v3214 = vld [vmem:[%s950 + $0x1b0] sm:$0xff]
        %v3215 = vld [vmem:[%s950 + $0x1c8] sm:$0xff]
        %v3216 = vld [vmem:[%s950 + $0x1d0] sm:$0xff]
        %v3217 = vld [vmem:[%s950 + $0x1e8] sm:$0xff]
        %v3218 = vld [vmem:[%s950 + $0x1f0] sm:$0xff]
        %v3219 = vpack.c.bf16 %v3188, %v3187
        %v3220 = vpack.c.bf16 %v3190, %v3189
        %v3221 = vpack.c.bf16 %v3192, %v3191
        %v3222 = vpack.c.bf16 %v3194, %v3193
        %v3223 = vpack.c.bf16 %v3196, %v3195
        %v3224 = vpack.c.bf16 %v3198, %v3197
        %v3225 = vpack.c.bf16 %v3200, %v3199
        %v3226 = vpack.c.bf16 %v3202, %v3201
        %v3227 = vpack.c.bf16 %v3204, %v3203
        %v3228 = vpack.c.bf16 %v3206, %v3205
        %v3229 = vpack.c.bf16 %v3208, %v3207
        %v3230 = vpack.c.bf16 %v3210, %v3209
        %v3231 = vpack.c.bf16 %v3212, %v3211
        %v3232 = vpack.c.bf16 %v3214, %v3213
        %v3233 = vpack.c.bf16 %v3216, %v3215
        %v3234 = vpack.c.bf16 %v3218, %v3217
        %3235 = vst [vmem:[#allocation3 + $0x38] sm:$0xff] %v3219
        %3236 = vst [vmem:[#allocation3 + $0x80] sm:$0xff] %v3220
        %3237 = vst [vmem:[#allocation3 + $0xc8] sm:$0xff] %v3221
        %3238 = vst [vmem:[#allocation3 + $0x110] sm:$0xff] %v3222
        %3239 = vst [vmem:[#allocation3 + $0x158] sm:$0xff] %v3223
        %3240 = vst [vmem:[#allocation3 + $0x1a0] sm:$0xff] %v3224
        %3241 = vst [vmem:[#allocation3 + $0x1e8] sm:$0xff] %v3225
        %3242 = vst [vmem:[#allocation3 + $0x230] sm:$0xff] %v3226
        %3243 = vst [vmem:[#allocation3 + $0x278] sm:$0xff] %v3227
        %3244 = vst [vmem:[#allocation3 + $0x2c0] sm:$0xff] %v3228
        %3245 = vst [vmem:[#allocation3 + $0x308] sm:$0xff] %v3229
        %3246 = vst [vmem:[#allocation3 + $0x350] sm:$0xff] %v3230
        %3247 = vst [vmem:[#allocation3 + $0x398] sm:$0xff] %v3231
        %3248 = vst [vmem:[#allocation3 + $0x3e0] sm:$0xff] %v3232
        %3249 = vst [vmem:[#allocation3 + $0x428] sm:$0xff] %v3233
        %3250 = vst [vmem:[#allocation3 + $0x470] sm:$0xff] %v3234
        %v3251 = vld [vmem:[%s950 + $0x9] sm:$0xff]
        %v3252 = vld [vmem:[%s950 + $0x11] sm:$0xff]
        %v3253 = vld [vmem:[%s950 + $0x29] sm:$0xff]
        %v3254 = vld [vmem:[%s950 + $0x31] sm:$0xff]
        %v3255 = vld [vmem:[%s950 + $0x49] sm:$0xff]
        %v3256 = vld [vmem:[%s950 + $0x51] sm:$0xff]
        %v3257 = vld [vmem:[%s950 + $0x69] sm:$0xff]
        %v3258 = vld [vmem:[%s950 + $0x71] sm:$0xff]
        %v3259 = vld [vmem:[%s950 + $0x89] sm:$0xff]
        %v3260 = vld [vmem:[%s950 + $0x91] sm:$0xff]
        %v3261 = vld [vmem:[%s950 + $0xa9] sm:$0xff]
        %v3262 = vld [vmem:[%s950 + $0xb1] sm:$0xff]
        %v3263 = vld [vmem:[%s950 + $0xc9] sm:$0xff]
        %v3264 = vld [vmem:[%s950 + $0xd1] sm:$0xff]
        %v3265 = vld [vmem:[%s950 + $0xe9] sm:$0xff]
        %v3266 = vld [vmem:[%s950 + $0xf1] sm:$0xff]
        %v3267 = vld [vmem:[%s950 + $0x109] sm:$0xff]
        %v3268 = vld [vmem:[%s950 + $0x111] sm:$0xff]
        %v3269 = vld [vmem:[%s950 + $0x129] sm:$0xff]
        %v3270 = vld [vmem:[%s950 + $0x131] sm:$0xff]
        %v3271 = vld [vmem:[%s950 + $0x149] sm:$0xff]
        %v3272 = vld [vmem:[%s950 + $0x151] sm:$0xff]
        %v3273 = vld [vmem:[%s950 + $0x169] sm:$0xff]
        %v3274 = vld [vmem:[%s950 + $0x171] sm:$0xff]
        %v3275 = vld [vmem:[%s950 + $0x189] sm:$0xff]
        %v3276 = vld [vmem:[%s950 + $0x191] sm:$0xff]
        %v3277 = vld [vmem:[%s950 + $0x1a9] sm:$0xff]
        %v3278 = vld [vmem:[%s950 + $0x1b1] sm:$0xff]
        %v3279 = vld [vmem:[%s950 + $0x1c9] sm:$0xff]
        %v3280 = vld [vmem:[%s950 + $0x1d1] sm:$0xff]
        %v3281 = vld [vmem:[%s950 + $0x1e9] sm:$0xff]
        %v3282 = vld [vmem:[%s950 + $0x1f1] sm:$0xff]
        %v3283 = vpack.c.bf16 %v3252, %v3251
        %v3284 = vpack.c.bf16 %v3254, %v3253
        %v3285 = vpack.c.bf16 %v3256, %v3255
        %v3286 = vpack.c.bf16 %v3258, %v3257
        %v3287 = vpack.c.bf16 %v3260, %v3259
        %v3288 = vpack.c.bf16 %v3262, %v3261
        %v3289 = vpack.c.bf16 %v3264, %v3263
        %v3290 = vpack.c.bf16 %v3266, %v3265
        %v3291 = vpack.c.bf16 %v3268, %v3267
        %v3292 = vpack.c.bf16 %v3270, %v3269
        %v3293 = vpack.c.bf16 %v3272, %v3271
        %v3294 = vpack.c.bf16 %v3274, %v3273
        %v3295 = vpack.c.bf16 %v3276, %v3275
        %v3296 = vpack.c.bf16 %v3278, %v3277
        %v3297 = vpack.c.bf16 %v3280, %v3279
        %v3298 = vpack.c.bf16 %v3282, %v3281
        %3299 = vst [vmem:[#allocation3 + $0x40] sm:$0xff] %v3283
        %3300 = vst [vmem:[#allocation3 + $0x88] sm:$0xff] %v3284
        %3301 = vst [vmem:[#allocation3 + $0xd0] sm:$0xff] %v3285
        %3302 = vst [vmem:[#allocation3 + $0x118] sm:$0xff] %v3286
        %3303 = vst [vmem:[#allocation3 + $0x160] sm:$0xff] %v3287
        %3304 = vst [vmem:[#allocation3 + $0x1a8] sm:$0xff] %v3288
        %3305 = vst [vmem:[#allocation3 + $0x1f0] sm:$0xff] %v3289
        %3306 = vst [vmem:[#allocation3 + $0x238] sm:$0xff] %v3290
        %3307 = vst [vmem:[#allocation3 + $0x280] sm:$0xff] %v3291
        %3308 = vst [vmem:[#allocation3 + $0x2c8] sm:$0xff] %v3292
        %3309 = vst [vmem:[#allocation3 + $0x310] sm:$0xff] %v3293
        %3310 = vst [vmem:[#allocation3 + $0x358] sm:$0xff] %v3294
        %3311 = vst [vmem:[#allocation3 + $0x3a0] sm:$0xff] %v3295
        %3312 = vst [vmem:[#allocation3 + $0x3e8] sm:$0xff] %v3296
        %3313 = vst [vmem:[#allocation3 + $0x430] sm:$0xff] %v3297
        %3314 = vst [vmem:[#allocation3 + $0x478] sm:$0xff] %v3298
        %v3315 = vld [vmem:[#allocation3] sm:$0xff]
        %v3316 = vld [vmem:[#allocation3 + $0x8] sm:$0xff]
        %v3317 = vld [vmem:[#allocation3 + $0x10] sm:$0xff]
        %v3318 = vld [vmem:[#allocation3 + $0x18] sm:$0xff]
        %v3319 = vld [vmem:[#allocation3 + $0x20] sm:$0xff]
        %v3320 = vld [vmem:[#allocation3 + $0x28] sm:$0xff]
        %v3321 = vld [vmem:[#allocation3 + $0x30] sm:$0xff]
        %v3322 = vld [vmem:[#allocation3 + $0x38] sm:$0xff]
        %v3323 = vld [vmem:[#allocation3 + $0x40] sm:$0xff]
        %v3324 = vld [vmem:[#allocation3 + $0x48] sm:$0xff]
        %v3325 = vld [vmem:[#allocation3 + $0x50] sm:$0xff]
        %v3326 = vld [vmem:[#allocation3 + $0x58] sm:$0xff]
        %v3327 = vld [vmem:[#allocation3 + $0x60] sm:$0xff]
        %v3328 = vld [vmem:[#allocation3 + $0x68] sm:$0xff]
        %v3329 = vld [vmem:[#allocation3 + $0x70] sm:$0xff]
        %v3330 = vld [vmem:[#allocation3 + $0x78] sm:$0xff]
        %v3331 = vld [vmem:[#allocation3 + $0x80] sm:$0xff]
        %v3332 = vld [vmem:[#allocation3 + $0x88] sm:$0xff]
        %v3333 = vld [vmem:[#allocation3 + $0x90] sm:$0xff]
        %v3334 = vld [vmem:[#allocation3 + $0x98] sm:$0xff]
        %v3335 = vld [vmem:[#allocation3 + $0xa0] sm:$0xff]
        %v3336 = vld [vmem:[#allocation3 + $0xa8] sm:$0xff]
        %v3337 = vld [vmem:[#allocation3 + $0xb0] sm:$0xff]
        %v3338 = vld [vmem:[#allocation3 + $0xb8] sm:$0xff]
        %v3339 = vld [vmem:[#allocation3 + $0xc0] sm:$0xff]
        %v3340 = vld [vmem:[#allocation3 + $0xc8] sm:$0xff]
        %v3341 = vld [vmem:[#allocation3 + $0xd0] sm:$0xff]
        %v3342 = vld [vmem:[#allocation3 + $0xd8] sm:$0xff]
        %v3343 = vld [vmem:[#allocation3 + $0xe0] sm:$0xff]
        %v3344 = vld [vmem:[#allocation3 + $0xe8] sm:$0xff]
        %v3345 = vld [vmem:[#allocation3 + $0xf0] sm:$0xff]
        %v3346 = vld [vmem:[#allocation3 + $0xf8] sm:$0xff]
        %v3347 = vld [vmem:[#allocation3 + $0x100] sm:$0xff]
        %v3348 = vld [vmem:[#allocation3 + $0x108] sm:$0xff]
        %v3349 = vld [vmem:[#allocation3 + $0x110] sm:$0xff]
        %v3350 = vld [vmem:[#allocation3 + $0x118] sm:$0xff]
        %v3351 = vld [vmem:[#allocation3 + $0x120] sm:$0xff]
        %v3352 = vld [vmem:[#allocation3 + $0x128] sm:$0xff]
        %v3353 = vld [vmem:[#allocation3 + $0x130] sm:$0xff]
        %v3354 = vld [vmem:[#allocation3 + $0x138] sm:$0xff]
        %v3355 = vld [vmem:[#allocation3 + $0x140] sm:$0xff]
        %v3356 = vld [vmem:[#allocation3 + $0x148] sm:$0xff]
        %v3357 = vld [vmem:[#allocation3 + $0x150] sm:$0xff]
        %v3358 = vld [vmem:[#allocation3 + $0x158] sm:$0xff]
        %v3359 = vld [vmem:[#allocation3 + $0x160] sm:$0xff]
        %v3360 = vld [vmem:[#allocation3 + $0x168] sm:$0xff]
        %v3361 = vld [vmem:[#allocation3 + $0x170] sm:$0xff]
        %v3362 = vld [vmem:[#allocation3 + $0x178] sm:$0xff]
        %v3363 = vld [vmem:[#allocation3 + $0x180] sm:$0xff]
        %v3364 = vld [vmem:[#allocation3 + $0x188] sm:$0xff]
        %v3365 = vld [vmem:[#allocation3 + $0x190] sm:$0xff]
        %v3366 = vld [vmem:[#allocation3 + $0x198] sm:$0xff]
        %v3367 = vld [vmem:[#allocation3 + $0x1a0] sm:$0xff]
        %v3368 = vld [vmem:[#allocation3 + $0x1a8] sm:$0xff]
        %v3369 = vld [vmem:[#allocation3 + $0x1b0] sm:$0xff]
        %v3370 = vld [vmem:[#allocation3 + $0x1b8] sm:$0xff]
        %v3371 = vld [vmem:[#allocation3 + $0x1c0] sm:$0xff]
        %v3372 = vld [vmem:[#allocation3 + $0x1c8] sm:$0xff]
        %v3373 = vld [vmem:[#allocation3 + $0x1d0] sm:$0xff]
        %v3374 = vld [vmem:[#allocation3 + $0x1d8] sm:$0xff]
        %v3375 = vld [vmem:[#allocation3 + $0x1e0] sm:$0xff]
        %v3376 = vld [vmem:[#allocation3 + $0x1e8] sm:$0xff]
        %v3377 = vld [vmem:[#allocation3 + $0x1f0] sm:$0xff]
        %v3378 = vld [vmem:[#allocation3 + $0x1f8] sm:$0xff]
        %v3379 = vld [vmem:[#allocation3 + $0x200] sm:$0xff]
        %v3380 = vld [vmem:[#allocation3 + $0x208] sm:$0xff]
        %v3381 = vld [vmem:[#allocation3 + $0x210] sm:$0xff]
        %v3382 = vld [vmem:[#allocation3 + $0x218] sm:$0xff]
        %v3383 = vld [vmem:[#allocation3 + $0x220] sm:$0xff]
        %v3384 = vld [vmem:[#allocation3 + $0x228] sm:$0xff]
        %v3385 = vld [vmem:[#allocation3 + $0x230] sm:$0xff]
        %v3386 = vld [vmem:[#allocation3 + $0x238] sm:$0xff]
        %v3387 = vld [vmem:[#allocation3 + $0x240] sm:$0xff]
        %v3388 = vld [vmem:[#allocation3 + $0x248] sm:$0xff]
        %v3389 = vld [vmem:[#allocation3 + $0x250] sm:$0xff]
        %v3390 = vld [vmem:[#allocation3 + $0x258] sm:$0xff]
        %v3391 = vld [vmem:[#allocation3 + $0x260] sm:$0xff]
        %v3392 = vld [vmem:[#allocation3 + $0x268] sm:$0xff]
        %v3393 = vld [vmem:[#allocation3 + $0x270] sm:$0xff]
        %v3394 = vld [vmem:[#allocation3 + $0x278] sm:$0xff]
        %v3395 = vld [vmem:[#allocation3 + $0x280] sm:$0xff]
        %v3396 = vld [vmem:[#allocation3 + $0x288] sm:$0xff]
        %v3397 = vld [vmem:[#allocation3 + $0x290] sm:$0xff]
        %v3398 = vld [vmem:[#allocation3 + $0x298] sm:$0xff]
        %v3399 = vld [vmem:[#allocation3 + $0x2a0] sm:$0xff]
        %v3400 = vld [vmem:[#allocation3 + $0x2a8] sm:$0xff]
        %v3401 = vld [vmem:[#allocation3 + $0x2b0] sm:$0xff]
        %v3402 = vld [vmem:[#allocation3 + $0x2b8] sm:$0xff]
        %v3403 = vld [vmem:[#allocation3 + $0x2c0] sm:$0xff]
        %v3404 = vld [vmem:[#allocation3 + $0x2c8] sm:$0xff]
        %v3405 = vld [vmem:[#allocation3 + $0x2d0] sm:$0xff]
        %v3406 = vld [vmem:[#allocation3 + $0x2d8] sm:$0xff]
        %v3407 = vld [vmem:[#allocation3 + $0x2e0] sm:$0xff]
        %v3408 = vld [vmem:[#allocation3 + $0x2e8] sm:$0xff]
        %v3409 = vld [vmem:[#allocation3 + $0x2f0] sm:$0xff]
        %v3410 = vld [vmem:[#allocation3 + $0x2f8] sm:$0xff]
        %v3411 = vld [vmem:[#allocation3 + $0x300] sm:$0xff]
        %v3412 = vld [vmem:[#allocation3 + $0x308] sm:$0xff]
        %v3413 = vld [vmem:[#allocation3 + $0x310] sm:$0xff]
        %v3414 = vld [vmem:[#allocation3 + $0x318] sm:$0xff]
        %v3415 = vld [vmem:[#allocation3 + $0x320] sm:$0xff]
        %v3416 = vld [vmem:[#allocation3 + $0x328] sm:$0xff]
        %v3417 = vld [vmem:[#allocation3 + $0x330] sm:$0xff]
        %v3418 = vld [vmem:[#allocation3 + $0x338] sm:$0xff]
        %v3419 = vld [vmem:[#allocation3 + $0x340] sm:$0xff]
        %v3420 = vld [vmem:[#allocation3 + $0x348] sm:$0xff]
        %v3421 = vld [vmem:[#allocation3 + $0x350] sm:$0xff]
        %v3422 = vld [vmem:[#allocation3 + $0x358] sm:$0xff]
        %v3423 = vld [vmem:[#allocation3 + $0x360] sm:$0xff]
        %v3424 = vld [vmem:[#allocation3 + $0x368] sm:$0xff]
        %v3425 = vld [vmem:[#allocation3 + $0x370] sm:$0xff]
        %v3426 = vld [vmem:[#allocation3 + $0x378] sm:$0xff]
        %v3427 = vld [vmem:[#allocation3 + $0x380] sm:$0xff]
        %v3428 = vld [vmem:[#allocation3 + $0x388] sm:$0xff]
        %v3429 = vld [vmem:[#allocation3 + $0x390] sm:$0xff]
        %v3430 = vld [vmem:[#allocation3 + $0x398] sm:$0xff]
        %v3431 = vld [vmem:[#allocation3 + $0x3a0] sm:$0xff]
        %v3432 = vld [vmem:[#allocation3 + $0x3a8] sm:$0xff]
        %v3433 = vld [vmem:[#allocation3 + $0x3b0] sm:$0xff]
        %v3434 = vld [vmem:[#allocation3 + $0x3b8] sm:$0xff]
        %v3435 = vld [vmem:[#allocation3 + $0x3c0] sm:$0xff]
        %v3436 = vld [vmem:[#allocation3 + $0x3c8] sm:$0xff]
        %v3437 = vld [vmem:[#allocation3 + $0x3d0] sm:$0xff]
        %v3438 = vld [vmem:[#allocation3 + $0x3d8] sm:$0xff]
        %v3439 = vld [vmem:[#allocation3 + $0x3e0] sm:$0xff]
        %v3440 = vld [vmem:[#allocation3 + $0x3e8] sm:$0xff]
        %v3441 = vld [vmem:[#allocation3 + $0x3f0] sm:$0xff]
        %v3442 = vld [vmem:[#allocation3 + $0x3f8] sm:$0xff]
        %v3443 = vld [vmem:[#allocation3 + $0x400] sm:$0xff]
        %v3444 = vld [vmem:[#allocation3 + $0x408] sm:$0xff]
        %v3445 = vld [vmem:[#allocation3 + $0x410] sm:$0xff]
        %v3446 = vld [vmem:[#allocation3 + $0x418] sm:$0xff]
        %v3447 = vld [vmem:[#allocation3 + $0x420] sm:$0xff]
        %v3448 = vld [vmem:[#allocation3 + $0x428] sm:$0xff]
        %v3449 = vld [vmem:[#allocation3 + $0x430] sm:$0xff]
        %v3450 = vld [vmem:[#allocation3 + $0x438] sm:$0xff]
        %v3451 = vld [vmem:[#allocation3 + $0x440] sm:$0xff]
        %v3452 = vld [vmem:[#allocation3 + $0x448] sm:$0xff]
        %v3453 = vld [vmem:[#allocation3 + $0x450] sm:$0xff]
        %v3454 = vld [vmem:[#allocation3 + $0x458] sm:$0xff]
        %v3455 = vld [vmem:[#allocation3 + $0x460] sm:$0xff]
        %v3456 = vld [vmem:[#allocation3 + $0x468] sm:$0xff]
        %v3457 = vld [vmem:[#allocation3 + $0x470] sm:$0xff]
        %v3458 = vld [vmem:[#allocation3 + $0x478] sm:$0xff]
        %v3459 = vld [vmem:[#allocation10] sm:$0xf]
        %v3460 = vld [vmem:[#allocation10 + $0x4] sm:$0xf]
        %v3461 = vld [vmem:[#allocation10 + $0x8] sm:$0xf]
        %v3462 = vld [vmem:[#allocation10 + $0xc] sm:$0xf]
        %v3463 = vld [vmem:[#allocation10 + $0x10] sm:$0xf]
        %v3464 = vld [vmem:[#allocation10 + $0x14] sm:$0xf]
        %v3465 = vld [vmem:[#allocation10 + $0x18] sm:$0xf]
        %v3466 = vld [vmem:[#allocation10 + $0x1c] sm:$0xf]
        %v3467 = vld [vmem:[#allocation10 + $0x20] sm:$0xf]
        %v3468 = vld [vmem:[#allocation10 + $0x24] sm:$0xf]
        %v3469 = vld [vmem:[#allocation10 + $0x28] sm:$0xf]
        %v3470 = vld [vmem:[#allocation10 + $0x2c] sm:$0xf]
        %v3471 = vld [vmem:[#allocation10 + $0x30] sm:$0xf]
        %v3472 = vld [vmem:[#allocation10 + $0x34] sm:$0xf]
        %v3473 = vld [vmem:[#allocation10 + $0x38] sm:$0xf]
        %v3474 = vld [vmem:[#allocation10 + $0x3c] sm:$0xf]
        %v3475 = vld [vmem:[#allocation10 + $0x40] sm:$0xf]
        %v3476 = vld [vmem:[#allocation10 + $0x44] sm:$0xf]
        %v3477 = vld [vmem:[#allocation10 + $0x48] sm:$0xf]
        %v3478 = vld [vmem:[#allocation10 + $0x4c] sm:$0xf]
        %v3479 = vld [vmem:[#allocation10 + $0x50] sm:$0xf]
        %v3480 = vld [vmem:[#allocation10 + $0x54] sm:$0xf]
        %v3481 = vld [vmem:[#allocation10 + $0x58] sm:$0xf]
        %v3482 = vld [vmem:[#allocation10 + $0x5c] sm:$0xf]
        %v3483 = vld [vmem:[#allocation10 + $0x60] sm:$0xf]
        %v3484 = vld [vmem:[#allocation10 + $0x64] sm:$0xf]
        %v3485 = vld [vmem:[#allocation10 + $0x68] sm:$0xf]
        %v3486 = vld [vmem:[#allocation10 + $0x6c] sm:$0xf]
        %v3487 = vld [vmem:[#allocation10 + $0x70] sm:$0xf]
        %v3488 = vld [vmem:[#allocation10 + $0x74] sm:$0xf]
        %v3489 = vld [vmem:[#allocation10 + $0x78] sm:$0xf]
        %v3490 = vld [vmem:[#allocation10 + $0x7c] sm:$0xf]
        %v3491 = vld [vmem:[#allocation10 + $0x80] sm:$0xf]
        %v3492 = vld [vmem:[#allocation10 + $0x84] sm:$0xf]
        %v3493 = vld [vmem:[#allocation10 + $0x88] sm:$0xf]
        %v3494 = vld [vmem:[#allocation10 + $0x8c] sm:$0xf]
        %v3495 = vld [vmem:[#allocation10 + $0x90] sm:$0xf]
        %v3496 = vld [vmem:[#allocation10 + $0x94] sm:$0xf]
        %v3497 = vld [vmem:[#allocation10 + $0x98] sm:$0xf]
        %v3498 = vld [vmem:[#allocation10 + $0x9c] sm:$0xf]
        %v3499 = vld [vmem:[#allocation10 + $0xa0] sm:$0xf]
        %v3500 = vld [vmem:[#allocation10 + $0xa4] sm:$0xf]
        %v3501 = vld [vmem:[#allocation10 + $0xa8] sm:$0xf]
        %v3502 = vld [vmem:[#allocation10 + $0xac] sm:$0xf]
        %v3503 = vld [vmem:[#allocation10 + $0xb0] sm:$0xf]
        %v3504 = vld [vmem:[#allocation10 + $0xb4] sm:$0xf]
        %v3505 = vld [vmem:[#allocation10 + $0xb8] sm:$0xf]
        %v3506 = vld [vmem:[#allocation10 + $0xbc] sm:$0xf]
        %v3507 = vld [vmem:[#allocation10 + $0xc0] sm:$0xf]
        %v3508 = vld [vmem:[#allocation10 + $0xc4] sm:$0xf]
        %v3509 = vld [vmem:[#allocation10 + $0xc8] sm:$0xf]
        %v3510 = vld [vmem:[#allocation10 + $0xcc] sm:$0xf]
        %v3511 = vld [vmem:[#allocation10 + $0xd0] sm:$0xf]
        %v3512 = vld [vmem:[#allocation10 + $0xd4] sm:$0xf]
        %v3513 = vld [vmem:[#allocation10 + $0xd8] sm:$0xf]
        %v3514 = vld [vmem:[#allocation10 + $0xdc] sm:$0xf]
        %v3515 = vld [vmem:[#allocation10 + $0xe0] sm:$0xf]
        %v3516 = vld [vmem:[#allocation10 + $0xe4] sm:$0xf]
        %v3517 = vld [vmem:[#allocation10 + $0xe8] sm:$0xf]
        %v3518 = vld [vmem:[#allocation10 + $0xec] sm:$0xf]
        %v3519 = vld [vmem:[#allocation10 + $0xf0] sm:$0xf]
        %v3520 = vld [vmem:[#allocation10 + $0xf4] sm:$0xf]
        %v3521 = vld [vmem:[#allocation10 + $0xf8] sm:$0xf]
        %v3522 = vld [vmem:[#allocation10 + $0xfc] sm:$0xf]
        %v3523 = vld [vmem:[#allocation10 + $0x100] sm:$0xf]
        %v3524 = vld [vmem:[#allocation10 + $0x104] sm:$0xf]
        %v3525 = vld [vmem:[#allocation10 + $0x108] sm:$0xf]
        %v3526 = vld [vmem:[#allocation10 + $0x10c] sm:$0xf]
        %v3527 = vld [vmem:[#allocation10 + $0x110] sm:$0xf]
        %v3528 = vld [vmem:[#allocation10 + $0x114] sm:$0xf]
        %v3529 = vld [vmem:[#allocation10 + $0x118] sm:$0xf]
        %v3530 = vld [vmem:[#allocation10 + $0x11c] sm:$0xf]
        %v3531 = vld [vmem:[#allocation10 + $0x120] sm:$0xf]
        %v3532 = vld [vmem:[#allocation10 + $0x124] sm:$0xf]
        %v3533 = vld [vmem:[#allocation10 + $0x128] sm:$0xf]
        %v3534 = vld [vmem:[#allocation10 + $0x12c] sm:$0xf]
        %v3535 = vld [vmem:[#allocation10 + $0x130] sm:$0xf]
        %v3536 = vld [vmem:[#allocation10 + $0x134] sm:$0xf]
        %v3537 = vld [vmem:[#allocation10 + $0x138] sm:$0xf]
        %v3538 = vld [vmem:[#allocation10 + $0x13c] sm:$0xf]
        %v3539 = vld [vmem:[#allocation10 + $0x140] sm:$0xf]
        %v3540 = vld [vmem:[#allocation10 + $0x144] sm:$0xf]
        %v3541 = vld [vmem:[#allocation10 + $0x148] sm:$0xf]
        %v3542 = vld [vmem:[#allocation10 + $0x14c] sm:$0xf]
        %v3543 = vld [vmem:[#allocation10 + $0x150] sm:$0xf]
        %v3544 = vld [vmem:[#allocation10 + $0x154] sm:$0xf]
        %v3545 = vld [vmem:[#allocation10 + $0x158] sm:$0xf]
        %v3546 = vld [vmem:[#allocation10 + $0x15c] sm:$0xf]
        %v3547 = vld [vmem:[#allocation10 + $0x160] sm:$0xf]
        %v3548 = vld [vmem:[#allocation10 + $0x164] sm:$0xf]
        %v3549 = vld [vmem:[#allocation10 + $0x168] sm:$0xf]
        %v3550 = vld [vmem:[#allocation10 + $0x16c] sm:$0xf]
        %v3551 = vld [vmem:[#allocation10 + $0x170] sm:$0xf]
        %v3552 = vld [vmem:[#allocation10 + $0x174] sm:$0xf]
        %v3553 = vld [vmem:[#allocation10 + $0x178] sm:$0xf]
        %v3554 = vld [vmem:[#allocation10 + $0x17c] sm:$0xf]
        %v3555 = vld [vmem:[#allocation10 + $0x180] sm:$0xf]
        %v3556 = vld [vmem:[#allocation10 + $0x184] sm:$0xf]
        %v3557 = vld [vmem:[#allocation10 + $0x188] sm:$0xf]
        %v3558 = vld [vmem:[#allocation10 + $0x18c] sm:$0xf]
        %v3559 = vld [vmem:[#allocation10 + $0x190] sm:$0xf]
        %v3560 = vld [vmem:[#allocation10 + $0x194] sm:$0xf]
        %v3561 = vld [vmem:[#allocation10 + $0x198] sm:$0xf]
        %v3562 = vld [vmem:[#allocation10 + $0x19c] sm:$0xf]
        %v3563 = vld [vmem:[#allocation10 + $0x1a0] sm:$0xf]
        %v3564 = vld [vmem:[#allocation10 + $0x1a4] sm:$0xf]
        %v3565 = vld [vmem:[#allocation10 + $0x1a8] sm:$0xf]
        %v3566 = vld [vmem:[#allocation10 + $0x1ac] sm:$0xf]
        %v3567 = vld [vmem:[#allocation10 + $0x1b0] sm:$0xf]
        %v3568 = vld [vmem:[#allocation10 + $0x1b4] sm:$0xf]
        %v3569 = vld [vmem:[#allocation10 + $0x1b8] sm:$0xf]
        %v3570 = vld [vmem:[#allocation10 + $0x1bc] sm:$0xf]
        %v3571 = vld [vmem:[#allocation10 + $0x1c0] sm:$0xf]
        %v3572 = vld [vmem:[#allocation10 + $0x1c4] sm:$0xf]
        %v3573 = vld [vmem:[#allocation10 + $0x1c8] sm:$0xf]
        %v3574 = vld [vmem:[#allocation10 + $0x1cc] sm:$0xf]
        %v3575 = vld [vmem:[#allocation10 + $0x1d0] sm:$0xf]
        %v3576 = vld [vmem:[#allocation10 + $0x1d4] sm:$0xf]
        %v3577 = vld [vmem:[#allocation10 + $0x1d8] sm:$0xf]
        %v3578 = vld [vmem:[#allocation10 + $0x1dc] sm:$0xf]
        %v3579 = vld [vmem:[#allocation10 + $0x1e0] sm:$0xf]
        %v3580 = vld [vmem:[#allocation10 + $0x1e4] sm:$0xf]
        %v3581 = vld [vmem:[#allocation10 + $0x1e8] sm:$0xf]
        %v3582 = vld [vmem:[#allocation10 + $0x1ec] sm:$0xf]
        %v3583 = vld [vmem:[#allocation10 + $0x1f0] sm:$0xf]
        %v3584 = vld [vmem:[#allocation10 + $0x1f4] sm:$0xf]
        %v3585 = vld [vmem:[#allocation10 + $0x1f8] sm:$0xf]
        %v3586 = vld [vmem:[#allocation10 + $0x1fc] sm:$0xf]
        %v3587 = vld [vmem:[#allocation10 + $0x200] sm:$0xf]
        %v3588 = vld [vmem:[#allocation10 + $0x204] sm:$0xf]
        %v3589 = vld [vmem:[#allocation10 + $0x208] sm:$0xf]
        %v3590 = vld [vmem:[#allocation10 + $0x20c] sm:$0xf]
        %v3591 = vld [vmem:[#allocation10 + $0x210] sm:$0xf]
        %v3592 = vld [vmem:[#allocation10 + $0x214] sm:$0xf]
        %v3593 = vld [vmem:[#allocation10 + $0x218] sm:$0xf]
        %v3594 = vld [vmem:[#allocation10 + $0x21c] sm:$0xf]
        %v3595 = vld [vmem:[#allocation10 + $0x220] sm:$0xf]
        %v3596 = vld [vmem:[#allocation10 + $0x224] sm:$0xf]
        %v3597 = vld [vmem:[#allocation10 + $0x228] sm:$0xf]
        %v3598 = vld [vmem:[#allocation10 + $0x22c] sm:$0xf]
        %v3599 = vld [vmem:[#allocation10 + $0x230] sm:$0xf]
        %v3600 = vld [vmem:[#allocation10 + $0x234] sm:$0xf]
        %v3601 = vld [vmem:[#allocation10 + $0x238] sm:$0xf]
        %v3602 = vld [vmem:[#allocation10 + $0x23c] sm:$0xf]
        %v3603 = vld [vmem:[#allocation12] sm:$0x1]
        %v3605 = vlaneseq
        %v3606 = vshrl.u32 %v3605, 7
        %v3607 = vsub.s32 0, %v3606
        %v3608 = vrot.slane %v3603, %v3607
        %v3754 = vunpack.c.l.b16 %v3459
        %v3755 = vunpack.c.l.b16 %v3460
        %v3756 = vunpack.c.l.b16 %v3461
        %v3757 = vunpack.c.l.b16 %v3462
        %v3758 = vunpack.c.l.b16 %v3463
        %v3759 = vunpack.c.l.b16 %v3464
        %v3760 = vunpack.c.l.b16 %v3465
        %v3761 = vunpack.c.l.b16 %v3466
        %v3762 = vunpack.c.l.b16 %v3467
        %v3763 = vunpack.c.l.b16 %v3468
        %v3764 = vunpack.c.l.b16 %v3469
        %v3765 = vunpack.c.l.b16 %v3470
        %v3766 = vunpack.c.l.b16 %v3471
        %v3767 = vunpack.c.l.b16 %v3472
        %v3768 = vunpack.c.l.b16 %v3473
        %v3769 = vunpack.c.l.b16 %v3474
        %v3770 = vunpack.c.l.b16 %v3475
        %v3771 = vunpack.c.l.b16 %v3476
        %v3772 = vunpack.c.l.b16 %v3477
        %v3773 = vunpack.c.l.b16 %v3478
        %v3774 = vunpack.c.l.b16 %v3479
        %v3775 = vunpack.c.l.b16 %v3480
        %v3776 = vunpack.c.l.b16 %v3481
        %v3777 = vunpack.c.l.b16 %v3482
        %v3778 = vunpack.c.l.b16 %v3483
        %v3779 = vunpack.c.l.b16 %v3484
        %v3780 = vunpack.c.l.b16 %v3485
        %v3781 = vunpack.c.l.b16 %v3486
        %v3782 = vunpack.c.l.b16 %v3487
        %v3783 = vunpack.c.l.b16 %v3488
        %v3784 = vunpack.c.l.b16 %v3489
        %v3785 = vunpack.c.l.b16 %v3490
        %v3786 = vunpack.c.l.b16 %v3491
        %v3787 = vunpack.c.l.b16 %v3492
        %v3788 = vunpack.c.l.b16 %v3493
        %v3789 = vunpack.c.l.b16 %v3494
        %v3790 = vunpack.c.l.b16 %v3495
        %v3791 = vunpack.c.l.b16 %v3496
        %v3792 = vunpack.c.l.b16 %v3497
        %v3793 = vunpack.c.l.b16 %v3498
        %v3794 = vunpack.c.l.b16 %v3499
        %v3795 = vunpack.c.l.b16 %v3500
        %v3796 = vunpack.c.l.b16 %v3501
        %v3797 = vunpack.c.l.b16 %v3502
        %v3798 = vunpack.c.l.b16 %v3503
        %v3799 = vunpack.c.l.b16 %v3504
        %v3800 = vunpack.c.l.b16 %v3505
        %v3801 = vunpack.c.l.b16 %v3506
        %v3802 = vunpack.c.l.b16 %v3507
        %v3803 = vunpack.c.l.b16 %v3508
        %v3804 = vunpack.c.l.b16 %v3509
        %v3805 = vunpack.c.l.b16 %v3510
        %v3806 = vunpack.c.l.b16 %v3511
        %v3807 = vunpack.c.l.b16 %v3512
        %v3808 = vunpack.c.l.b16 %v3513
        %v3809 = vunpack.c.l.b16 %v3514
        %v3810 = vunpack.c.l.b16 %v3515
        %v3811 = vunpack.c.l.b16 %v3516
        %v3812 = vunpack.c.l.b16 %v3517
        %v3813 = vunpack.c.l.b16 %v3518
        %v3814 = vunpack.c.l.b16 %v3519
        %v3815 = vunpack.c.l.b16 %v3520
        %v3816 = vunpack.c.l.b16 %v3521
        %v3817 = vunpack.c.l.b16 %v3522
        %v3818 = vunpack.c.l.b16 %v3523
        %v3819 = vunpack.c.l.b16 %v3524
        %v3820 = vunpack.c.l.b16 %v3525
        %v3821 = vunpack.c.l.b16 %v3526
        %v3822 = vunpack.c.l.b16 %v3527
        %v3823 = vunpack.c.l.b16 %v3528
        %v3824 = vunpack.c.l.b16 %v3529
        %v3825 = vunpack.c.l.b16 %v3530
        %v3826 = vunpack.c.l.b16 %v3531
        %v3827 = vunpack.c.l.b16 %v3532
        %v3828 = vunpack.c.l.b16 %v3533
        %v3829 = vunpack.c.l.b16 %v3534
        %v3830 = vunpack.c.l.b16 %v3535
        %v3831 = vunpack.c.l.b16 %v3536
        %v3832 = vunpack.c.l.b16 %v3537
        %v3833 = vunpack.c.l.b16 %v3538
        %v3834 = vunpack.c.l.b16 %v3539
        %v3835 = vunpack.c.l.b16 %v3540
        %v3836 = vunpack.c.l.b16 %v3541
        %v3837 = vunpack.c.l.b16 %v3542
        %v3838 = vunpack.c.l.b16 %v3543
        %v3839 = vunpack.c.l.b16 %v3544
        %v3840 = vunpack.c.l.b16 %v3545
        %v3841 = vunpack.c.l.b16 %v3546
        %v3842 = vunpack.c.l.b16 %v3547
        %v3843 = vunpack.c.l.b16 %v3548
        %v3844 = vunpack.c.l.b16 %v3549
        %v3845 = vunpack.c.l.b16 %v3550
        %v3846 = vunpack.c.l.b16 %v3551
        %v3847 = vunpack.c.l.b16 %v3552
        %v3848 = vunpack.c.l.b16 %v3553
        %v3849 = vunpack.c.l.b16 %v3554
        %v3850 = vunpack.c.l.b16 %v3555
        %v3851 = vunpack.c.l.b16 %v3556
        %v3852 = vunpack.c.l.b16 %v3557
        %v3853 = vunpack.c.l.b16 %v3558
        %v3854 = vunpack.c.l.b16 %v3559
        %v3855 = vunpack.c.l.b16 %v3560
        %v3856 = vunpack.c.l.b16 %v3561
        %v3857 = vunpack.c.l.b16 %v3562
        %v3858 = vunpack.c.l.b16 %v3563
        %v3859 = vunpack.c.l.b16 %v3564
        %v3860 = vunpack.c.l.b16 %v3565
        %v3861 = vunpack.c.l.b16 %v3566
        %v3862 = vunpack.c.l.b16 %v3567
        %v3863 = vunpack.c.l.b16 %v3568
        %v3864 = vunpack.c.l.b16 %v3569
        %v3865 = vunpack.c.l.b16 %v3570
        %v3866 = vunpack.c.l.b16 %v3571
        %v3867 = vunpack.c.l.b16 %v3572
        %v3868 = vunpack.c.l.b16 %v3573
        %v3869 = vunpack.c.l.b16 %v3574
        %v3870 = vunpack.c.l.b16 %v3575
        %v3871 = vunpack.c.l.b16 %v3576
        %v3872 = vunpack.c.l.b16 %v3577
        %v3873 = vunpack.c.l.b16 %v3578
        %v3874 = vunpack.c.l.b16 %v3579
        %v3875 = vunpack.c.l.b16 %v3580
        %v3876 = vunpack.c.l.b16 %v3581
        %v3877 = vunpack.c.l.b16 %v3582
        %v3878 = vunpack.c.l.b16 %v3583
        %v3879 = vunpack.c.l.b16 %v3584
        %v3880 = vunpack.c.l.b16 %v3585
        %v3881 = vunpack.c.l.b16 %v3586
        %v3882 = vunpack.c.l.b16 %v3587
        %v3883 = vunpack.c.l.b16 %v3588
        %v3884 = vunpack.c.l.b16 %v3589
        %v3885 = vunpack.c.l.b16 %v3590
        %v3886 = vunpack.c.l.b16 %v3591
        %v3887 = vunpack.c.l.b16 %v3592
        %v3888 = vunpack.c.l.b16 %v3593
        %v3889 = vunpack.c.l.b16 %v3594
        %v3890 = vunpack.c.l.b16 %v3595
        %v3891 = vunpack.c.l.b16 %v3596
        %v3892 = vunpack.c.l.b16 %v3597
        %v3893 = vunpack.c.l.b16 %v3598
        %v3894 = vunpack.c.l.b16 %v3599
        %v3895 = vunpack.c.l.b16 %v3600
        %v3896 = vunpack.c.l.b16 %v3601
        %v3897 = vunpack.c.l.b16 %v3602
        %v3898 = vpack.c.b16 %v3755, %v3754
        %v3899 = vpack.c.b16 %v3757, %v3756
        %v3900 = vpack.c.b16 %v3759, %v3758
        %v3901 = vpack.c.b16 %v3761, %v3760
        %v3902 = vpack.c.b16 %v3763, %v3762
        %v3903 = vpack.c.b16 %v3765, %v3764
        %v3904 = vpack.c.b16 %v3767, %v3766
        %v3905 = vpack.c.b16 %v3769, %v3768
        %v3906 = vpack.c.b16 %v3771, %v3770
        %v3907 = vpack.c.b16 %v3773, %v3772
        %v3908 = vpack.c.b16 %v3775, %v3774
        %v3909 = vpack.c.b16 %v3777, %v3776
        %v3910 = vpack.c.b16 %v3779, %v3778
        %v3911 = vpack.c.b16 %v3781, %v3780
        %v3912 = vpack.c.b16 %v3783, %v3782
        %v3913 = vpack.c.b16 %v3785, %v3784
        %v3914 = vpack.c.b16 %v3787, %v3786
        %v3915 = vpack.c.b16 %v3789, %v3788
        %v3916 = vpack.c.b16 %v3791, %v3790
        %v3917 = vpack.c.b16 %v3793, %v3792
        %v3918 = vpack.c.b16 %v3795, %v3794
        %v3919 = vpack.c.b16 %v3797, %v3796
        %v3920 = vpack.c.b16 %v3799, %v3798
        %v3921 = vpack.c.b16 %v3801, %v3800
        %v3922 = vpack.c.b16 %v3803, %v3802
        %v3923 = vpack.c.b16 %v3805, %v3804
        %v3924 = vpack.c.b16 %v3807, %v3806
        %v3925 = vpack.c.b16 %v3809, %v3808
        %v3926 = vpack.c.b16 %v3811, %v3810
        %v3927 = vpack.c.b16 %v3813, %v3812
        %v3928 = vpack.c.b16 %v3815, %v3814
        %v3929 = vpack.c.b16 %v3817, %v3816
        %v3930 = vpack.c.b16 %v3819, %v3818
        %v3931 = vpack.c.b16 %v3821, %v3820
        %v3932 = vpack.c.b16 %v3823, %v3822
        %v3933 = vpack.c.b16 %v3825, %v3824
        %v3934 = vpack.c.b16 %v3827, %v3826
        %v3935 = vpack.c.b16 %v3829, %v3828
        %v3936 = vpack.c.b16 %v3831, %v3830
        %v3937 = vpack.c.b16 %v3833, %v3832
        %v3938 = vpack.c.b16 %v3835, %v3834
        %v3939 = vpack.c.b16 %v3837, %v3836
        %v3940 = vpack.c.b16 %v3839, %v3838
        %v3941 = vpack.c.b16 %v3841, %v3840
        %v3942 = vpack.c.b16 %v3843, %v3842
        %v3943 = vpack.c.b16 %v3845, %v3844
        %v3944 = vpack.c.b16 %v3847, %v3846
        %v3945 = vpack.c.b16 %v3849, %v3848
        %v3946 = vpack.c.b16 %v3851, %v3850
        %v3947 = vpack.c.b16 %v3853, %v3852
        %v3948 = vpack.c.b16 %v3855, %v3854
        %v3949 = vpack.c.b16 %v3857, %v3856
        %v3950 = vpack.c.b16 %v3859, %v3858
        %v3951 = vpack.c.b16 %v3861, %v3860
        %v3952 = vpack.c.b16 %v3863, %v3862
        %v3953 = vpack.c.b16 %v3865, %v3864
        %v3954 = vpack.c.b16 %v3867, %v3866
        %v3955 = vpack.c.b16 %v3869, %v3868
        %v3956 = vpack.c.b16 %v3871, %v3870
        %v3957 = vpack.c.b16 %v3873, %v3872
        %v3958 = vpack.c.b16 %v3875, %v3874
        %v3959 = vpack.c.b16 %v3877, %v3876
        %v3960 = vpack.c.b16 %v3879, %v3878
        %v3961 = vpack.c.b16 %v3881, %v3880
        %v3962 = vpack.c.b16 %v3883, %v3882
        %v3963 = vpack.c.b16 %v3885, %v3884
        %v3964 = vpack.c.b16 %v3887, %v3886
        %v3965 = vpack.c.b16 %v3889, %v3888
        %v3966 = vpack.c.b16 %v3891, %v3890
        %v3967 = vpack.c.b16 %v3893, %v3892
        %v3968 = vpack.c.b16 %v3895, %v3894
        %v3969 = vpack.c.b16 %v3897, %v3896
        %4042 = vmatprep.subr.bf16.mxu0 0
        %4043 = vmatpush1.bf16.msra.mxu0 %v3898
        %4044 = vmatprep.subr.bf16.mxu0 0
        %4045 = vmatpush1.bf16.msra.mxu0 %v3899
        %4046 = vmatprep.subr.bf16.mxu0 0
        %4047 = vmatpush1.bf16.msra.mxu0 %v3900
        %4048 = vmatprep.subr.bf16.mxu0 0
        %4049 = vmatpush1.bf16.msra.mxu0 %v3901
        %4050 = vmatprep.subr.bf16.mxu0 0
        %4051 = vmatpush1.bf16.msra.mxu0 %v3902
        %4052 = vmatprep.subr.bf16.mxu0 0
        %4053 = vmatpush1.bf16.msra.mxu0 %v3903
        %4054 = vmatprep.subr.bf16.mxu0 0
        %4055 = vmatpush1.bf16.msra.mxu0 %v3904
        %4056 = vmatprep.subr.bf16.mxu0 0
        %4057 = vmatpush1.bf16.msra.mxu0 %v3905
        %4058 = vmatprep.subr.bf16.mxu0 0
        %4059 = vmatpush1.bf16.msra.mxu0 %v3906
        %4060 = vmatprep.subr.bf16.mxu0 0
        %4061 = vmatpush1.bf16.msra.mxu0 %v3907
        %4062 = vmatprep.subr.bf16.mxu0 0
        %4063 = vmatpush1.bf16.msra.mxu0 %v3908
        %4064 = vmatprep.subr.bf16.mxu0 0
        %4065 = vmatpush1.bf16.msra.mxu0 %v3909
        %4066 = vmatprep.subr.bf16.mxu0 0
        %4067 = vmatpush1.bf16.msra.mxu0 %v3910
        %4068 = vmatprep.subr.bf16.mxu0 0
        %4069 = vmatpush1.bf16.msra.mxu0 %v3911
        %4070 = vmatprep.subr.bf16.mxu0 0
        %4071 = vmatpush1.bf16.msra.mxu0 %v3912
        %4072 = vmatprep.subr.bf16.mxu0 0
        %4073 = vmatpush1.bf16.msra.mxu0 %v3913
        %4074 = vmatprep.mubr.bf16.mxu0 %v3316
        %4075 = vmatmul.mubr.bf16.gmra.mrb[0].mxu0 %v3315
        %v4076 = vpop.f32.mrb[0].mxu0
        %v4077 = vadd.f32 %v3608, %v4076
        %v4078 = vpop.f32.mrb[0].mxu0
        %v4079 = vpop.f32.mrb[0].mxu0
        %v4080 = vadd.f32 %v3608, %v4079
        %v4081 = vpop.f32.mrb[0].mxu0
        %4082 = vmatprep.mubr.bf16.mxu0 %v3325
        %4083 = vmatmul.mubr.bf16.gmra.mrb[0].mxu0 %v3324
        %v4084 = vpop.f32.mrb[0].mxu0
        %v4085 = vadd.f32 %v3608, %v4084
        %v4086 = vpop.f32.mrb[0].mxu0
        %v4087 = vpop.f32.mrb[0].mxu0
        %v4088 = vadd.f32 %v3608, %v4087
        %v4089 = vpop.f32.mrb[0].mxu0
        %4090 = vmatprep.mubr.bf16.mxu0 %v3334
        %4091 = vmatmul.mubr.bf16.gmra.mrb[0].mxu0 %v3333
        %v4092 = vpop.f32.mrb[0].mxu0
        %v4093 = vadd.f32 %v3608, %v4092
        %v4094 = vpop.f32.mrb[0].mxu0
        %v4095 = vpop.f32.mrb[0].mxu0
        %v4096 = vadd.f32 %v3608, %v4095
        %v4097 = vpop.f32.mrb[0].mxu0
        %4098 = vmatprep.mubr.bf16.mxu0 %v3343
        %4099 = vmatmul.mubr.bf16.gmra.mrb[0].mxu0 %v3342
        %v4100 = vpop.f32.mrb[0].mxu0
        %v4101 = vadd.f32 %v3608, %v4100
        %v4102 = vpop.f32.mrb[0].mxu0
        %v4103 = vpop.f32.mrb[0].mxu0
        %v4104 = vadd.f32 %v3608, %v4103
        %v4105 = vpop.f32.mrb[0].mxu0
        %4106 = vmatprep.mubr.bf16.mxu0 %v3352
        %4107 = vmatmul.mubr.bf16.gmra.mrb[0].mxu0 %v3351
        %v4108 = vpop.f32.mrb[0].mxu0
        %v4109 = vadd.f32 %v3608, %v4108
        %v4110 = vpop.f32.mrb[0].mxu0
        %v4111 = vpop.f32.mrb[0].mxu0
        %v4112 = vadd.f32 %v3608, %v4111
        %v4113 = vpop.f32.mrb[0].mxu0
        %4114 = vmatprep.mubr.bf16.mxu0 %v3361
        %4115 = vmatmul.mubr.bf16.gmra.mrb[0].mxu0 %v3360
        %v4116 = vpop.f32.mrb[0].mxu0
        %v4117 = vadd.f32 %v3608, %v4116
        %v4118 = vpop.f32.mrb[0].mxu0
        %v4119 = vpop.f32.mrb[0].mxu0
        %v4120 = vadd.f32 %v3608, %v4119
        %v4121 = vpop.f32.mrb[0].mxu0
        %4122 = vmatprep.mubr.bf16.mxu0 %v3370
        %4123 = vmatmul.mubr.bf16.gmra.mrb[0].mxu0 %v3369
        %v4124 = vpop.f32.mrb[0].mxu0
        %v4125 = vadd.f32 %v3608, %v4124
        %v4126 = vpop.f32.mrb[0].mxu0
        %v4127 = vpop.f32.mrb[0].mxu0
        %v4128 = vadd.f32 %v3608, %v4127
        %v4129 = vpop.f32.mrb[0].mxu0
        %4130 = vmatprep.mubr.bf16.mxu0 %v3379
        %4131 = vmatmul.mubr.bf16.gmra.mrb[0].mxu0 %v3378
        %v4132 = vpop.f32.mrb[0].mxu0
        %v4133 = vadd.f32 %v3608, %v4132
        %v4134 = vpop.f32.mrb[0].mxu0
        %v4135 = vpop.f32.mrb[0].mxu0
        %v4136 = vadd.f32 %v3608, %v4135
        %v4137 = vpop.f32.mrb[0].mxu0
        %4138 = vmatprep.mubr.bf16.mxu0 %v3388
        %4139 = vmatmul.mubr.bf16.gmra.mrb[0].mxu0 %v3387
        %v4140 = vpop.f32.mrb[0].mxu0
        %v4141 = vadd.f32 %v3608, %v4140
        %v4142 = vpop.f32.mrb[0].mxu0
        %v4143 = vpop.f32.mrb[0].mxu0
        %v4144 = vadd.f32 %v3608, %v4143
        %v4145 = vpop.f32.mrb[0].mxu0
        %4146 = vmatprep.mubr.bf16.mxu0 %v3397
        %4147 = vmatmul.mubr.bf16.gmra.mrb[0].mxu0 %v3396
        %v4148 = vpop.f32.mrb[0].mxu0
        %v4149 = vadd.f32 %v3608, %v4148
        %v4150 = vpop.f32.mrb[0].mxu0
        %v4151 = vpop.f32.mrb[0].mxu0
        %v4152 = vadd.f32 %v3608, %v4151
        %v4153 = vpop.f32.mrb[0].mxu0
        %4154 = vmatprep.mubr.bf16.mxu0 %v3406
        %4155 = vmatmul.mubr.bf16.gmra.mrb[0].mxu0 %v3405
        %v4156 = vpop.f32.mrb[0].mxu0
        %v4157 = vadd.f32 %v3608, %v4156
        %v4158 = vpop.f32.mrb[0].mxu0
        %v4159 = vpop.f32.mrb[0].mxu0
        %v4160 = vadd.f32 %v3608, %v4159
        %v4161 = vpop.f32.mrb[0].mxu0
        %4162 = vmatprep.mubr.bf16.mxu0 %v3415
        %4163 = vmatmul.mubr.bf16.gmra.mrb[0].mxu0 %v3414
        %v4164 = vpop.f32.mrb[0].mxu0
        %v4165 = vadd.f32 %v3608, %v4164
        %v4166 = vpop.f32.mrb[0].mxu0
        %v4167 = vpop.f32.mrb[0].mxu0
        %v4168 = vadd.f32 %v3608, %v4167
        %v4169 = vpop.f32.mrb[0].mxu0
        %4170 = vmatprep.mubr.bf16.mxu0 %v3424
        %4171 = vmatmul.mubr.bf16.gmra.mrb[0].mxu0 %v3423
        %v4172 = vpop.f32.mrb[0].mxu0
        %v4173 = vadd.f32 %v3608, %v4172
        %v4174 = vpop.f32.mrb[0].mxu0
        %v4175 = vpop.f32.mrb[0].mxu0
        %v4176 = vadd.f32 %v3608, %v4175
        %v4177 = vpop.f32.mrb[0].mxu0
        %4178 = vmatprep.mubr.bf16.mxu0 %v3433
        %4179 = vmatmul.mubr.bf16.gmra.mrb[0].mxu0 %v3432
        %v4180 = vpop.f32.mrb[0].mxu0
        %v4181 = vadd.f32 %v3608, %v4180
        %v4182 = vpop.f32.mrb[0].mxu0
        %v4183 = vpop.f32.mrb[0].mxu0
        %v4184 = vadd.f32 %v3608, %v4183
        %v4185 = vpop.f32.mrb[0].mxu0
        %4186 = vmatprep.mubr.bf16.mxu0 %v3442
        %4187 = vmatmul.mubr.bf16.gmra.mrb[0].mxu0 %v3441
        %v4188 = vpop.f32.mrb[0].mxu0
        %v4189 = vadd.f32 %v3608, %v4188
        %v4190 = vpop.f32.mrb[0].mxu0
        %v4191 = vpop.f32.mrb[0].mxu0
        %v4192 = vadd.f32 %v3608, %v4191
        %v4193 = vpop.f32.mrb[0].mxu0
        %4194 = vmatprep.mubr.bf16.mxu0 %v3451
        %4195 = vmatmul.mubr.bf16.gmra.mrb[0].mxu0 %v3450
        %v4196 = vpop.f32.mrb[0].mxu0
        %v4197 = vadd.f32 %v3608, %v4196
        %v4198 = vpop.f32.mrb[0].mxu0
        %v4199 = vpop.f32.mrb[0].mxu0
        %v4200 = vadd.f32 %v3608, %v4199
        %v4201 = vpop.f32.mrb[0].mxu0
        %4202 = vdwg.mxu0
        %4203 = vmatprep.subr.bf16.mxu0 0
        %4204 = vmatpush1.bf16.msra.mxu0 %v3914
        %4205 = vmatprep.subr.bf16.mxu0 0
        %4206 = vmatpush1.bf16.msra.mxu0 %v3915
        %4207 = vmatprep.subr.bf16.mxu0 0
        %4208 = vmatpush1.bf16.msra.mxu0 %v3916
        %4209 = vmatprep.subr.bf16.mxu0 0
        %4210 = vmatpush1.bf16.msra.mxu0 %v3917
        %4211 = vmatprep.subr.bf16.mxu0 0
        %4212 = vmatpush1.bf16.msra.mxu0 %v3918
        %4213 = vmatprep.subr.bf16.mxu0 0
        %4214 = vmatpush1.bf16.msra.mxu0 %v3919
        %4215 = vmatprep.subr.bf16.mxu0 0
        %4216 = vmatpush1.bf16.msra.mxu0 %v3920
        %4217 = vmatprep.subr.bf16.mxu0 0
        %4218 = vmatpush1.bf16.msra.mxu0 %v3921
        %4219 = vmatprep.subr.bf16.mxu0 0
        %4220 = vmatpush1.bf16.msra.mxu0 %v3922
        %4221 = vmatprep.subr.bf16.mxu0 0
        %4222 = vmatpush1.bf16.msra.mxu0 %v3923
        %4223 = vmatprep.subr.bf16.mxu0 0
        %4224 = vmatpush1.bf16.msra.mxu0 %v3924
        %4225 = vmatprep.subr.bf16.mxu0 0
        %4226 = vmatpush1.bf16.msra.mxu0 %v3925
        %4227 = vmatprep.subr.bf16.mxu0 0
        %4228 = vmatpush1.bf16.msra.mxu0 %v3926
        %4229 = vmatprep.subr.bf16.mxu0 0
        %4230 = vmatpush1.bf16.msra.mxu0 %v3927
        %4231 = vmatprep.subr.bf16.mxu0 0
        %4232 = vmatpush1.bf16.msra.mxu0 %v3928
        %4233 = vmatprep.subr.bf16.mxu0 0
        %4234 = vmatpush1.bf16.msra.mxu0 %v3929
        %4235 = vmatprep.mubr.bf16.mxu0 %v3318
        %4236 = vmatmul.mubr.bf16.gmra.mrb[0].mxu0 %v3317
        %v4237 = vpop.f32.mrb[0].mxu0
        %v4238 = vadd.f32 %v4077, %v4237
        %v4239 = vpop.f32.mrb[0].mxu0
        %v4240 = vpop.f32.mrb[0].mxu0
        %v4241 = vadd.f32 %v4080, %v4240
        %v4242 = vpop.f32.mrb[0].mxu0
        %4243 = vmatprep.mubr.bf16.mxu0 %v3327
        %4244 = vmatmul.mubr.bf16.gmra.mrb[0].mxu0 %v3326
        %v4245 = vpop.f32.mrb[0].mxu0
        %v4246 = vadd.f32 %v4085, %v4245
        %v4247 = vpop.f32.mrb[0].mxu0
        %v4248 = vpop.f32.mrb[0].mxu0
        %v4249 = vadd.f32 %v4088, %v4248
        %v4250 = vpop.f32.mrb[0].mxu0
        %4251 = vmatprep.mubr.bf16.mxu0 %v3336
        %4252 = vmatmul.mubr.bf16.gmra.mrb[0].mxu0 %v3335
        %v4253 = vpop.f32.mrb[0].mxu0
        %v4254 = vadd.f32 %v4093, %v4253
        %v4255 = vpop.f32.mrb[0].mxu0
        %v4256 = vpop.f32.mrb[0].mxu0
        %v4257 = vadd.f32 %v4096, %v4256
        %v4258 = vpop.f32.mrb[0].mxu0
        %4259 = vmatprep.mubr.bf16.mxu0 %v3345
        %4260 = vmatmul.mubr.bf16.gmra.mrb[0].mxu0 %v3344
        %v4261 = vpop.f32.mrb[0].mxu0
        %v4262 = vadd.f32 %v4101, %v4261
        %v4263 = vpop.f32.mrb[0].mxu0
        %v4264 = vpop.f32.mrb[0].mxu0
        %v4265 = vadd.f32 %v4104, %v4264
        %v4266 = vpop.f32.mrb[0].mxu0
        %4267 = vmatprep.mubr.bf16.mxu0 %v3354
        %4268 = vmatmul.mubr.bf16.gmra.mrb[0].mxu0 %v3353
        %v4269 = vpop.f32.mrb[0].mxu0
        %v4270 = vadd.f32 %v4109, %v4269
        %v4271 = vpop.f32.mrb[0].mxu0
        %v4272 = vpop.f32.mrb[0].mxu0
        %v4273 = vadd.f32 %v4112, %v4272
        %v4274 = vpop.f32.mrb[0].mxu0
        %4275 = vmatprep.mubr.bf16.mxu0 %v3363
        %4276 = vmatmul.mubr.bf16.gmra.mrb[0].mxu0 %v3362
        %v4277 = vpop.f32.mrb[0].mxu0
        %v4278 = vadd.f32 %v4117, %v4277
        %v4279 = vpop.f32.mrb[0].mxu0
        %v4280 = vpop.f32.mrb[0].mxu0
        %v4281 = vadd.f32 %v4120, %v4280
        %v4282 = vpop.f32.mrb[0].mxu0
        %4283 = vmatprep.mubr.bf16.mxu0 %v3372
        %4284 = vmatmul.mubr.bf16.gmra.mrb[0].mxu0 %v3371
        %v4285 = vpop.f32.mrb[0].mxu0
        %v4286 = vadd.f32 %v4125, %v4285
        %v4287 = vpop.f32.mrb[0].mxu0
        %v4288 = vpop.f32.mrb[0].mxu0
        %v4289 = vadd.f32 %v4128, %v4288
        %v4290 = vpop.f32.mrb[0].mxu0
        %4291 = vmatprep.mubr.bf16.mxu0 %v3381
        %4292 = vmatmul.mubr.bf16.gmra.mrb[0].mxu0 %v3380
        %v4293 = vpop.f32.mrb[0].mxu0
        %v4294 = vadd.f32 %v4133, %v4293
        %v4295 = vpop.f32.mrb[0].mxu0
        %v4296 = vpop.f32.mrb[0].mxu0
        %v4297 = vadd.f32 %v4136, %v4296
        %v4298 = vpop.f32.mrb[0].mxu0
        %4299 = vmatprep.mubr.bf16.mxu0 %v3390
        %4300 = vmatmul.mubr.bf16.gmra.mrb[0].mxu0 %v3389
        %v4301 = vpop.f32.mrb[0].mxu0
        %v4302 = vadd.f32 %v4141, %v4301
        %v4303 = vpop.f32.mrb[0].mxu0
        %v4304 = vpop.f32.mrb[0].mxu0
        %v4305 = vadd.f32 %v4144, %v4304
        %v4306 = vpop.f32.mrb[0].mxu0
        %4307 = vmatprep.mubr.bf16.mxu0 %v3399
        %4308 = vmatmul.mubr.bf16.gmra.mrb[0].mxu0 %v3398
        %v4309 = vpop.f32.mrb[0].mxu0
        %v4310 = vadd.f32 %v4149, %v4309
        %v4311 = vpop.f32.mrb[0].mxu0
        %v4312 = vpop.f32.mrb[0].mxu0
        %v4313 = vadd.f32 %v4152, %v4312
        %v4314 = vpop.f32.mrb[0].mxu0
        %4315 = vmatprep.mubr.bf16.mxu0 %v3408
        %4316 = vmatmul.mubr.bf16.gmra.mrb[0].mxu0 %v3407
        %v4317 = vpop.f32.mrb[0].mxu0
        %v4318 = vadd.f32 %v4157, %v4317
        %v4319 = vpop.f32.mrb[0].mxu0
        %v4320 = vpop.f32.mrb[0].mxu0
        %v4321 = vadd.f32 %v4160, %v4320
        %v4322 = vpop.f32.mrb[0].mxu0
        %4323 = vmatprep.mubr.bf16.mxu0 %v3417
        %4324 = vmatmul.mubr.bf16.gmra.mrb[0].mxu0 %v3416
        %v4325 = vpop.f32.mrb[0].mxu0
        %v4326 = vadd.f32 %v4165, %v4325
        %v4327 = vpop.f32.mrb[0].mxu0
        %v4328 = vpop.f32.mrb[0].mxu0
        %v4329 = vadd.f32 %v4168, %v4328
        %v4330 = vpop.f32.mrb[0].mxu0
        %4331 = vmatprep.mubr.bf16.mxu0 %v3426
        %4332 = vmatmul.mubr.bf16.gmra.mrb[0].mxu0 %v3425
        %v4333 = vpop.f32.mrb[0].mxu0
        %v4334 = vadd.f32 %v4173, %v4333
        %v4335 = vpop.f32.mrb[0].mxu0
        %v4336 = vpop.f32.mrb[0].mxu0
        %v4337 = vadd.f32 %v4176, %v4336
        %v4338 = vpop.f32.mrb[0].mxu0
        %4339 = vmatprep.mubr.bf16.mxu0 %v3435
        %4340 = vmatmul.mubr.bf16.gmra.mrb[0].mxu0 %v3434
        %v4341 = vpop.f32.mrb[0].mxu0
        %v4342 = vadd.f32 %v4181, %v4341
        %v4343 = vpop.f32.mrb[0].mxu0
        %v4344 = vpop.f32.mrb[0].mxu0
        %v4345 = vadd.f32 %v4184, %v4344
        %v4346 = vpop.f32.mrb[0].mxu0
        %4347 = vmatprep.mubr.bf16.mxu0 %v3444
        %4348 = vmatmul.mubr.bf16.gmra.mrb[0].mxu0 %v3443
        %v4349 = vpop.f32.mrb[0].mxu0
        %v4350 = vadd.f32 %v4189, %v4349
        %v4351 = vpop.f32.mrb[0].mxu0
        %v4352 = vpop.f32.mrb[0].mxu0
        %v4353 = vadd.f32 %v4192, %v4352
        %v4354 = vpop.f32.mrb[0].mxu0
        %4355 = vmatprep.mubr.bf16.mxu0 %v3453
        %4356 = vmatmul.mubr.bf16.gmra.mrb[0].mxu0 %v3452
        %v4357 = vpop.f32.mrb[0].mxu0
        %v4358 = vadd.f32 %v4197, %v4357
        %v4359 = vpop.f32.mrb[0].mxu0
        %v4360 = vpop.f32.mrb[0].mxu0
        %v4361 = vadd.f32 %v4200, %v4360
        %v4362 = vpop.f32.mrb[0].mxu0
        %4363 = vdwg.mxu0
        %4364 = vmatprep.subr.bf16.mxu0 0
        %4365 = vmatpush1.bf16.msra.mxu0 %v3930
        %4366 = vmatprep.subr.bf16.mxu0 0
        %4367 = vmatpush1.bf16.msra.mxu0 %v3931
        %4368 = vmatprep.subr.bf16.mxu0 0
        %4369 = vmatpush1.bf16.msra.mxu0 %v3932
        %4370 = vmatprep.subr.bf16.mxu0 0
        %4371 = vmatpush1.bf16.msra.mxu0 %v3933
        %4372 = vmatprep.subr.bf16.mxu0 0
        %4373 = vmatpush1.bf16.msra.mxu0 %v3934
        %4374 = vmatprep.subr.bf16.mxu0 0
        %4375 = vmatpush1.bf16.msra.mxu0 %v3935
        %4376 = vmatprep.subr.bf16.mxu0 0
        %4377 = vmatpush1.bf16.msra.mxu0 %v3936
        %4378 = vmatprep.subr.bf16.mxu0 0
        %4379 = vmatpush1.bf16.msra.mxu0 %v3937
        %4380 = vmatprep.subr.bf16.mxu0 0
        %4381 = vmatpush1.bf16.msra.mxu0 %v3938
        %4382 = vmatprep.subr.bf16.mxu0 0
        %4383 = vmatpush1.bf16.msra.mxu0 %v3939
        %4384 = vmatprep.subr.bf16.mxu0 0
        %4385 = vmatpush1.bf16.msra.mxu0 %v3940
        %4386 = vmatprep.subr.bf16.mxu0 0
        %4387 = vmatpush1.bf16.msra.mxu0 %v3941
        %4388 = vmatprep.subr.bf16.mxu0 0
        %4389 = vmatpush1.bf16.msra.mxu0 %v3942
        %4390 = vmatprep.subr.bf16.mxu0 0
        %4391 = vmatpush1.bf16.msra.mxu0 %v3943
        %4392 = vmatprep.subr.bf16.mxu0 0
        %4393 = vmatpush1.bf16.msra.mxu0 %v3944
        %4394 = vmatprep.subr.bf16.mxu0 0
        %4395 = vmatpush1.bf16.msra.mxu0 %v3945
        %4396 = vmatprep.mubr.bf16.mxu0 %v3320
        %4397 = vmatmul.mubr.bf16.gmra.mrb[0].mxu0 %v3319
        %v4398 = vpop.f32.mrb[0].mxu0
        %v4399 = vadd.f32 %v4238, %v4398
        %v4400 = vpop.f32.mrb[0].mxu0
        %v4401 = vpop.f32.mrb[0].mxu0
        %v4402 = vadd.f32 %v4241, %v4401
        %v4403 = vpop.f32.mrb[0].mxu0
        %4404 = vmatprep.mubr.bf16.mxu0 %v3329
        %4405 = vmatmul.mubr.bf16.gmra.mrb[0].mxu0 %v3328
        %v4406 = vpop.f32.mrb[0].mxu0
        %v4407 = vadd.f32 %v4246, %v4406
        %v4408 = vpop.f32.mrb[0].mxu0
        %v4409 = vpop.f32.mrb[0].mxu0
        %v4410 = vadd.f32 %v4249, %v4409
        %v4411 = vpop.f32.mrb[0].mxu0
        %4412 = vmatprep.mubr.bf16.mxu0 %v3338
        %4413 = vmatmul.mubr.bf16.gmra.mrb[0].mxu0 %v3337
        %v4414 = vpop.f32.mrb[0].mxu0
        %v4415 = vadd.f32 %v4254, %v4414
        %v4416 = vpop.f32.mrb[0].mxu0
        %v4417 = vpop.f32.mrb[0].mxu0
        %v4418 = vadd.f32 %v4257, %v4417
        %v4419 = vpop.f32.mrb[0].mxu0
        %4420 = vmatprep.mubr.bf16.mxu0 %v3347
        %4421 = vmatmul.mubr.bf16.gmra.mrb[0].mxu0 %v3346
        %v4422 = vpop.f32.mrb[0].mxu0
        %v4423 = vadd.f32 %v4262, %v4422
        %v4424 = vpop.f32.mrb[0].mxu0
        %v4425 = vpop.f32.mrb[0].mxu0
        %v4426 = vadd.f32 %v4265, %v4425
        %v4427 = vpop.f32.mrb[0].mxu0
        %4428 = vmatprep.mubr.bf16.mxu0 %v3356
        %4429 = vmatmul.mubr.bf16.gmra.mrb[0].mxu0 %v3355
        %v4430 = vpop.f32.mrb[0].mxu0
        %v4431 = vadd.f32 %v4270, %v4430
        %v4432 = vpop.f32.mrb[0].mxu0
        %v4433 = vpop.f32.mrb[0].mxu0
        %v4434 = vadd.f32 %v4273, %v4433
        %v4435 = vpop.f32.mrb[0].mxu0
        %4436 = vmatprep.mubr.bf16.mxu0 %v3365
        %4437 = vmatmul.mubr.bf16.gmra.mrb[0].mxu0 %v3364
        %v4438 = vpop.f32.mrb[0].mxu0
        %v4439 = vadd.f32 %v4278, %v4438
        %v4440 = vpop.f32.mrb[0].mxu0
        %v4441 = vpop.f32.mrb[0].mxu0
        %v4442 = vadd.f32 %v4281, %v4441
        %v4443 = vpop.f32.mrb[0].mxu0
        %4444 = vmatprep.mubr.bf16.mxu0 %v3374
        %4445 = vmatmul.mubr.bf16.gmra.mrb[0].mxu0 %v3373
        %v4446 = vpop.f32.mrb[0].mxu0
        %v4447 = vadd.f32 %v4286, %v4446
        %v4448 = vpop.f32.mrb[0].mxu0
        %v4449 = vpop.f32.mrb[0].mxu0
        %v4450 = vadd.f32 %v4289, %v4449
        %v4451 = vpop.f32.mrb[0].mxu0
        %4452 = vmatprep.mubr.bf16.mxu0 %v3383
        %4453 = vmatmul.mubr.bf16.gmra.mrb[0].mxu0 %v3382
        %v4454 = vpop.f32.mrb[0].mxu0
        %v4455 = vadd.f32 %v4294, %v4454
        %v4456 = vpop.f32.mrb[0].mxu0
        %v4457 = vpop.f32.mrb[0].mxu0
        %v4458 = vadd.f32 %v4297, %v4457
        %v4459 = vpop.f32.mrb[0].mxu0
        %4460 = vmatprep.mubr.bf16.mxu0 %v3392
        %4461 = vmatmul.mubr.bf16.gmra.mrb[0].mxu0 %v3391
        %v4462 = vpop.f32.mrb[0].mxu0
        %v4463 = vadd.f32 %v4302, %v4462
        %v4464 = vpop.f32.mrb[0].mxu0
        %v4465 = vpop.f32.mrb[0].mxu0
        %v4466 = vadd.f32 %v4305, %v4465
        %v4467 = vpop.f32.mrb[0].mxu0
        %4468 = vmatprep.mubr.bf16.mxu0 %v3401
        %4469 = vmatmul.mubr.bf16.gmra.mrb[0].mxu0 %v3400
        %v4470 = vpop.f32.mrb[0].mxu0
        %v4471 = vadd.f32 %v4310, %v4470
        %v4472 = vpop.f32.mrb[0].mxu0
        %v4473 = vpop.f32.mrb[0].mxu0
        %v4474 = vadd.f32 %v4313, %v4473
        %v4475 = vpop.f32.mrb[0].mxu0
        %4476 = vmatprep.mubr.bf16.mxu0 %v3410
        %4477 = vmatmul.mubr.bf16.gmra.mrb[0].mxu0 %v3409
        %v4478 = vpop.f32.mrb[0].mxu0
        %v4479 = vadd.f32 %v4318, %v4478
        %v4480 = vpop.f32.mrb[0].mxu0
        %v4481 = vpop.f32.mrb[0].mxu0
        %v4482 = vadd.f32 %v4321, %v4481
        %v4483 = vpop.f32.mrb[0].mxu0
        %4484 = vmatprep.mubr.bf16.mxu0 %v3419
        %4485 = vmatmul.mubr.bf16.gmra.mrb[0].mxu0 %v3418
        %v4486 = vpop.f32.mrb[0].mxu0
        %v4487 = vadd.f32 %v4326, %v4486
        %v4488 = vpop.f32.mrb[0].mxu0
        %v4489 = vpop.f32.mrb[0].mxu0
        %v4490 = vadd.f32 %v4329, %v4489
        %v4491 = vpop.f32.mrb[0].mxu0
        %4492 = vmatprep.mubr.bf16.mxu0 %v3428
        %4493 = vmatmul.mubr.bf16.gmra.mrb[0].mxu0 %v3427
        %v4494 = vpop.f32.mrb[0].mxu0
        %v4495 = vadd.f32 %v4334, %v4494
        %v4496 = vpop.f32.mrb[0].mxu0
        %v4497 = vpop.f32.mrb[0].mxu0
        %v4498 = vadd.f32 %v4337, %v4497
        %v4499 = vpop.f32.mrb[0].mxu0
        %4500 = vmatprep.mubr.bf16.mxu0 %v3437
        %4501 = vmatmul.mubr.bf16.gmra.mrb[0].mxu0 %v3436
        %v4502 = vpop.f32.mrb[0].mxu0
        %v4503 = vadd.f32 %v4342, %v4502
        %v4504 = vpop.f32.mrb[0].mxu0
        %v4505 = vpop.f32.mrb[0].mxu0
        %v4506 = vadd.f32 %v4345, %v4505
        %v4507 = vpop.f32.mrb[0].mxu0
        %4508 = vmatprep.mubr.bf16.mxu0 %v3446
        %4509 = vmatmul.mubr.bf16.gmra.mrb[0].mxu0 %v3445
        %v4510 = vpop.f32.mrb[0].mxu0
        %v4511 = vadd.f32 %v4350, %v4510
        %v4512 = vpop.f32.mrb[0].mxu0
        %v4513 = vpop.f32.mrb[0].mxu0
        %v4514 = vadd.f32 %v4353, %v4513
        %v4515 = vpop.f32.mrb[0].mxu0
        %4516 = vmatprep.mubr.bf16.mxu0 %v3455
        %4517 = vmatmul.mubr.bf16.gmra.mrb[0].mxu0 %v3454
        %v4518 = vpop.f32.mrb[0].mxu0
        %v4519 = vadd.f32 %v4358, %v4518
        %v4520 = vpop.f32.mrb[0].mxu0
        %v4521 = vpop.f32.mrb[0].mxu0
        %v4522 = vadd.f32 %v4361, %v4521
        %v4523 = vpop.f32.mrb[0].mxu0
        %4524 = vdwg.mxu0
        %4525 = vmatprep.subr.bf16.mxu0 0
        %4526 = vmatpush1.bf16.msra.mxu0 %v3946
        %4527 = vmatprep.subr.bf16.mxu0 0
        %4528 = vmatpush1.bf16.msra.mxu0 %v3947
        %4529 = vmatprep.subr.bf16.mxu0 0
        %4530 = vmatpush1.bf16.msra.mxu0 %v3948
        %4531 = vmatprep.subr.bf16.mxu0 0
        %4532 = vmatpush1.bf16.msra.mxu0 %v3949
        %4533 = vmatprep.subr.bf16.mxu0 0
        %4534 = vmatpush1.bf16.msra.mxu0 %v3950
        %4535 = vmatprep.subr.bf16.mxu0 0
        %4536 = vmatpush1.bf16.msra.mxu0 %v3951
        %4537 = vmatprep.subr.bf16.mxu0 0
        %4538 = vmatpush1.bf16.msra.mxu0 %v3952
        %4539 = vmatprep.subr.bf16.mxu0 0
        %4540 = vmatpush1.bf16.msra.mxu0 %v3953
        %4541 = vmatprep.subr.bf16.mxu0 0
        %4542 = vmatpush1.bf16.msra.mxu0 %v3954
        %4543 = vmatprep.subr.bf16.mxu0 0
        %4544 = vmatpush1.bf16.msra.mxu0 %v3955
        %4545 = vmatprep.subr.bf16.mxu0 0
        %4546 = vmatpush1.bf16.msra.mxu0 %v3956
        %4547 = vmatprep.subr.bf16.mxu0 0
        %4548 = vmatpush1.bf16.msra.mxu0 %v3957
        %4549 = vmatprep.subr.bf16.mxu0 0
        %4550 = vmatpush1.bf16.msra.mxu0 %v3958
        %4551 = vmatprep.subr.bf16.mxu0 0
        %4552 = vmatpush1.bf16.msra.mxu0 %v3959
        %4553 = vmatprep.subr.bf16.mxu0 0
        %4554 = vmatpush1.bf16.msra.mxu0 %v3960
        %4555 = vmatprep.subr.bf16.mxu0 0
        %4556 = vmatpush1.bf16.msra.mxu0 %v3961
        %4557 = vmatprep.mubr.bf16.mxu0 %v3322
        %4558 = vmatmul.mubr.bf16.gmra.mrb[0].mxu0 %v3321
        %v4559 = vpop.f32.mrb[0].mxu0
        %v4560 = vadd.f32 %v4399, %v4559
        %v4561 = vpop.f32.mrb[0].mxu0
        %v4562 = vpop.f32.mrb[0].mxu0
        %v4563 = vadd.f32 %v4402, %v4562
        %v4564 = vpop.f32.mrb[0].mxu0
        %4565 = vmatprep.mubr.bf16.mxu0 %v3331
        %4566 = vmatmul.mubr.bf16.gmra.mrb[0].mxu0 %v3330
        %v4567 = vpop.f32.mrb[0].mxu0
        %v4568 = vadd.f32 %v4407, %v4567
        %v4569 = vpop.f32.mrb[0].mxu0
        %v4570 = vpop.f32.mrb[0].mxu0
        %v4571 = vadd.f32 %v4410, %v4570
        %v4572 = vpop.f32.mrb[0].mxu0
        %4573 = vmatprep.mubr.bf16.mxu0 %v3340
        %4574 = vmatmul.mubr.bf16.gmra.mrb[0].mxu0 %v3339
        %v4575 = vpop.f32.mrb[0].mxu0
        %v4576 = vadd.f32 %v4415, %v4575
        %v4577 = vpop.f32.mrb[0].mxu0
        %v4578 = vpop.f32.mrb[0].mxu0
        %v4579 = vadd.f32 %v4418, %v4578
        %v4580 = vpop.f32.mrb[0].mxu0
        %4581 = vmatprep.mubr.bf16.mxu0 %v3349
        %4582 = vmatmul.mubr.bf16.gmra.mrb[0].mxu0 %v3348
        %v4583 = vpop.f32.mrb[0].mxu0
        %v4584 = vadd.f32 %v4423, %v4583
        %v4585 = vpop.f32.mrb[0].mxu0
        %v4586 = vpop.f32.mrb[0].mxu0
        %v4587 = vadd.f32 %v4426, %v4586
        %v4588 = vpop.f32.mrb[0].mxu0
        %4589 = vmatprep.mubr.bf16.mxu0 %v3358
        %4590 = vmatmul.mubr.bf16.gmra.mrb[0].mxu0 %v3357
        %v4591 = vpop.f32.mrb[0].mxu0
        %v4592 = vadd.f32 %v4431, %v4591
        %v4593 = vpop.f32.mrb[0].mxu0
        %v4594 = vpop.f32.mrb[0].mxu0
        %v4595 = vadd.f32 %v4434, %v4594
        %v4596 = vpop.f32.mrb[0].mxu0
        %4597 = vmatprep.mubr.bf16.mxu0 %v3367
        %4598 = vmatmul.mubr.bf16.gmra.mrb[0].mxu0 %v3366
        %v4599 = vpop.f32.mrb[0].mxu0
        %v4600 = vadd.f32 %v4439, %v4599
        %v4601 = vpop.f32.mrb[0].mxu0
        %v4602 = vpop.f32.mrb[0].mxu0
        %v4603 = vadd.f32 %v4442, %v4602
        %v4604 = vpop.f32.mrb[0].mxu0
        %4605 = vmatprep.mubr.bf16.mxu0 %v3376
        %4606 = vmatmul.mubr.bf16.gmra.mrb[0].mxu0 %v3375
        %v4607 = vpop.f32.mrb[0].mxu0
        %v4608 = vadd.f32 %v4447, %v4607
        %v4609 = vpop.f32.mrb[0].mxu0
        %v4610 = vpop.f32.mrb[0].mxu0
        %v4611 = vadd.f32 %v4450, %v4610
        %v4612 = vpop.f32.mrb[0].mxu0
        %4613 = vmatprep.mubr.bf16.mxu0 %v3385
        %4614 = vmatmul.mubr.bf16.gmra.mrb[0].mxu0 %v3384
        %v4615 = vpop.f32.mrb[0].mxu0
        %v4616 = vadd.f32 %v4455, %v4615
        %v4617 = vpop.f32.mrb[0].mxu0
        %v4618 = vpop.f32.mrb[0].mxu0
        %v4619 = vadd.f32 %v4458, %v4618
        %v4620 = vpop.f32.mrb[0].mxu0
        %4621 = vmatprep.mubr.bf16.mxu0 %v3394
        %4622 = vmatmul.mubr.bf16.gmra.mrb[0].mxu0 %v3393
        %v4623 = vpop.f32.mrb[0].mxu0
        %v4624 = vadd.f32 %v4463, %v4623
        %v4625 = vpop.f32.mrb[0].mxu0
        %v4626 = vpop.f32.mrb[0].mxu0
        %v4627 = vadd.f32 %v4466, %v4626
        %v4628 = vpop.f32.mrb[0].mxu0
        %4629 = vmatprep.mubr.bf16.mxu0 %v3403
        %4630 = vmatmul.mubr.bf16.gmra.mrb[0].mxu0 %v3402
        %v4631 = vpop.f32.mrb[0].mxu0
        %v4632 = vadd.f32 %v4471, %v4631
        %v4633 = vpop.f32.mrb[0].mxu0
        %v4634 = vpop.f32.mrb[0].mxu0
        %v4635 = vadd.f32 %v4474, %v4634
        %v4636 = vpop.f32.mrb[0].mxu0
        %4637 = vmatprep.mubr.bf16.mxu0 %v3412
        %4638 = vmatmul.mubr.bf16.gmra.mrb[0].mxu0 %v3411
        %v4639 = vpop.f32.mrb[0].mxu0
        %v4640 = vadd.f32 %v4479, %v4639
        %v4641 = vpop.f32.mrb[0].mxu0
        %v4642 = vpop.f32.mrb[0].mxu0
        %v4643 = vadd.f32 %v4482, %v4642
        %v4644 = vpop.f32.mrb[0].mxu0
        %4645 = vmatprep.mubr.bf16.mxu0 %v3421
        %4646 = vmatmul.mubr.bf16.gmra.mrb[0].mxu0 %v3420
        %v4647 = vpop.f32.mrb[0].mxu0
        %v4648 = vadd.f32 %v4487, %v4647
        %v4649 = vpop.f32.mrb[0].mxu0
        %v4650 = vpop.f32.mrb[0].mxu0
        %v4651 = vadd.f32 %v4490, %v4650
        %v4652 = vpop.f32.mrb[0].mxu0
        %4653 = vmatprep.mubr.bf16.mxu0 %v3430
        %4654 = vmatmul.mubr.bf16.gmra.mrb[0].mxu0 %v3429
        %v4655 = vpop.f32.mrb[0].mxu0
        %v4656 = vadd.f32 %v4495, %v4655
        %v4657 = vpop.f32.mrb[0].mxu0
        %v4658 = vpop.f32.mrb[0].mxu0
        %v4659 = vadd.f32 %v4498, %v4658
        %v4660 = vpop.f32.mrb[0].mxu0
        %4661 = vmatprep.mubr.bf16.mxu0 %v3439
        %4662 = vmatmul.mubr.bf16.gmra.mrb[0].mxu0 %v3438
        %v4663 = vpop.f32.mrb[0].mxu0
        %v4664 = vadd.f32 %v4503, %v4663
        %v4665 = vpop.f32.mrb[0].mxu0
        %v4666 = vpop.f32.mrb[0].mxu0
        %v4667 = vadd.f32 %v4506, %v4666
        %v4668 = vpop.f32.mrb[0].mxu0
        %4669 = vmatprep.mubr.bf16.mxu0 %v3448
        %4670 = vmatmul.mubr.bf16.gmra.mrb[0].mxu0 %v3447
        %v4671 = vpop.f32.mrb[0].mxu0
        %v4672 = vadd.f32 %v4511, %v4671
        %v4673 = vpop.f32.mrb[0].mxu0
        %v4674 = vpop.f32.mrb[0].mxu0
        %v4675 = vadd.f32 %v4514, %v4674
        %v4676 = vpop.f32.mrb[0].mxu0
        %4677 = vmatprep.mubr.bf16.mxu0 %v3457
        %4678 = vmatmul.mubr.bf16.gmra.mrb[0].mxu0 %v3456
        %v4679 = vpop.f32.mrb[0].mxu0
        %v4680 = vadd.f32 %v4519, %v4679
        %v4681 = vpop.f32.mrb[0].mxu0
        %v4682 = vpop.f32.mrb[0].mxu0
        %v4683 = vadd.f32 %v4522, %v4682
        %v4684 = vpop.f32.mrb[0].mxu0
        %4685 = vdwg.mxu0
        %4686 = vmatprep.subr.bf16.mxu0 0
        %4687 = vmatpush1.bf16.msra.mxu0 %v3962
        %4688 = vmatprep.subr.bf16.mxu0 0
        %4689 = vmatpush1.bf16.msra.mxu0 %v3963
        %4690 = vmatprep.subr.bf16.mxu0 0
        %4691 = vmatpush1.bf16.msra.mxu0 %v3964
        %4692 = vmatprep.subr.bf16.mxu0 0
        %4693 = vmatpush1.bf16.msra.mxu0 %v3965
        %4694 = vmatprep.subr.bf16.mxu0 0
        %4695 = vmatpush1.bf16.msra.mxu0 %v3966
        %4696 = vmatprep.subr.bf16.mxu0 0
        %4697 = vmatpush1.bf16.msra.mxu0 %v3967
        %4698 = vmatprep.subr.bf16.mxu0 0
        %4699 = vmatpush1.bf16.msra.mxu0 %v3968
        %4700 = vmatprep.subr.bf16.mxu0 0
        %4701 = vmatpush1.bf16.msra.mxu0 %v3969
        %4702 = vmatprep.subr.bf16.mxu0 0
        %4703 = vmatpush1.bf16.msra.mxu0 0
        %4704 = vmatprep.subr.bf16.mxu0 0
        %4705 = vmatpush1.bf16.msra.mxu0 0
        %4706 = vmatprep.subr.bf16.mxu0 0
        %4707 = vmatpush1.bf16.msra.mxu0 0
        %4708 = vmatprep.subr.bf16.mxu0 0
        %4709 = vmatpush1.bf16.msra.mxu0 0
        %4710 = vmatprep.subr.bf16.mxu0 0
        %4711 = vmatpush1.bf16.msra.mxu0 0
        %4712 = vmatprep.subr.bf16.mxu0 0
        %4713 = vmatpush1.bf16.msra.mxu0 0
        %4714 = vmatprep.subr.bf16.mxu0 0
        %4715 = vmatpush1.bf16.msra.mxu0 0
        %4716 = vmatprep.subr.bf16.mxu0 0
        %4717 = vmatpush1.bf16.msra.mxu0 0
        %4718 = vmatprep.mubr.bf16.mxu0 0
        %4719 = vmatmul.mubr.bf16.gmra.mrb[0].mxu0 %v3323
        %v4720 = vpop.f32.mrb[0].mxu0
        %v4721 = vadd.f32 %v4560, %v4720
        %v4722 = vpop.f32.mrb[0].mxu0
        %v4723 = vpop.f32.mrb[0].mxu0
        %v4724 = vadd.f32 %v4563, %v4723
        %v4725 = vpop.f32.mrb[0].mxu0
        %4726 = vmatprep.mubr.bf16.mxu0 0
        %4727 = vmatmul.mubr.bf16.gmra.mrb[0].mxu0 %v3332
        %v4728 = vpop.f32.mrb[0].mxu0
        %v4729 = vadd.f32 %v4568, %v4728
        %v4730 = vpop.f32.mrb[0].mxu0
        %v4731 = vpop.f32.mrb[0].mxu0
        %v4732 = vadd.f32 %v4571, %v4731
        %v4733 = vpop.f32.mrb[0].mxu0
        %4734 = vmatprep.mubr.bf16.mxu0 0
        %4735 = vmatmul.mubr.bf16.gmra.mrb[0].mxu0 %v3341
        %v4736 = vpop.f32.mrb[0].mxu0
        %v4737 = vadd.f32 %v4576, %v4736
        %v4738 = vpop.f32.mrb[0].mxu0
        %v4739 = vpop.f32.mrb[0].mxu0
        %v4740 = vadd.f32 %v4579, %v4739
        %v4741 = vpop.f32.mrb[0].mxu0
        %4742 = vmatprep.mubr.bf16.mxu0 0
        %4743 = vmatmul.mubr.bf16.gmra.mrb[0].mxu0 %v3350
        %v4744 = vpop.f32.mrb[0].mxu0
        %v4745 = vadd.f32 %v4584, %v4744
        %v4746 = vpop.f32.mrb[0].mxu0
        %v4747 = vpop.f32.mrb[0].mxu0
        %v4748 = vadd.f32 %v4587, %v4747
        %v4749 = vpop.f32.mrb[0].mxu0
        %4750 = vmatprep.mubr.bf16.mxu0 0
        %4751 = vmatmul.mubr.bf16.gmra.mrb[0].mxu0 %v3359
        %v4752 = vpop.f32.mrb[0].mxu0
        %v4753 = vadd.f32 %v4592, %v4752
        %v4754 = vpop.f32.mrb[0].mxu0
        %v4755 = vpop.f32.mrb[0].mxu0
        %v4756 = vadd.f32 %v4595, %v4755
        %v4757 = vpop.f32.mrb[0].mxu0
        %4758 = vmatprep.mubr.bf16.mxu0 0
        %4759 = vmatmul.mubr.bf16.gmra.mrb[0].mxu0 %v3368
        %v4760 = vpop.f32.mrb[0].mxu0
        %v4761 = vadd.f32 %v4600, %v4760
        %v4762 = vpop.f32.mrb[0].mxu0
        %v4763 = vpop.f32.mrb[0].mxu0
        %v4764 = vadd.f32 %v4603, %v4763
        %v4765 = vpop.f32.mrb[0].mxu0
        %4766 = vmatprep.mubr.bf16.mxu0 0
        %4767 = vmatmul.mubr.bf16.gmra.mrb[0].mxu0 %v3377
        %v4768 = vpop.f32.mrb[0].mxu0
        %v4769 = vadd.f32 %v4608, %v4768
        %v4770 = vpop.f32.mrb[0].mxu0
        %v4771 = vpop.f32.mrb[0].mxu0
        %v4772 = vadd.f32 %v4611, %v4771
        %v4773 = vpop.f32.mrb[0].mxu0
        %4774 = vmatprep.mubr.bf16.mxu0 0
        %4775 = vmatmul.mubr.bf16.gmra.mrb[0].mxu0 %v3386
        %v4776 = vpop.f32.mrb[0].mxu0
        %v4777 = vadd.f32 %v4616, %v4776
        %v4778 = vpop.f32.mrb[0].mxu0
        %v4779 = vpop.f32.mrb[0].mxu0
        %v4780 = vadd.f32 %v4619, %v4779
        %v4781 = vpop.f32.mrb[0].mxu0
        %4782 = vmatprep.mubr.bf16.mxu0 0
        %4783 = vmatmul.mubr.bf16.gmra.mrb[0].mxu0 %v3395
        %v4784 = vpop.f32.mrb[0].mxu0
        %v4785 = vadd.f32 %v4624, %v4784
        %v4786 = vpop.f32.mrb[0].mxu0
        %v4787 = vpop.f32.mrb[0].mxu0
        %v4788 = vadd.f32 %v4627, %v4787
        %v4789 = vpop.f32.mrb[0].mxu0
        %4790 = vmatprep.mubr.bf16.mxu0 0
        %4791 = vmatmul.mubr.bf16.gmra.mrb[0].mxu0 %v3404
        %v4792 = vpop.f32.mrb[0].mxu0
        %v4793 = vadd.f32 %v4632, %v4792
        %v4794 = vpop.f32.mrb[0].mxu0
        %v4795 = vpop.f32.mrb[0].mxu0
        %v4796 = vadd.f32 %v4635, %v4795
        %v4797 = vpop.f32.mrb[0].mxu0
        %4798 = vmatprep.mubr.bf16.mxu0 0
        %4799 = vmatmul.mubr.bf16.gmra.mrb[0].mxu0 %v3413
        %v4800 = vpop.f32.mrb[0].mxu0
        %v4801 = vadd.f32 %v4640, %v4800
        %v4802 = vpop.f32.mrb[0].mxu0
        %v4803 = vpop.f32.mrb[0].mxu0
        %v4804 = vadd.f32 %v4643, %v4803
        %v4805 = vpop.f32.mrb[0].mxu0
        %4806 = vmatprep.mubr.bf16.mxu0 0
        %4807 = vmatmul.mubr.bf16.gmra.mrb[0].mxu0 %v3422
        %v4808 = vpop.f32.mrb[0].mxu0
        %v4809 = vadd.f32 %v4648, %v4808
        %v4810 = vpop.f32.mrb[0].mxu0
        %v4811 = vpop.f32.mrb[0].mxu0
        %v4812 = vadd.f32 %v4651, %v4811
        %v4813 = vpop.f32.mrb[0].mxu0
        %4814 = vmatprep.mubr.bf16.mxu0 0
        %4815 = vmatmul.mubr.bf16.gmra.mrb[0].mxu0 %v3431
        %v4816 = vpop.f32.mrb[0].mxu0
        %v4817 = vadd.f32 %v4656, %v4816
        %v4818 = vpop.f32.mrb[0].mxu0
        %v4819 = vpop.f32.mrb[0].mxu0
        %v4820 = vadd.f32 %v4659, %v4819
        %v4821 = vpop.f32.mrb[0].mxu0
        %4822 = vmatprep.mubr.bf16.mxu0 0
        %4823 = vmatmul.mubr.bf16.gmra.mrb[0].mxu0 %v3440
        %v4824 = vpop.f32.mrb[0].mxu0
        %v4825 = vadd.f32 %v4664, %v4824
        %v4826 = vpop.f32.mrb[0].mxu0
        %v4827 = vpop.f32.mrb[0].mxu0
        %v4828 = vadd.f32 %v4667, %v4827
        %v4829 = vpop.f32.mrb[0].mxu0
        %4830 = vmatprep.mubr.bf16.mxu0 0
        %4831 = vmatmul.mubr.bf16.gmra.mrb[0].mxu0 %v3449
        %v4832 = vpop.f32.mrb[0].mxu0
        %v4833 = vadd.f32 %v4672, %v4832
        %v4834 = vpop.f32.mrb[0].mxu0
        %v4835 = vpop.f32.mrb[0].mxu0
        %v4836 = vadd.f32 %v4675, %v4835
        %v4837 = vpop.f32.mrb[0].mxu0
        %4838 = vmatprep.mubr.bf16.mxu0 0
        %4839 = vmatmul.mubr.bf16.gmra.mrb[0].mxu0 %v3458
        %v4840 = vpop.f32.mrb[0].mxu0
        %v4841 = vadd.f32 %v4680, %v4840
        %v4842 = vpop.f32.mrb[0].mxu0
        %v4843 = vpop.f32.mrb[0].mxu0
        %v4844 = vadd.f32 %v4683, %v4843
        %v4845 = vpop.f32.mrb[0].mxu0
        %4846 = vdwg.mxu0
        %v4847 = vadd.f32 %v4721, %v4724
        %v4848 = vadd.f32 %v4847, %v4729
        %v4849 = vadd.f32 %v4848, %v4732
        %v4850 = vadd.f32 %v4849, %v4737
        %v4851 = vadd.f32 %v4850, %v4740
        %v4852 = vadd.f32 %v4851, %v4745
        %v4853 = vadd.f32 %v4852, %v4748
        %v4854 = vadd.f32 %v4853, %v4753
        %v4855 = vadd.f32 %v4854, %v4756
        %v4856 = vadd.f32 %v4855, %v4761
        %v4857 = vadd.f32 %v4856, %v4764
        %v4858 = vadd.f32 %v4857, %v4769
        %v4859 = vadd.f32 %v4858, %v4772
        %v4860 = vadd.f32 %v4859, %v4777
        %v4861 = vadd.f32 %v4860, %v4780
        %v4862 = vadd.f32 %v4861, %v4785
        %v4863 = vadd.f32 %v4862, %v4788
        %v4864 = vadd.f32 %v4863, %v4793
        %v4865 = vadd.f32 %v4864, %v4796
        %v4866 = vadd.f32 %v4865, %v4801
        %v4867 = vadd.f32 %v4866, %v4804
        %v4868 = vadd.f32 %v4867, %v4809
        %v4869 = vadd.f32 %v4868, %v4812
        %v4870 = vadd.f32 %v4869, %v4817
        %v4871 = vadd.f32 %v4870, %v4820
        %v4872 = vadd.f32 %v4871, %v4825
        %v4873 = vadd.f32 %v4872, %v4828
        %v4874 = vadd.f32 %v4873, %v4833
        %v4875 = vadd.f32 %v4874, %v4836
        %v4876 = vadd.f32 %v4875, %v4841
        %v4877 = vadd.f32 %v4876, %v4844
        %v4878 = vrot.slane %v4877, 4
        %v4879 = vadd.f32 %v4877, %v4878
        %v4880 = vrot.slane %v4879, 2
        %v4881 = vadd.f32 %v4879, %v4880
        %v4882 = vrot.slane %v4881, 1
        %v4883 = vadd.f32 %v4881, %v4882
        %v4884 = vrcp.pop 256.0
        %v4885 = vmul.f32 %v4883, %v4884
        %v4886 = vld [vmem:[#allocation13] sm:$0xff]
        %v4887 = vld [vmem:[#allocation13 + $0x8] sm:$0xff]
        %v4888 = vld [vmem:[#allocation13 + $0x10] sm:$0xff]
        %v4889 = vld [vmem:[#allocation13 + $0x18] sm:$0xff]
        %v4890 = vld [vmem:[#allocation13 + $0x20] sm:$0xff]
        %v4891 = vld [vmem:[#allocation13 + $0x28] sm:$0xff]
        %v4892 = vld [vmem:[#allocation13 + $0x30] sm:$0xff]
        %v4893 = vld [vmem:[#allocation13 + $0x38] sm:$0xff]
        %v4894 = vld [vmem:[#allocation13 + $0x40] sm:$0xff]
        %v4895 = vld [vmem:[#allocation13 + $0x48] sm:$0xff]
        %v4896 = vld [vmem:[#allocation13 + $0x50] sm:$0xff]
        %v4897 = vld [vmem:[#allocation13 + $0x58] sm:$0xff]
        %v4898 = vld [vmem:[#allocation13 + $0x60] sm:$0xff]
        %v4899 = vld [vmem:[#allocation13 + $0x68] sm:$0xff]
        %v4900 = vld [vmem:[#allocation13 + $0x70] sm:$0xff]
        %v4901 = vld [vmem:[#allocation13 + $0x78] sm:$0xff]
        %v4902 = vld [vmem:[#allocation15] sm:$0x1]
        %4903 = vmatprep.subr.mxu0 0.0
        %4904 = vmatpush1.msra.mxu0 %v4886
        %4905 = vmatprep.subr.mxu0 0.0
        %4906 = vmatpush1.msra.mxu0 %v4887
        %4907 = vmatprep.subr.mxu0 0.0
        %4908 = vmatpush1.msra.mxu0 %v4888
        %4909 = vmatprep.subr.mxu0 0.0
        %4910 = vmatpush1.msra.mxu0 %v4889
        %4911 = vmatprep.subr.mxu0 0.0
        %4912 = vmatpush1.msra.mxu0 %v4890
        %4913 = vmatprep.subr.mxu0 0.0
        %4914 = vmatpush1.msra.mxu0 %v4891
        %4915 = vmatprep.subr.mxu0 0.0
        %4916 = vmatpush1.msra.mxu0 %v4892
        %4917 = vmatprep.subr.mxu0 0.0
        %4918 = vmatpush1.msra.mxu0 %v4893
        %4919 = vmatprep.subr.mxu0 0.0
        %4920 = vmatpush1.msra.mxu0 %v4894
        %4921 = vmatprep.subr.mxu0 0.0
        %4922 = vmatpush1.msra.mxu0 %v4895
        %4923 = vmatprep.subr.mxu0 0.0
        %4924 = vmatpush1.msra.mxu0 %v4896
        %4925 = vmatprep.subr.mxu0 0.0
        %4926 = vmatpush1.msra.mxu0 %v4897
        %4927 = vmatprep.subr.mxu0 0.0
        %4928 = vmatpush1.msra.mxu0 %v4898
        %4929 = vmatprep.subr.mxu0 0.0
        %4930 = vmatpush1.msra.mxu0 %v4899
        %4931 = vmatprep.subr.mxu0 0.0
        %4932 = vmatpush1.msra.mxu0 %v4900
        %4933 = vmatprep.subr.mxu0 0.0
        %4934 = vmatpush1.msra.mxu0 %v4901
        %4935 = vmatprep.subr.mxu0 0.0
        %4936 = vmatpush1.msra.mxu0 0.0
        %4937 = vmatprep.subr.mxu0 0.0
        %4938 = vmatpush1.msra.mxu0 0.0
        %4939 = vmatprep.subr.mxu0 0.0
        %4940 = vmatpush1.msra.mxu0 0.0
        %4941 = vmatprep.subr.mxu0 0.0
        %4942 = vmatpush1.msra.mxu0 0.0
        %4943 = vmatprep.subr.mxu0 0.0
        %4944 = vmatpush1.msra.mxu0 0.0
        %4945 = vmatprep.subr.mxu0 0.0
        %4946 = vmatpush1.msra.mxu0 0.0
        %4947 = vmatprep.subr.mxu0 0.0
        %4948 = vmatpush1.msra.mxu0 0.0
        %4949 = vmatprep.subr.mxu0 0.0
        %4950 = vmatpush1.msra.mxu0 0.0
        %4951 = vmatprep.subr.mxu0 0.0
        %4952 = vmatpush1.msra.mxu0 0.0
        %4953 = vmatprep.subr.mxu0 0.0
        %4954 = vmatpush1.msra.mxu0 0.0
        %4955 = vmatprep.subr.mxu0 0.0
        %4956 = vmatpush1.msra.mxu0 0.0
        %4957 = vmatprep.subr.mxu0 0.0
        %4958 = vmatpush1.msra.mxu0 0.0
        %4959 = vmatprep.subr.mxu0 0.0
        %4960 = vmatpush1.msra.mxu0 0.0
        %4961 = vmatprep.subr.mxu0 0.0
        %4962 = vmatpush1.msra.mxu0 0.0
        %4963 = vmatprep.subr.mxu0 0.0
        %4964 = vmatpush1.msra.mxu0 0.0
        %4965 = vmatprep.subr.mxu0 0.0
        %4966 = vmatpush1.msra.mxu0 0.0
        %4967 = vmatprep.mubr.f32.mxu0 0.0
        %4968 = vmatmul.mubr.f32.gmra.mrb[0].mxu0 %v4885
        %v4969 = vpop.f32.mrb[0].mxu0
        %v4970 = vadd.f32 %v4902, %v4969
        %v4971 = vpop.f32.mrb[0].mxu0
        %4972 = vdwg.mxu0
        %v4973 = vmax.f32 %v4970, 0.0
        %v4974 = vld [vmem:[#allocation16] sm:$0xff]
        %v4975 = vld [vmem:[#allocation16 + $0x8] sm:$0xff]
        %v4976 = vld [vmem:[#allocation16 + $0x10] sm:$0xff]
        %v4977 = vld [vmem:[#allocation16 + $0x18] sm:$0xff]
        %v4978 = vld [vmem:[#allocation16 + $0x20] sm:$0xff]
        %v4979 = vld [vmem:[#allocation16 + $0x28] sm:$0xff]
        %v4980 = vld [vmem:[#allocation16 + $0x30] sm:$0xff]
        %v4981 = vld [vmem:[#allocation16 + $0x38] sm:$0xff]
        %v4982 = vld [vmem:[#allocation16 + $0x40] sm:$0xff]
        %v4983 = vld [vmem:[#allocation16 + $0x48] sm:$0xff]
        %v4984 = vld [vmem:[#allocation16 + $0x50] sm:$0xff]
        %v4985 = vld [vmem:[#allocation16 + $0x58] sm:$0xff]
        %v4986 = vld [vmem:[#allocation16 + $0x60] sm:$0xff]
        %v4987 = vld [vmem:[#allocation16 + $0x68] sm:$0xff]
        %v4988 = vld [vmem:[#allocation16 + $0x70] sm:$0xff]
        %v4989 = vld [vmem:[#allocation16 + $0x78] sm:$0xff]
        %v4990 = vld [vmem:[#allocation18] sm:$0x1]
        %4991 = vmatprep.subr.mxu0 0.0
        %4992 = vmatpush1.msra.mxu0 %v4974
        %4993 = vmatprep.subr.mxu0 0.0
        %4994 = vmatpush1.msra.mxu0 %v4975
        %4995 = vmatprep.subr.mxu0 0.0
        %4996 = vmatpush1.msra.mxu0 %v4976
        %4997 = vmatprep.subr.mxu0 0.0
        %4998 = vmatpush1.msra.mxu0 %v4977
        %4999 = vmatprep.subr.mxu0 0.0
        %5000 = vmatpush1.msra.mxu0 %v4978
        %5001 = vmatprep.subr.mxu0 0.0
        %5002 = vmatpush1.msra.mxu0 %v4979
        %5003 = vmatprep.subr.mxu0 0.0
        %5004 = vmatpush1.msra.mxu0 %v4980
        %5005 = vmatprep.subr.mxu0 0.0
        %5006 = vmatpush1.msra.mxu0 %v4981
        %5007 = vmatprep.subr.mxu0 0.0
        %5008 = vmatpush1.msra.mxu0 %v4982
        %5009 = vmatprep.subr.mxu0 0.0
        %5010 = vmatpush1.msra.mxu0 %v4983
        %5011 = vmatprep.subr.mxu0 0.0
        %5012 = vmatpush1.msra.mxu0 %v4984
        %5013 = vmatprep.subr.mxu0 0.0
        %5014 = vmatpush1.msra.mxu0 %v4985
        %5015 = vmatprep.subr.mxu0 0.0
        %5016 = vmatpush1.msra.mxu0 %v4986
        %5017 = vmatprep.subr.mxu0 0.0
        %5018 = vmatpush1.msra.mxu0 %v4987
        %5019 = vmatprep.subr.mxu0 0.0
        %5020 = vmatpush1.msra.mxu0 %v4988
        %5021 = vmatprep.subr.mxu0 0.0
        %5022 = vmatpush1.msra.mxu0 %v4989
        %5023 = vmatprep.subr.mxu0 0.0
        %5024 = vmatpush1.msra.mxu0 0.0
        %5025 = vmatprep.subr.mxu0 0.0
        %5026 = vmatpush1.msra.mxu0 0.0
        %5027 = vmatprep.subr.mxu0 0.0
        %5028 = vmatpush1.msra.mxu0 0.0
        %5029 = vmatprep.subr.mxu0 0.0
        %5030 = vmatpush1.msra.mxu0 0.0
        %5031 = vmatprep.subr.mxu0 0.0
        %5032 = vmatpush1.msra.mxu0 0.0
        %5033 = vmatprep.subr.mxu0 0.0
        %5034 = vmatpush1.msra.mxu0 0.0
        %5035 = vmatprep.subr.mxu0 0.0
        %5036 = vmatpush1.msra.mxu0 0.0
        %5037 = vmatprep.subr.mxu0 0.0
        %5038 = vmatpush1.msra.mxu0 0.0
        %5039 = vmatprep.subr.mxu0 0.0
        %5040 = vmatpush1.msra.mxu0 0.0
        %5041 = vmatprep.subr.mxu0 0.0
        %5042 = vmatpush1.msra.mxu0 0.0
        %5043 = vmatprep.subr.mxu0 0.0
        %5044 = vmatpush1.msra.mxu0 0.0
        %5045 = vmatprep.subr.mxu0 0.0
        %5046 = vmatpush1.msra.mxu0 0.0
        %5047 = vmatprep.subr.mxu0 0.0
        %5048 = vmatpush1.msra.mxu0 0.0
        %5049 = vmatprep.subr.mxu0 0.0
        %5050 = vmatpush1.msra.mxu0 0.0
        %5051 = vmatprep.subr.mxu0 0.0
        %5052 = vmatpush1.msra.mxu0 0.0
        %5053 = vmatprep.subr.mxu0 0.0
        %5054 = vmatpush1.msra.mxu0 0.0
        %5055 = vmatprep.mubr.f32.mxu0 0.0
        %5056 = vmatmul.mubr.f32.gmra.mrb[0].mxu0 %v4973
        %v5057 = vpop.f32.mrb[0].mxu0
        %v5058 = vadd.f32 %v4990, %v5057
        %v5059 = vpop.f32.mrb[0].mxu0
        %5060 = vdwg.mxu0
        %v5061 = vxor.u32 %v5058, 2147483648
        %v5062 = vmul.f32 %v5061, 1.442695
        %v5063 = vpow.pop %v5062
        %v5064 = vadd.f32 %v5063, 1.0
        %v5065 = vrcp.pop %v5064
        %v5066 = vmul.f32 1.0, %v5065
        %v5067 = vlaneseq
        %v5068 = vshrl.u32 %v5067, 7
        %v5069 = vsub.s32 0, %v5068
        %v5070 = vrot.slane %v5066, %v5069
        %v5071 = vmul.f32 %v4721, %v5070
        %v5072 = vmul.f32 %v4724, %v5070
        %v5073 = vmul.f32 %v4729, %v5070
        %v5074 = vmul.f32 %v4732, %v5070
        %v5075 = vmul.f32 %v4737, %v5070
        %v5076 = vmul.f32 %v4740, %v5070
        %v5077 = vmul.f32 %v4745, %v5070
        %v5078 = vmul.f32 %v4748, %v5070
        %v5079 = vmul.f32 %v4753, %v5070
        %v5080 = vmul.f32 %v4756, %v5070
        %v5081 = vmul.f32 %v4761, %v5070
        %v5082 = vmul.f32 %v4764, %v5070
        %v5083 = vmul.f32 %v4769, %v5070
        %v5084 = vmul.f32 %v4772, %v5070
        %v5085 = vmul.f32 %v4777, %v5070
        %v5086 = vmul.f32 %v4780, %v5070
        %v5087 = vmul.f32 %v4785, %v5070
        %v5088 = vmul.f32 %v4788, %v5070
        %v5089 = vmul.f32 %v4793, %v5070
        %v5090 = vmul.f32 %v4796, %v5070
        %v5091 = vmul.f32 %v4801, %v5070
        %v5092 = vmul.f32 %v4804, %v5070
        %v5093 = vmul.f32 %v4809, %v5070
        %v5094 = vmul.f32 %v4812, %v5070
        %v5095 = vmul.f32 %v4817, %v5070
        %v5096 = vmul.f32 %v4820, %v5070
        %v5097 = vmul.f32 %v4825, %v5070
        %v5098 = vmul.f32 %v4828, %v5070
        %v5099 = vmul.f32 %v4833, %v5070
        %v5100 = vmul.f32 %v4836, %v5070
        %v5101 = vmul.f32 %v4841, %v5070
        %v5102 = vmul.f32 %v4844, %v5070
        %v5103 = vadd.f32 %v5071, %v502
        %v5104 = vadd.f32 %v5072, %v503
        %v5105 = vadd.f32 %v5073, %v504
        %v5106 = vadd.f32 %v5074, %v505
        %v5107 = vadd.f32 %v5075, %v506
        %v5108 = vadd.f32 %v5076, %v507
        %v5109 = vadd.f32 %v5077, %v508
        %v5110 = vadd.f32 %v5078, %v509
        %v5111 = vadd.f32 %v5079, %v510
        %v5112 = vadd.f32 %v5080, %v511
        %v5113 = vadd.f32 %v5081, %v512
        %v5114 = vadd.f32 %v5082, %v513
        %v5115 = vadd.f32 %v5083, %v514
        %v5116 = vadd.f32 %v5084, %v515
        %v5117 = vadd.f32 %v5085, %v516
        %v5118 = vadd.f32 %v5086, %v517
        %v5119 = vadd.f32 %v5087, %v518
        %v5120 = vadd.f32 %v5088, %v519
        %v5121 = vadd.f32 %v5089, %v520
        %v5122 = vadd.f32 %v5090, %v521
        %v5123 = vadd.f32 %v5091, %v522
        %v5124 = vadd.f32 %v5092, %v523
        %v5125 = vadd.f32 %v5093, %v524
        %v5126 = vadd.f32 %v5094, %v525
        %v5127 = vadd.f32 %v5095, %v526
        %v5128 = vadd.f32 %v5096, %v527
        %v5129 = vadd.f32 %v5097, %v528
        %v5130 = vadd.f32 %v5098, %v529
        %v5131 = vadd.f32 %v5099, %v530
        %v5132 = vadd.f32 %v5100, %v531
        %v5133 = vadd.f32 %v5101, %v532
        %v5134 = vadd.f32 %v5102, %v533
        %5135 = vst [vmem:[%s458] sm:$0xff] %v5103
        %5136 = vst [vmem:[%s458 + $0x8] sm:$0xff] %v5104
        %5137 = vst [vmem:[%s458 + $0x10] sm:$0xff] %v5105
        %5138 = vst [vmem:[%s458 + $0x18] sm:$0xff] %v5106
        %5139 = vst [vmem:[%s458 + $0x20] sm:$0xff] %v5107
        %5140 = vst [vmem:[%s458 + $0x28] sm:$0xff] %v5108
        %5141 = vst [vmem:[%s458 + $0x30] sm:$0xff] %v5109
        %5142 = vst [vmem:[%s458 + $0x38] sm:$0xff] %v5110
        %5143 = vst [vmem:[%s458 + $0x40] sm:$0xff] %v5111
        %5144 = vst [vmem:[%s458 + $0x48] sm:$0xff] %v5112
        %5145 = vst [vmem:[%s458 + $0x50] sm:$0xff] %v5113
        %5146 = vst [vmem:[%s458 + $0x58] sm:$0xff] %v5114
        %5147 = vst [vmem:[%s458 + $0x60] sm:$0xff] %v5115
        %5148 = vst [vmem:[%s458 + $0x68] sm:$0xff] %v5116
        %5149 = vst [vmem:[%s458 + $0x70] sm:$0xff] %v5117
        %5150 = vst [vmem:[%s458 + $0x78] sm:$0xff] %v5118
        %5151 = vst [vmem:[%s458 + $0x80] sm:$0xff] %v5119
        %5152 = vst [vmem:[%s458 + $0x88] sm:$0xff] %v5120
        %5153 = vst [vmem:[%s458 + $0x90] sm:$0xff] %v5121
        %5154 = vst [vmem:[%s458 + $0x98] sm:$0xff] %v5122
        %5155 = vst [vmem:[%s458 + $0xa0] sm:$0xff] %v5123
        %5156 = vst [vmem:[%s458 + $0xa8] sm:$0xff] %v5124
        %5157 = vst [vmem:[%s458 + $0xb0] sm:$0xff] %v5125
        %5158 = vst [vmem:[%s458 + $0xb8] sm:$0xff] %v5126
        %5159 = vst [vmem:[%s458 + $0xc0] sm:$0xff] %v5127
        %5160 = vst [vmem:[%s458 + $0xc8] sm:$0xff] %v5128
        %5161 = vst [vmem:[%s458 + $0xd0] sm:$0xff] %v5129
        %5162 = vst [vmem:[%s458 + $0xd8] sm:$0xff] %v5130
        %5163 = vst [vmem:[%s458 + $0xe0] sm:$0xff] %v5131
        %5164 = vst [vmem:[%s458 + $0xe8] sm:$0xff] %v5132
        %5165 = vst [vmem:[%s458 + $0xf0] sm:$0xff] %v5133
        %5166 = vst [vmem:[%s458 + $0xf8] sm:$0xff] %v5134
        %s5167 = sand.u32 %s232, 1
        %s5168 = scalar_lea.sflag [#allocation6], %s5167
        %s5169 = sand.u32 %s232, 1
        %s5170 = smul.addr %s5169, 256
        %s5171 = scalar_lea.vmem [#allocation19], %s5170
        // Predicated region
        $region93: #{tpu_custom_call.1} parent=55 // pred_check
          %p5172 = pneg %p242
        $region94: #{tpu_custom_call.1} parent=55 // pred_check_branch
          %5174 = sbr.rel (%p5172) target = $region96
        $region95: #{tpu_custom_call.1} parent=55 // pred_region
          %s5176 = ssub.s32 4096, 4096
          %5177 = vsyncadd %s5168, %s5176
          %s5178 = smul.addr %s30, 32
          %s5179 = smul.addr %s5178, 128
          %s5180 = scalar_lea.hbm %s9, %s5179
          %s5181 = sshll.u32 %s5171, 4
          %s5182 = int_to_ptr.vmem [resolvable:$true] %s5181
          %5187 = dma.vmem_to_hbm [thread:$0]  %s5182, 4096, %s5180, %s5168, 128, 128, 8
        $region96: #{tpu_custom_call.1} parent=55 // pred_fallthru
          _
      $region56: #{tpu_custom_call.1} parent=5 // pred_fallthru
        _
      %p5188 = scmp.le.s32.totalorder 2, %s25
      // Predicated region
      $region97: #{tpu_custom_call.1} parent=5 // pred_check
        %p5189 = pneg %p5188
      $region98: #{tpu_custom_call.1} parent=5 // pred_check_branch
        %5191 = sbr.rel (%p5189) target = $region100
      $region99: #{tpu_custom_call.1} parent=5 // pred_region
        %s5192 = ssub.s32 %s25, 2
        // Predicated region
        $region101: #{tpu_custom_call.1} parent=99 // pred_check
          %p5193 = pneg %p248
        $region102: #{tpu_custom_call.1} parent=99 // pred_check_branch
          %5195 = sbr.rel (%p5193) target = $region104
        $region103: #{tpu_custom_call.1} parent=99 // pred_region
          %s5196 = sand.u32 %s233, 1
          %s5197 = scalar_lea.sflag [#allocation6], %s5196
          %s5198 = sand.u32 %s233, 1
          %s5199 = smul.addr %s5198, 256
          %s5200 = scalar_lea.vmem [#allocation19], %s5199
          %5201 = dma.done %s5197, 4096
        $region104: #{tpu_custom_call.1} parent=99 // pred_fallthru
          _
      $region100: #{tpu_custom_call.1} parent=5 // pred_fallthru
        _
    $region6: #{tpu_custom_call.1} parent=1 // loop_footer
      %s29 = sadd.s32 1, %s25
    $region7: #{tpu_custom_call.1} parent=1 // loop_footer_branch
      %24 = sbr.rel target = $region3
    $region8: #{tpu_custom_call.1} parent=1 // loop_exit
      _
    %5202 = vsyncpa [#allocation5], 1
    %s5203 = scalar_lea.sflag [#allocation5], 1
    %5204 = vsyncpa %s5203, 1
    %5205 = vsyncpa [#allocation8], 1
    %5206 = vsyncpa [#allocation11], 1
    %5207 = vsyncpa [#allocation14], 1
    %5208 = vsyncpa [#allocation17], 1
    %5209 = vsyncpa [#allocation6], 1
    %s5210 = scalar_lea.sflag [#allocation6], 1
    %5211 = vsyncpa %s5210, 1

</llo_original>
